<compile_context>
chip_gen: v7x
topology: tpu7x:2x2x1
jax: 0.10.0
libtpu: 0.0.40
codegen_flags: <defaults>
</compile_context>

<pallas_src>
import functools

import jax
import jax.numpy as jnp
from jax import lax
from jax.experimental import pallas as pl
from jax.experimental.pallas import tpu as pltpu

EPS = 1e-5  # torch.nn.LayerNorm default


# ------------------------------ small utilities ------------------------------

def _round_up(x, m):
    return (x + m - 1) // m * m


@functools.lru_cache(maxsize=None)
def _vmem_limit_bytes():
    cap = 64 * 1024 * 1024
    try:
        cap = int(pltpu.get_tpu_info().vmem_capacity_bytes)
    except Exception:
        pass  # conservative fallback works on every generation
    return max(32 * 1024 * 1024, min(cap - 16 * 1024 * 1024, 112 * 1024 * 1024))


def _compiler_params(sem):
    return pltpu.CompilerParams(dimension_semantics=sem,
                                vmem_limit_bytes=_vmem_limit_bytes())


def _bf16(w):
    # Static dtype check: a no-op when params were pre-cast to bf16.
    return w if w.dtype == jnp.bfloat16 else w.astype(jnp.bfloat16)


def _row_tiling(rows, *, cap=512, align=8, extra_parallel=1):
    """Pick a row tile (multiple of `align`, <= cap) and the padded row count.

    Prefers a tile that divides the rows exactly (no padding) and halves the
    tile when the grid would otherwise have a single parallel step (so both
    v7x TensorCores get work)."""
    rows_a = _round_up(rows, align)
    tile = _round_up(min(cap, rows_a), align)
    for cand in range(tile, align - 1, -align):
        if rows_a % cand == 0:
            tile = cand
            break
    if rows_a > align and extra_parallel * pl.cdiv(rows_a, tile) < 2:
        tile = max(align, _round_up(tile // 2, align))
    padded = _round_up(rows, tile)
    return tile, padded


def _pad_rows(x2, padded):
    rows = x2.shape[0]
    if padded == rows:
        return x2
    return jnp.pad(x2, ((0, padded - rows), (0, 0)))


# ----------------------------- in-kernel helpers -----------------------------

def _ln_normalize(x):
    mu = jnp.mean(x, axis=-1, keepdims=True)
    xc = x - mu
    var = jnp.mean(xc * xc, axis=-1, keepdims=True)
    return xc * lax.rsqrt(var + EPS)


def _layernorm(x, gb):
    # x: (R, D) f32, gb: (2, D) f32 (packed gamma/beta)
    return _ln_normalize(x) * gb[0:1, :] + gb[1:2, :]


def _gelu_tanh(x):
    c = jnp.float32(0.7978845608028654)  # sqrt(2/pi)
    return 0.5 * x * (1.0 + jnp.tanh(c * (x + 0.044715 * x * x * x)))


def _mxu(a, b):
    # bf16 inputs, f32 accumulation on the MXU.
    return lax.dot_general(a.astype(jnp.bfloat16), b.astype(jnp.bfloat16),
                           (((1,), (0,)), ((), ())),
                           preferred_element_type=jnp.float32)


# --------------------------------- kernels -----------------------------------

def _kv_proj_kernel(x_ref, gbk_ref, gbv_ref, wk_ref, wv_ref, k_out_ref, v_out_ref):
    """Fused K & V projection: LN_k(x)@W_k and LN_v(x)@W_v (shared mean/var)."""
    x = x_ref[...].astype(jnp.float32)                    # (tm, D)
    xhat = _ln_normalize(x)
    gbk = gbk_ref[...].astype(jnp.float32)                # (2, D)
    gbv = gbv_ref[...].astype(jnp.float32)
    xk = xhat * gbk[0:1, :] + gbk[1:2, :]
    xv = xhat * gbv[0:1, :] + gbv[1:2, :]
    k_out_ref[...] = _mxu(xk, wk_ref[...]).astype(k_out_ref.dtype)
    v_out_ref[...] = _mxu(xv, wv_ref[...]).astype(v_out_ref.dtype)


def _attn_block_kernel(x_ref, gbq_ref, wq_ref, k_ref, v_ref, wo_ref, bo_ref,
                       o_ref, *, heads, dim_head, scale):
    """LN_q(x)@W_q -> multi-head softmax attention -> @W_o + b_o + residual."""
    x = x_ref[...].astype(jnp.float32)                    # (tq, D)
    gb = gbq_ref[...].astype(jnp.float32)                 # (2, D)
    xn = _layernorm(x, gb)
    q = _mxu(xn, wq_ref[...]) * jnp.float32(scale)        # (tq, inner) f32
    k = k_ref[...]                                        # (Nk, inner) bf16
    v = v_ref[...]                                        # (Nk, inner) bf16

    head_outs = []
    for h in range(heads):                                # unrolled at trace time
        sl = slice(h * dim_head, (h + 1) * dim_head)
        qh = q[:, sl].astype(jnp.bfloat16)                # (tq, dh)
        kh = k[:, sl]                                     # (Nk, dh)
        vh = v[:, sl]                                     # (Nk, dh)
        # Q @ K^T: contract the last dims (MXU-native, no transpose of K).
        s = lax.dot_general(qh, kh, (((1,), (1,)), ((), ())),
                            preferred_element_type=jnp.float32)   # (tq, Nk)
        s = s - jnp.max(s, axis=-1, keepdims=True)
        p = jnp.exp(s)
        p = p / jnp.sum(p, axis=-1, keepdims=True)
        head_outs.append(lax.dot_general(p.astype(jnp.bfloat16), vh,
                                         (((1,), (0,)), ((), ())),
                                         preferred_element_type=jnp.float32))
    o = head_outs[0] if heads == 1 else jnp.concatenate(head_outs, axis=-1)
    y = _mxu(o, wo_ref[...]) + bo_ref[...].astype(jnp.float32) + x
    o_ref[...] = y.astype(o_ref.dtype)


def _ff_block_kernel(x_ref, gb_ref, w1_ref, b1_ref, w2_ref, b2_ref, o_ref):
    """LN(x)@W1 + b1 -> GELU -> @W2 + b2 + x."""
    x = x_ref[...].astype(jnp.float32)
    gb = gb_ref[...].astype(jnp.float32)
    xn = _layernorm(x, gb)
    h = _mxu(xn, w1_ref[...]) + b1_ref[...].astype(jnp.float32)
    h = _gelu_tanh(h)
    y = _mxu(h, w2_ref[...]) + b2_ref[...].astype(jnp.float32)
    o_ref[...] = (y + x).astype(o_ref.dtype)


# --------------------------------- wrappers ----------------------------------

def kv_projection(src, gbk, gbv, wk, wv):
    """Fused K/V projection of the source. Returns (K, V) in bf16, (B, Ns, inner)."""
    B, Ns, D = src.shape
    inner = wk.shape[1]
    rows = B * Ns
    tm, rows_pad = _row_tiling(rows, align=16)            # bf16-friendly sublane tiling
    x2 = _pad_rows(src.reshape(rows, D), rows_pad)
    k2, v2 = pl.pallas_call(
        _kv_proj_kernel,
        out_shape=(jax.ShapeDtypeStruct((rows_pad, inner), jnp.bfloat16),
                   jax.ShapeDtypeStruct((rows_pad, inner), jnp.bfloat16)),
        grid_spec=pltpu.PrefetchScalarGridSpec(
            num_scalar_prefetch=0,
            grid=(rows_pad // tm,),
            in_specs=[pl.BlockSpec((tm, D), lambda i: (i, 0)),
                      pl.BlockSpec((2, D), lambda i: (0, 0)),
                      pl.BlockSpec((2, D), lambda i: (0, 0)),
                      pl.BlockSpec((D, inner), lambda i: (0, 0)),
                      pl.BlockSpec((D, inner), lambda i: (0, 0))],
            out_specs=[pl.BlockSpec((tm, inner), lambda i: (i, 0)),
                       pl.BlockSpec((tm, inner), lambda i: (i, 0))],
        ),
        compiler_params=_compiler_params(("parallel",)),
    )(x2, gbk, gbv, _bf16(wk), _bf16(wv))
    if rows_pad != rows:
        k2, v2 = k2[:rows], v2[:rows]                     # drop padded key rows
    return k2.reshape(B, Ns, inner), v2.reshape(B, Ns, inner)


def attention_block(x, gbq, wq, k, v, wo, bo, *, heads, dim_head):
    """Fused PreNorm_q + multi-head cross-attention + to_out + residual."""
    B, Nq, D = x.shape
    inner = wq.shape[1]
    Nk = k.shape[1]
    tq, nq_pad = _row_tiling(Nq, cap=256, extra_parallel=B)
    xp = x if nq_pad == Nq else jnp.pad(x, ((0, 0), (0, nq_pad - Nq), (0, 0)))
    kernel = functools.partial(_attn_block_kernel, heads=heads,
                               dim_head=dim_head, scale=float(dim_head) ** -0.5)
    out = pl.pallas_call(
        kernel,
        out_shape=jax.ShapeDtypeStruct((B, nq_pad, D), jnp.float32),
        grid_spec=pltpu.PrefetchScalarGridSpec(
            num_scalar_prefetch=0,
            grid=(B, nq_pad // tq),
            in_specs=[pl.BlockSpec((None, tq, D), lambda b, i: (b, i, 0)),
                      pl.BlockSpec((2, D), lambda b, i: (0, 0)),
                      pl.BlockSpec((D, inner), lambda b, i: (0, 0)),
                      pl.BlockSpec((None, Nk, inner), lambda b, i: (b, 0, 0)),
                      pl.BlockSpec((None, Nk, inner), lambda b, i: (b, 0, 0)),
                      pl.BlockSpec((inner, D), lambda b, i: (0, 0)),
                      pl.BlockSpec((1, D), lambda b, i: (0, 0))],
            out_specs=pl.BlockSpec((None, tq, D), lambda b, i: (b, i, 0)),
        ),
        compiler_params=_compiler_params(("parallel", "parallel")),
    )(xp, gbq, _bf16(wq), k, v, _bf16(wo), bo)
    return out[:, :Nq] if nq_pad != Nq else out


def ff_block(x, gb, w1, b1, w2, b2):
    """Fused PreNorm + FeedForward + residual."""
    B, N, D = x.shape
    M = w1.shape[1]
    rows = B * N
    tm, rows_pad = _row_tiling(rows)
    x2 = _pad_rows(x.reshape(rows, D), rows_pad)
    out = pl.pallas_call(
        _ff_block_kernel,
        out_shape=jax.ShapeDtypeStruct((rows_pad, D), jnp.float32),
        grid_spec=pltpu.PrefetchScalarGridSpec(
            num_scalar_prefetch=0,
            grid=(rows_pad // tm,),
            in_specs=[pl.BlockSpec((tm, D), lambda i: (i, 0)),
                      pl.BlockSpec((2, D), lambda i: (0, 0)),
                      pl.BlockSpec((D, M), lambda i: (0, 0)),
                      pl.BlockSpec((1, M), lambda i: (0, 0)),
                      pl.BlockSpec((M, D), lambda i: (0, 0)),
                      pl.BlockSpec((1, D), lambda i: (0, 0))],
            out_specs=pl.BlockSpec((tm, D), lambda i: (i, 0)),
        ),
        compiler_params=_compiler_params(("parallel",)),
    )(x2, gb, _bf16(w1), b1, _bf16(w2), b2)
    if rows_pad != rows:
        out = out[:rows]
    return out.reshape(B, N, D)


def cross_transformer_encoder(source_x, target_x, params, *, heads, dim_head):
    """Forward pass of CrossTransformerEncoder (dropout = 0)."""
    x = target_x.astype(jnp.float32)
    src = source_x.astype(jnp.float32)
    for layer in params["layers"]:
        # --- PreNorm_qkv(Attention) + residual (2 fused kernels) ---
        k, v = kv_projection(src, layer["ln_k"], layer["ln_v"],
                             layer["w_k"], layer["w_v"])
        x = attention_block(x, layer["ln_q"], layer["w_q"], k, v,
                            layer["w_o"], layer["b_o"],
                            heads=heads, dim_head=dim_head)
        # --- PreNorm(FeedForward) + residual (1 fused kernel) ---
        x = ff_block(x, layer["ln_ff"], layer["w1"], layer["b1"],
                     layer["w2"], layer["b2"])
    return x


# ---------------------------- pure-JAX reference -----------------------------

def cross_transformer_encoder_reference(source_x, target_x, params, *,
                                        heads, dim_head):
    def ln(t, gb):
        t = t.astype(jnp.float32)
        mu = t.mean(-1, keepdims=True)
        var = ((t - mu) ** 2).mean(-1, keepdims=True)
        return (t - mu) * lax.rsqrt(var + EPS) * gb[0] + gb[1]

    def f32(w):
        return w.astype(jnp.float32)

    scale = float(dim_head) ** -0.5
    x = target_x.astype(jnp.float32)
    src = source_x.astype(jnp.float32)
    B = x.shape[0]
    for layer in params["layers"]:
        q = ln(x, layer["ln_q"]) @ f32(layer["w_q"])
        k = ln(src, layer["ln_k"]) @ f32(layer["w_k"])
        v = ln(src, layer["ln_v"]) @ f32(layer["w_v"])
        Nt, Ns = q.shape[1], k.shape[1]

        def split(t, n):
            return t.reshape(B, n, heads, dim_head).transpose(0, 2, 1, 3)

        qh, kh, vh = split(q, Nt), split(k, Ns), split(v, Ns)
        dots = jnp.einsum('bhid,bhjd->bhij', qh, kh) * scale
        attn = jax.nn.softmax(dots, axis=-1)
        o = jnp.einsum('bhij,bhjd->bhid', attn, vh)
        o = o.transpose(0, 2, 1, 3).reshape(B, Nt, heads * dim_head)
        x = o @ f32(layer["w_o"]) + layer["b_o"] + x

        xn = ln(x, layer["ln_ff"])
        h = _gelu_tanh(xn @ f32(layer["w1"]) + layer["b1"])
        x = h @ f32(layer["w2"]) + layer["b2"] + x
    return x


# ------------------------------------ main ------------------------------------

if __name__ == "__main__":
    # Small but lane-dense shapes: dim = 128 (full 128-lane vreg / MXU width).
    B, Ns, Nt = 2, 16, 8
    dim, heads, dim_head, mlp_dim, depth = 128, 2, 64, 256, 2
    inner = heads * dim_head

    key = jax.random.PRNGKey(0)
    k_src, k_tgt, k_par = jax.random.split(key, 3)
    source_x = jax.random.normal(k_src, (B, Ns, dim), jnp.float32)
    target_x = jax.random.normal(k_tgt, (B, Nt, dim), jnp.float32)

    def ln_params(kk):
        k1, k2 = jax.random.split(kk)
        g = 1.0 + 0.1 * jax.random.normal(k1, (dim,), jnp.float32)
        b = 0.1 * jax.random.normal(k2, (dim,), jnp.float32)
        return jnp.stack([g, b])  # (2, dim) packed gamma/beta

    def bf16_w(kk, shape, fan_in):
        return (jax.random.normal(kk, shape, jnp.float32)
                * float(fan_in) ** -0.5).astype(jnp.bfloat16)   # pre-cast once

    layers = []
    for lk in jax.random.split(k_par, depth):
        ks = jax.random.split(lk, 14)
        layers.append({
            "ln_q": ln_params(ks[0]),
            "ln_k": ln_params(ks[1]),
            "ln_v": ln_params(ks[2]),
            "w_q": bf16_w(ks[3], (dim, inner), dim),
            "w_k": bf16_w(ks[4], (dim, inner), dim),
            "w_v": bf16_w(ks[5], (dim, inner), dim),
            "w_o": bf16_w(ks[6], (inner, dim), inner),
            "b_o": 0.02 * jax.random.normal(ks[7], (1, dim), jnp.float32),
            "ln_ff": ln_params(ks[8]),
            "w1": bf16_w(ks[9], (dim, mlp_dim), dim),
            "b1": 0.02 * jax.random.normal(ks[10], (1, mlp_dim), jnp.float32),
            "w2": bf16_w(ks[11], (mlp_dim, dim), mlp_dim),
            "b2": 0.02 * jax.random.normal(ks[12], (1, dim), jnp.float32),
        })
    params = {"layers": layers}

    fwd = jax.jit(functools.partial(cross_transformer_encoder,
                                    heads=heads, dim_head=dim_head))
    out = jax.block_until_ready(fwd(source_x, target_x, params))

    ref = cross_transformer_encoder_reference(source_x, target_x, params,
                                              heads=heads, dim_head=dim_head)
    assert out.shape == (B, Nt, dim)
    # bf16 MXU matmuls / bf16 K-V intermediates vs f32 reference -> loose tol.
    max_err = float(jnp.max(jnp.abs(out - ref)))
    assert jnp.allclose(out, ref, atol=7e-2, rtol=7e-2), \
        f"mismatch vs reference (max abs err {max_err})"

    print("KERNEL_OK")
</pallas_src>

<mosaic_0001>
module attributes {stable_mosaic.version = 11 : i64} {
  func.func @_kv_proj_kernel(%arg0: i32, %arg1: memref<16x128xf32, #tpu.memory_space<vmem>>, %arg2: memref<2x128xf32, #tpu.memory_space<vmem>>, %arg3: memref<2x128xf32, #tpu.memory_space<vmem>>, %arg4: memref<128x128xbf16, #tpu.memory_space<vmem>>, %arg5: memref<128x128xbf16, #tpu.memory_space<vmem>>, %arg6: memref<16x128xbf16, #tpu.memory_space<vmem>>, %arg7: memref<16x128xbf16, #tpu.memory_space<vmem>>) attributes {dimension_semantics = [#tpu.dimension_semantics<parallel>], iteration_bounds = array<i64: 2>, scalar_prefetch = 0 : i64, scratch_operands = 0 : i64, tpu.core_type = #tpu.core_type<tc>, window_params = [{transform_indices = @transform_0, window_bounds = array<i64: 16, 128>}, {pipeline_mode = #tpu.pipeline_mode<synchronous>, transform_indices = @transform_1, window_bounds = array<i64: 2, 128>}, {pipeline_mode = #tpu.pipeline_mode<synchronous>, transform_indices = @transform_2, window_bounds = array<i64: 2, 128>}, {pipeline_mode = #tpu.pipeline_mode<synchronous>, transform_indices = @transform_3, window_bounds = array<i64: 128, 128>}, {pipeline_mode = #tpu.pipeline_mode<synchronous>, transform_indices = @transform_4, window_bounds = array<i64: 128, 128>}, {transform_indices = @transform_5, window_bounds = array<i64: 16, 128>}, {transform_indices = @transform_6, window_bounds = array<i64: 16, 128>}]} {
    %c0 = arith.constant 0 : index
    %c0_0 = arith.constant 0 : index
    %0 = vector.load %arg1[%c0, %c0_0] : memref<16x128xf32, #tpu.memory_space<vmem>>, vector<16x128xf32>
    %cst = arith.constant dense<0.000000e+00> : vector<16xf32>
    %1 = vector.multi_reduction <add>, %0, %cst [1] : vector<16x128xf32> to vector<16xf32>
    %2 = vector.shape_cast %1 : vector<16xf32> to vector<16x1xf32>
    %cst_1 = arith.constant 1.280000e+02 : f32
    %3 = vector.broadcast %cst_1 : f32 to vector<16x1xf32>
    %4 = arith.divf %2, %3 : vector<16x1xf32>
    %5 = vector.broadcast %4 : vector<16x1xf32> to vector<16x128xf32>
    %6 = arith.subf %0, %5 : vector<16x128xf32>
    %7 = arith.mulf %6, %6 : vector<16x128xf32>
    %cst_2 = arith.constant dense<0.000000e+00> : vector<16xf32>
    %8 = vector.multi_reduction <add>, %7, %cst_2 [1] : vector<16x128xf32> to vector<16xf32>
    %9 = vector.shape_cast %8 : vector<16xf32> to vector<16x1xf32>
    %cst_3 = arith.constant 1.280000e+02 : f32
    %10 = vector.broadcast %cst_3 : f32 to vector<16x1xf32>
    %11 = arith.divf %9, %10 : vector<16x1xf32>
    %cst_4 = arith.constant 9.99999974E-6 : f32
    %12 = vector.broadcast %cst_4 : f32 to vector<16x1xf32>
    %13 = arith.addf %11, %12 : vector<16x1xf32>
    %14 = math.rsqrt %13 : vector<16x1xf32>
    %15 = vector.broadcast %14 : vector<16x1xf32> to vector<16x128xf32>
    %16 = arith.mulf %6, %15 : vector<16x128xf32>
    %c0_5 = arith.constant 0 : index
    %c0_6 = arith.constant 0 : index
    %17 = vector.load %arg2[%c0_5, %c0_6] : memref<2x128xf32, #tpu.memory_space<vmem>>, vector<2x128xf32>
    %c0_7 = arith.constant 0 : index
    %c0_8 = arith.constant 0 : index
    %18 = vector.load %arg3[%c0_7, %c0_8] : memref<2x128xf32, #tpu.memory_space<vmem>>, vector<2x128xf32>
    %19 = vector.extract_strided_slice %17 {offsets = [0, 0], sizes = [1, 128], strides = [1, 1]} : vector<2x128xf32> to vector<1x128xf32>
    %20 = vector.broadcast %19 : vector<1x128xf32> to vector<16x128xf32>
    %21 = arith.mulf %16, %20 : vector<16x128xf32>
    %22 = vector.extract_strided_slice %17 {offsets = [1, 0], sizes = [1, 128], strides = [1, 1]} : vector<2x128xf32> to vector<1x128xf32>
    %23 = vector.broadcast %22 : vector<1x128xf32> to vector<16x128xf32>
    %24 = arith.addf %21, %23 : vector<16x128xf32>
    %25 = vector.extract_strided_slice %18 {offsets = [0, 0], sizes = [1, 128], strides = [1, 1]} : vector<2x128xf32> to vector<1x128xf32>
    %26 = vector.broadcast %25 : vector<1x128xf32> to vector<16x128xf32>
    %27 = arith.mulf %16, %26 : vector<16x128xf32>
    %28 = vector.extract_strided_slice %18 {offsets = [1, 0], sizes = [1, 128], strides = [1, 1]} : vector<2x128xf32> to vector<1x128xf32>
    %29 = vector.broadcast %28 : vector<1x128xf32> to vector<16x128xf32>
    %30 = arith.addf %27, %29 : vector<16x128xf32>
    %c0_9 = arith.constant 0 : index
    %c0_10 = arith.constant 0 : index
    %31 = vector.load %arg4[%c0_9, %c0_10] : memref<128x128xbf16, #tpu.memory_space<vmem>>, vector<128x128xbf16>
    %32 = arith.truncf %24 : vector<16x128xf32> to vector<16x128xbf16>
    %cst_11 = arith.constant dense<0.000000e+00> : vector<16x128xf32>
    %33 = tpu.matmul %32, %31, %cst_11 {dimension_numbers = #tpu.dot_dimension_numbers<[1], [0], [0], [1], [0, 0, 1, 1], [], []>} : vector<16x128xbf16>, vector<128x128xbf16>, vector<16x128xf32> -> vector<16x128xf32>
    %34 = arith.truncf %33 : vector<16x128xf32> to vector<16x128xbf16>
    %c0_12 = arith.constant 0 : index
    %c0_13 = arith.constant 0 : index
    %35 = vector.load %arg6[%c0_12, %c0_13] : memref<16x128xbf16, #tpu.memory_space<vmem>>, vector<16x128xbf16>
    tpu.vector_store %arg6[%c0_12, %c0_13], %34 {strides = array<i32>} : memref<16x128xbf16, #tpu.memory_space<vmem>>, vector<16x128xbf16>,
    %c0_14 = arith.constant 0 : index
    %c0_15 = arith.constant 0 : index
    %36 = vector.load %arg5[%c0_14, %c0_15] : memref<128x128xbf16, #tpu.memory_space<vmem>>, vector<128x128xbf16>
    %37 = arith.truncf %30 : vector<16x128xf32> to vector<16x128xbf16>
    %cst_16 = arith.constant dense<0.000000e+00> : vector<16x128xf32>
    %38 = tpu.matmul %37, %36, %cst_16 {dimension_numbers = #tpu.dot_dimension_numbers<[1], [0], [0], [1], [0, 0, 1, 1], [], []>} : vector<16x128xbf16>, vector<128x128xbf16>, vector<16x128xf32> -> vector<16x128xf32>
    %39 = arith.truncf %38 : vector<16x128xf32> to vector<16x128xbf16>
    %c0_17 = arith.constant 0 : index
    %c0_18 = arith.constant 0 : index
    %40 = vector.load %arg7[%c0_17, %c0_18] : memref<16x128xbf16, #tpu.memory_space<vmem>>, vector<16x128xbf16>
    tpu.vector_store %arg7[%c0_17, %c0_18], %39 {strides = array<i32>} : memref<16x128xbf16, #tpu.memory_space<vmem>>, vector<16x128xbf16>,
    return
  }
  func.func @transform_0(%arg0: i32) -> (i32, i32) {
    %c0_i32 = arith.constant 0 : i32
    %c0_i32_0 = arith.constant 0 : i32
    return %arg0, %c0_i32 : i32, i32
  }
  func.func @transform_1(%arg0: i32) -> (i32, i32) {
    %c0_i32 = arith.constant 0 : i32
    %c0_i32_0 = arith.constant 0 : i32
    %c0_i32_1 = arith.constant 0 : i32
    return %c0_i32, %c0_i32_0 : i32, i32
  }
  func.func @transform_2(%arg0: i32) -> (i32, i32) {
    %c0_i32 = arith.constant 0 : i32
    %c0_i32_0 = arith.constant 0 : i32
    %c0_i32_1 = arith.constant 0 : i32
    return %c0_i32, %c0_i32_0 : i32, i32
  }
  func.func @transform_3(%arg0: i32) -> (i32, i32) {
    %c0_i32 = arith.constant 0 : i32
    %c0_i32_0 = arith.constant 0 : i32
    %c0_i32_1 = arith.constant 0 : i32
    return %c0_i32, %c0_i32_0 : i32, i32
  }
  func.func @transform_4(%arg0: i32) -> (i32, i32) {
    %c0_i32 = arith.constant 0 : i32
    %c0_i32_0 = arith.constant 0 : i32
    %c0_i32_1 = arith.constant 0 : i32
    return %c0_i32, %c0_i32_0 : i32, i32
  }
  func.func @transform_5(%arg0: i32) -> (i32, i32) {
    %c0_i32 = arith.constant 0 : i32
    %c0_i32_0 = arith.constant 0 : i32
    return %arg0, %c0_i32 : i32, i32
  }
  func.func @transform_6(%arg0: i32) -> (i32, i32) {
    %c0_i32 = arith.constant 0 : i32
    %c0_i32_0 = arith.constant 0 : i32
    return %arg0, %c0_i32 : i32, i32
  }
}

module attributes {stable_mosaic.version = 11 : i64} {
  func.func @_attn_block_kernel(%arg0: i32, %arg1: i32, %arg2: memref<1x8x128xf32, #tpu.memory_space<vmem>>, %arg3: memref<2x128xf32, #tpu.memory_space<vmem>>, %arg4: memref<128x128xbf16, #tpu.memory_space<vmem>>, %arg5: memref<1x16x128xbf16, #tpu.memory_space<vmem>>, %arg6: memref<1x16x128xbf16, #tpu.memory_space<vmem>>, %arg7: memref<128x128xbf16, #tpu.memory_space<vmem>>, %arg8: memref<1x128xf32, #tpu.memory_space<vmem>>, %arg9: memref<1x8x128xf32, #tpu.memory_space<vmem>>) attributes {dimension_semantics = [#tpu.dimension_semantics<parallel>, #tpu.dimension_semantics<parallel>], iteration_bounds = array<i64: 2, 1>, scalar_prefetch = 0 : i64, scratch_operands = 0 : i64, tpu.core_type = #tpu.core_type<tc>, window_params = [{transform_indices = @transform_0, window_bounds = array<i64: 1, 8, 128>}, {pipeline_mode = #tpu.pipeline_mode<synchronous>, transform_indices = @transform_1, window_bounds = array<i64: 2, 128>}, {pipeline_mode = #tpu.pipeline_mode<synchronous>, transform_indices = @transform_2, window_bounds = array<i64: 128, 128>}, {transform_indices = @transform_3, window_bounds = array<i64: 1, 16, 128>}, {transform_indices = @transform_4, window_bounds = array<i64: 1, 16, 128>}, {pipeline_mode = #tpu.pipeline_mode<synchronous>, transform_indices = @transform_5, window_bounds = array<i64: 128, 128>}, {pipeline_mode = #tpu.pipeline_mode<synchronous>, transform_indices = @transform_6, window_bounds = array<i64: 1, 128>}, {transform_indices = @transform_7, window_bounds = array<i64: 1, 8, 128>}]} {
    %c0 = arith.constant 0 : index
    %c0_0 = arith.constant 0 : index
    %c0_1 = arith.constant 0 : index
    %0 = vector.load %arg2[%c0, %c0_0, %c0_1] : memref<1x8x128xf32, #tpu.memory_space<vmem>>, vector<1x8x128xf32>
    %1 = vector.shape_cast %0 : vector<1x8x128xf32> to vector<8x128xf32>
    %c0_2 = arith.constant 0 : index
    %c0_3 = arith.constant 0 : index
    %2 = vector.load %arg3[%c0_2, %c0_3] : memref<2x128xf32, #tpu.memory_space<vmem>>, vector<2x128xf32>
    %cst = arith.constant dense<0.000000e+00> : vector<8xf32>
    %3 = vector.multi_reduction <add>, %1, %cst [1] : vector<8x128xf32> to vector<8xf32>
    %4 = vector.shape_cast %3 : vector<8xf32> to vector<8x1xf32>
    %cst_4 = arith.constant 1.280000e+02 : f32
    %5 = vector.broadcast %cst_4 : f32 to vector<8x1xf32>
    %6 = arith.divf %4, %5 : vector<8x1xf32>
    %7 = vector.broadcast %6 : vector<8x1xf32> to vector<8x128xf32>
    %8 = arith.subf %1, %7 : vector<8x128xf32>
    %9 = arith.mulf %8, %8 : vector<8x128xf32>
    %cst_5 = arith.constant dense<0.000000e+00> : vector<8xf32>
    %10 = vector.multi_reduction <add>, %9, %cst_5 [1] : vector<8x128xf32> to vector<8xf32>
    %11 = vector.shape_cast %10 : vector<8xf32> to vector<8x1xf32>
    %cst_6 = arith.constant 1.280000e+02 : f32
    %12 = vector.broadcast %cst_6 : f32 to vector<8x1xf32>
    %13 = arith.divf %11, %12 : vector<8x1xf32>
    %cst_7 = arith.constant 9.99999974E-6 : f32
    %14 = vector.broadcast %cst_7 : f32 to vector<8x1xf32>
    %15 = arith.addf %13, %14 : vector<8x1xf32>
    %16 = math.rsqrt %15 : vector<8x1xf32>
    %17 = vector.broadcast %16 : vector<8x1xf32> to vector<8x128xf32>
    %18 = arith.mulf %8, %17 : vector<8x128xf32>
    %19 = vector.extract_strided_slice %2 {offsets = [0, 0], sizes = [1, 128], strides = [1, 1]} : vector<2x128xf32> to vector<1x128xf32>
    %20 = vector.broadcast %19 : vector<1x128xf32> to vector<8x128xf32>
    %21 = arith.mulf %18, %20 : vector<8x128xf32>
    %22 = vector.extract_strided_slice %2 {offsets = [1, 0], sizes = [1, 128], strides = [1, 1]} : vector<2x128xf32> to vector<1x128xf32>
    %23 = vector.broadcast %22 : vector<1x128xf32> to vector<8x128xf32>
    %24 = arith.addf %21, %23 : vector<8x128xf32>
    %c0_8 = arith.constant 0 : index
    %c0_9 = arith.constant 0 : index
    %25 = vector.load %arg4[%c0_8, %c0_9] : memref<128x128xbf16, #tpu.memory_space<vmem>>, vector<128x128xbf16>
    %26 = arith.truncf %24 : vector<8x128xf32> to vector<8x128xbf16>
    %cst_10 = arith.constant dense<0.000000e+00> : vector<8x128xf32>
    %27 = tpu.matmul %26, %25, %cst_10 {dimension_numbers = #tpu.dot_dimension_numbers<[1], [0], [0], [1], [0, 0, 1, 1], [], []>} : vector<8x128xbf16>, vector<128x128xbf16>, vector<8x128xf32> -> vector<8x128xf32>
    %cst_11 = arith.constant 1.250000e-01 : f32
    %28 = vector.broadcast %cst_11 : f32 to vector<8x128xf32>
    %29 = arith.mulf %27, %28 : vector<8x128xf32>
    %c0_12 = arith.constant 0 : index
    %c0_13 = arith.constant 0 : index
    %c0_14 = arith.constant 0 : index
    %30 = vector.load %arg5[%c0_12, %c0_13, %c0_14] : memref<1x16x128xbf16, #tpu.memory_space<vmem>>, vector<1x16x128xbf16>
    %31 = vector.shape_cast %30 : vector<1x16x128xbf16> to vector<16x128xbf16>
    %c0_15 = arith.constant 0 : index
    %c0_16 = arith.constant 0 : index
    %c0_17 = arith.constant 0 : index
    %32 = vector.load %arg6[%c0_15, %c0_16, %c0_17] : memref<1x16x128xbf16, #tpu.memory_space<vmem>>, vector<1x16x128xbf16>
    %33 = vector.shape_cast %32 : vector<1x16x128xbf16> to vector<16x128xbf16>
    %34 = vector.extract_strided_slice %29 {offsets = [0, 0], sizes = [8, 64], strides = [1, 1]} : vector<8x128xf32> to vector<8x64xf32>
    %35 = arith.truncf %34 : vector<8x64xf32> to vector<8x64xbf16>
    %36 = vector.extract_strided_slice %31 {offsets = [0, 0], sizes = [16, 64], strides = [1, 1]} : vector<16x128xbf16> to vector<16x64xbf16>
    %37 = vector.extract_strided_slice %33 {offsets = [0, 0], sizes = [16, 64], strides = [1, 1]} : vector<16x128xbf16> to vector<16x64xbf16>
    %cst_18 = arith.constant dense<0.000000e+00> : vector<8x16xf32>
    %38 = tpu.matmul %35, %36, %cst_18 {dimension_numbers = #tpu.dot_dimension_numbers<[1], [1], [0], [0], [0, 0, 1, 0], [], []>} : vector<8x64xbf16>, vector<16x64xbf16>, vector<8x16xf32> -> vector<8x16xf32>
    %cst_19 = arith.constant dense<0xFF800000> : vector<8xf32>
    %39 = vector.multi_reduction <maximumf>, %38, %cst_19 [1] : vector<8x16xf32> to vector<8xf32>
    %40 = vector.shape_cast %39 : vector<8xf32> to vector<8x1xf32>
    %41 = vector.broadcast %40 : vector<8x1xf32> to vector<8x16xf32>
    %42 = arith.subf %38, %41 : vector<8x16xf32>
    %43 = math.exp %42 : vector<8x16xf32>
    %cst_20 = arith.constant dense<0.000000e+00> : vector<8xf32>
    %44 = vector.multi_reduction <add>, %43, %cst_20 [1] : vector<8x16xf32> to vector<8xf32>
    %45 = vector.shape_cast %44 : vector<8xf32> to vector<8x1xf32>
    %46 = vector.broadcast %45 : vector<8x1xf32> to vector<8x16xf32>
    %47 = arith.divf %43, %46 : vector<8x16xf32>
    %48 = arith.truncf %47 : vector<8x16xf32> to vector<8x16xbf16>
    %cst_21 = arith.constant dense<0.000000e+00> : vector<8x64xf32>
    %49 = tpu.matmul %48, %37, %cst_21 {dimension_numbers = #tpu.dot_dimension_numbers<[1], [0], [0], [1], [0, 0, 1, 1], [], []>} : vector<8x16xbf16>, vector<16x64xbf16>, vector<8x64xf32> -> vector<8x64xf32>
    %50 = vector.extract_strided_slice %29 {offsets = [0, 64], sizes = [8, 64], strides = [1, 1]} : vector<8x128xf32> to vector<8x64xf32>
    %51 = arith.truncf %50 : vector<8x64xf32> to vector<8x64xbf16>
    %52 = vector.extract_strided_slice %31 {offsets = [0, 64], sizes = [16, 64], strides = [1, 1]} : vector<16x128xbf16> to vector<16x64xbf16>
    %53 = vector.extract_strided_slice %33 {offsets = [0, 64], sizes = [16, 64], strides = [1, 1]} : vector<16x128xbf16> to vector<16x64xbf16>
    %cst_22 = arith.constant dense<0.000000e+00> : vector<8x16xf32>
    %54 = tpu.matmul %51, %52, %cst_22 {dimension_numbers = #tpu.dot_dimension_numbers<[1], [1], [0], [0], [0, 0, 1, 0], [], []>} : vector<8x64xbf16>, vector<16x64xbf16>, vector<8x16xf32> -> vector<8x16xf32>
    %cst_23 = arith.constant dense<0xFF800000> : vector<8xf32>
    %55 = vector.multi_reduction <maximumf>, %54, %cst_23 [1] : vector<8x16xf32> to vector<8xf32>
    %56 = vector.shape_cast %55 : vector<8xf32> to vector<8x1xf32>
    %57 = vector.broadcast %56 : vector<8x1xf32> to vector<8x16xf32>
    %58 = arith.subf %54, %57 : vector<8x16xf32>
    %59 = math.exp %58 : vector<8x16xf32>
    %cst_24 = arith.constant dense<0.000000e+00> : vector<8xf32>
    %60 = vector.multi_reduction <add>, %59, %cst_24 [1] : vector<8x16xf32> to vector<8xf32>
    %61 = vector.shape_cast %60 : vector<8xf32> to vector<8x1xf32>
    %62 = vector.broadcast %61 : vector<8x1xf32> to vector<8x16xf32>
    %63 = arith.divf %59, %62 : vector<8x16xf32>
    %64 = arith.truncf %63 : vector<8x16xf32> to vector<8x16xbf16>
    %cst_25 = arith.constant dense<0.000000e+00> : vector<8x64xf32>
    %65 = tpu.matmul %64, %53, %cst_25 {dimension_numbers = #tpu.dot_dimension_numbers<[1], [0], [0], [1], [0, 0, 1, 1], [], []>} : vector<8x16xbf16>, vector<16x64xbf16>, vector<8x64xf32> -> vector<8x64xf32>
    %66 = tpu.concatenate %49, %65 in 1 : vector<8x64xf32>, vector<8x64xf32> -> vector<8x128xf32>
    %c0_26 = arith.constant 0 : index
    %c0_27 = arith.constant 0 : index
    %67 = vector.load %arg7[%c0_26, %c0_27] : memref<128x128xbf16, #tpu.memory_space<vmem>>, vector<128x128xbf16>
    %68 = arith.truncf %66 : vector<8x128xf32> to vector<8x128xbf16>
    %cst_28 = arith.constant dense<0.000000e+00> : vector<8x128xf32>
    %69 = tpu.matmul %68, %67, %cst_28 {dimension_numbers = #tpu.dot_dimension_numbers<[1], [0], [0], [1], [0, 0, 1, 1], [], []>} : vector<8x128xbf16>, vector<128x128xbf16>, vector<8x128xf32> -> vector<8x128xf32>
    %c0_29 = arith.constant 0 : index
    %c0_30 = arith.constant 0 : index
    %70 = vector.load %arg8[%c0_29, %c0_30] : memref<1x128xf32, #tpu.memory_space<vmem>>, vector<1x128xf32>
    %71 = vector.broadcast %70 : vector<1x128xf32> to vector<8x128xf32>
    %72 = arith.addf %69, %71 : vector<8x128xf32>
    %73 = arith.addf %72, %1 : vector<8x128xf32>
    %c0_31 = arith.constant 0 : index
    %c0_32 = arith.constant 0 : index
    %c0_33 = arith.constant 0 : index
    %74 = vector.load %arg9[%c0_31, %c0_32, %c0_33] : memref<1x8x128xf32, #tpu.memory_space<vmem>>, vector<1x8x128xf32>
    %75 = vector.shape_cast %74 : vector<1x8x128xf32> to vector<8x128xf32>
    %76 = vector.shape_cast %73 : vector<8x128xf32> to vector<1x8x128xf32>
    tpu.vector_store %arg9[%c0_31, %c0_32, %c0_33], %76 {strides = array<i32>} : memref<1x8x128xf32, #tpu.memory_space<vmem>>, vector<1x8x128xf32>,
    return
  }
  func.func @transform_0(%arg0: i32, %arg1: i32) -> (i32, i32, i32) {
    %c0_i32 = arith.constant 0 : i32
    %c0_i32_0 = arith.constant 0 : i32
    return %arg0, %arg1, %c0_i32 : i32, i32, i32
  }
  func.func @transform_1(%arg0: i32, %arg1: i32) -> (i32, i32) {
    %c0_i32 = arith.constant 0 : i32
    %c0_i32_0 = arith.constant 0 : i32
    %c0_i32_1 = arith.constant 0 : i32
    return %c0_i32, %c0_i32_0 : i32, i32
  }
  func.func @transform_2(%arg0: i32, %arg1: i32) -> (i32, i32) {
    %c0_i32 = arith.constant 0 : i32
    %c0_i32_0 = arith.constant 0 : i32
    %c0_i32_1 = arith.constant 0 : i32
    return %c0_i32, %c0_i32_0 : i32, i32
  }
  func.func @transform_3(%arg0: i32, %arg1: i32) -> (i32, i32, i32) {
    %c0_i32 = arith.constant 0 : i32
    %c0_i32_0 = arith.constant 0 : i32
    %c0_i32_1 = arith.constant 0 : i32
    return %arg0, %c0_i32, %c0_i32_0 : i32, i32, i32
  }
  func.func @transform_4(%arg0: i32, %arg1: i32) -> (i32, i32, i32) {
    %c0_i32 = arith.constant 0 : i32
    %c0_i32_0 = arith.constant 0 : i32
    %c0_i32_1 = arith.constant 0 : i32
    return %arg0, %c0_i32, %c0_i32_0 : i32, i32, i32
  }
  func.func @transform_5(%arg0: i32, %arg1: i32) -> (i32, i32) {
    %c0_i32 = arith.constant 0 : i32
    %c0_i32_0 = arith.constant 0 : i32
    %c0_i32_1 = arith.constant 0 : i32
    return %c0_i32, %c0_i32_0 : i32, i32
  }
  func.func @transform_6(%arg0: i32, %arg1: i32) -> (i32, i32) {
    %c0_i32 = arith.constant 0 : i32
    %c0_i32_0 = arith.constant 0 : i32
    %c0_i32_1 = arith.constant 0 : i32
    return %c0_i32, %c0_i32_0 : i32, i32
  }
  func.func @transform_7(%arg0: i32, %arg1: i32) -> (i32, i32, i32) {
    %c0_i32 = arith.constant 0 : i32
    %c0_i32_0 = arith.constant 0 : i32
    return %arg0, %arg1, %c0_i32 : i32, i32, i32
  }
}

module attributes {stable_mosaic.version = 11 : i64} {
  func.func @_ff_block_kernel(%arg0: i32, %arg1: memref<8x128xf32, #tpu.memory_space<vmem>>, %arg2: memref<2x128xf32, #tpu.memory_space<vmem>>, %arg3: memref<128x256xbf16, #tpu.memory_space<vmem>>, %arg4: memref<1x256xf32, #tpu.memory_space<vmem>>, %arg5: memref<256x128xbf16, #tpu.memory_space<vmem>>, %arg6: memref<1x128xf32, #tpu.memory_space<vmem>>, %arg7: memref<8x128xf32, #tpu.memory_space<vmem>>) attributes {dimension_semantics = [#tpu.dimension_semantics<parallel>], iteration_bounds = array<i64: 2>, scalar_prefetch = 0 : i64, scratch_operands = 0 : i64, tpu.core_type = #tpu.core_type<tc>, window_params = [{transform_indices = @transform_0, window_bounds = array<i64: 8, 128>}, {pipeline_mode = #tpu.pipeline_mode<synchronous>, transform_indices = @transform_1, window_bounds = array<i64: 2, 128>}, {pipeline_mode = #tpu.pipeline_mode<synchronous>, transform_indices = @transform_2, window_bounds = array<i64: 128, 256>}, {pipeline_mode = #tpu.pipeline_mode<synchronous>, transform_indices = @transform_3, window_bounds = array<i64: 1, 256>}, {pipeline_mode = #tpu.pipeline_mode<synchronous>, transform_indices = @transform_4, window_bounds = array<i64: 256, 128>}, {pipeline_mode = #tpu.pipeline_mode<synchronous>, transform_indices = @transform_5, window_bounds = array<i64: 1, 128>}, {transform_indices = @transform_6, window_bounds = array<i64: 8, 128>}]} {
    %c0 = arith.constant 0 : index
    %c0_0 = arith.constant 0 : index
    %0 = vector.load %arg1[%c0, %c0_0] : memref<8x128xf32, #tpu.memory_space<vmem>>, vector<8x128xf32>
    %c0_1 = arith.constant 0 : index
    %c0_2 = arith.constant 0 : index
    %1 = vector.load %arg2[%c0_1, %c0_2] : memref<2x128xf32, #tpu.memory_space<vmem>>, vector<2x128xf32>
    %cst = arith.constant dense<0.000000e+00> : vector<8xf32>
    %2 = vector.multi_reduction <add>, %0, %cst [1] : vector<8x128xf32> to vector<8xf32>
    %3 = vector.shape_cast %2 : vector<8xf32> to vector<8x1xf32>
    %cst_3 = arith.constant 1.280000e+02 : f32
    %4 = vector.broadcast %cst_3 : f32 to vector<8x1xf32>
    %5 = arith.divf %3, %4 : vector<8x1xf32>
    %6 = vector.broadcast %5 : vector<8x1xf32> to vector<8x128xf32>
    %7 = arith.subf %0, %6 : vector<8x128xf32>
    %8 = arith.mulf %7, %7 : vector<8x128xf32>
    %cst_4 = arith.constant dense<0.000000e+00> : vector<8xf32>
    %9 = vector.multi_reduction <add>, %8, %cst_4 [1] : vector<8x128xf32> to vector<8xf32>
    %10 = vector.shape_cast %9 : vector<8xf32> to vector<8x1xf32>
    %cst_5 = arith.constant 1.280000e+02 : f32
    %11 = vector.broadcast %cst_5 : f32 to vector<8x1xf32>
    %12 = arith.divf %10, %11 : vector<8x1xf32>
    %cst_6 = arith.constant 9.99999974E-6 : f32
    %13 = vector.broadcast %cst_6 : f32 to vector<8x1xf32>
    %14 = arith.addf %12, %13 : vector<8x1xf32>
    %15 = math.rsqrt %14 : vector<8x1xf32>
    %16 = vector.broadcast %15 : vector<8x1xf32> to vector<8x128xf32>
    %17 = arith.mulf %7, %16 : vector<8x128xf32>
    %18 = vector.extract_strided_slice %1 {offsets = [0, 0], sizes = [1, 128], strides = [1, 1]} : vector<2x128xf32> to vector<1x128xf32>
    %19 = vector.broadcast %18 : vector<1x128xf32> to vector<8x128xf32>
    %20 = arith.mulf %17, %19 : vector<8x128xf32>
    %21 = vector.extract_strided_slice %1 {offsets = [1, 0], sizes = [1, 128], strides = [1, 1]} : vector<2x128xf32> to vector<1x128xf32>
    %22 = vector.broadcast %21 : vector<1x128xf32> to vector<8x128xf32>
    %23 = arith.addf %20, %22 : vector<8x128xf32>
    %c0_7 = arith.constant 0 : index
    %c0_8 = arith.constant 0 : index
    %24 = vector.load %arg3[%c0_7, %c0_8] : memref<128x256xbf16, #tpu.memory_space<vmem>>, vector<128x256xbf16>
    %25 = arith.truncf %23 : vector<8x128xf32> to vector<8x128xbf16>
    %cst_9 = arith.constant dense<0.000000e+00> : vector<8x256xf32>
    %26 = tpu.matmul %25, %24, %cst_9 {dimension_numbers = #tpu.dot_dimension_numbers<[1], [0], [0], [1], [0, 0, 1, 1], [], []>} : vector<8x128xbf16>, vector<128x256xbf16>, vector<8x256xf32> -> vector<8x256xf32>
    %c0_10 = arith.constant 0 : index
    %c0_11 = arith.constant 0 : index
    %27 = vector.load %arg4[%c0_10, %c0_11] : memref<1x256xf32, #tpu.memory_space<vmem>>, vector<1x256xf32>
    %28 = vector.broadcast %27 : vector<1x256xf32> to vector<8x256xf32>
    %29 = arith.addf %26, %28 : vector<8x256xf32>
    %cst_12 = arith.constant 5.000000e-01 : f32
    %30 = vector.broadcast %cst_12 : f32 to vector<8x256xf32>
    %31 = arith.mulf %30, %29 : vector<8x256xf32>
    %cst_13 = arith.constant 4.471500e-02 : f32
    %32 = vector.broadcast %cst_13 : f32 to vector<8x256xf32>
    %33 = arith.mulf %32, %29 : vector<8x256xf32>
    %34 = arith.mulf %33, %29 : vector<8x256xf32>
    %35 = arith.mulf %34, %29 : vector<8x256xf32>
    %36 = arith.addf %29, %35 : vector<8x256xf32>
    %cst_14 = arith.constant 0.797884583 : f32
    %37 = vector.broadcast %cst_14 : f32 to vector<8x256xf32>
    %38 = arith.mulf %37, %36 : vector<8x256xf32>
    %39 = math.tanh %38 : vector<8x256xf32>
    %cst_15 = arith.constant 1.000000e+00 : f32
    %40 = vector.broadcast %cst_15 : f32 to vector<8x256xf32>
    %41 = arith.addf %40, %39 : vector<8x256xf32>
    %42 = arith.mulf %31, %41 : vector<8x256xf32>
    %c0_16 = arith.constant 0 : index
    %c0_17 = arith.constant 0 : index
    %43 = vector.load %arg5[%c0_16, %c0_17] : memref<256x128xbf16, #tpu.memory_space<vmem>>, vector<256x128xbf16>
    %44 = arith.truncf %42 : vector<8x256xf32> to vector<8x256xbf16>
    %cst_18 = arith.constant dense<0.000000e+00> : vector<8x128xf32>
    %45 = tpu.matmul %44, %43, %cst_18 {dimension_numbers = #tpu.dot_dimension_numbers<[1], [0], [0], [1], [0, 0, 1, 1], [], []>} : vector<8x256xbf16>, vector<256x128xbf16>, vector<8x128xf32> -> vector<8x128xf32>
    %c0_19 = arith.constant 0 : index
    %c0_20 = arith.constant 0 : index
    %46 = vector.load %arg6[%c0_19, %c0_20] : memref<1x128xf32, #tpu.memory_space<vmem>>, vector<1x128xf32>
    %47 = vector.broadcast %46 : vector<1x128xf32> to vector<8x128xf32>
    %48 = arith.addf %45, %47 : vector<8x128xf32>
    %49 = arith.addf %48, %0 : vector<8x128xf32>
    %c0_21 = arith.constant 0 : index
    %c0_22 = arith.constant 0 : index
    %50 = vector.load %arg7[%c0_21, %c0_22] : memref<8x128xf32, #tpu.memory_space<vmem>>, vector<8x128xf32>
    tpu.vector_store %arg7[%c0_21, %c0_22], %49 {strides = array<i32>} : memref<8x128xf32, #tpu.memory_space<vmem>>, vector<8x128xf32>,
    return
  }
  func.func @transform_0(%arg0: i32) -> (i32, i32) {
    %c0_i32 = arith.constant 0 : i32
    %c0_i32_0 = arith.constant 0 : i32
    return %arg0, %c0_i32 : i32, i32
  }
  func.func @transform_1(%arg0: i32) -> (i32, i32) {
    %c0_i32 = arith.constant 0 : i32
    %c0_i32_0 = arith.constant 0 : i32
    %c0_i32_1 = arith.constant 0 : i32
    return %c0_i32, %c0_i32_0 : i32, i32
  }
  func.func @transform_2(%arg0: i32) -> (i32, i32) {
    %c0_i32 = arith.constant 0 : i32
    %c0_i32_0 = arith.constant 0 : i32
    %c0_i32_1 = arith.constant 0 : i32
    return %c0_i32, %c0_i32_0 : i32, i32
  }
  func.func @transform_3(%arg0: i32) -> (i32, i32) {
    %c0_i32 = arith.constant 0 : i32
    %c0_i32_0 = arith.constant 0 : i32
    %c0_i32_1 = arith.constant 0 : i32
    return %c0_i32, %c0_i32_0 : i32, i32
  }
  func.func @transform_4(%arg0: i32) -> (i32, i32) {
    %c0_i32 = arith.constant 0 : i32
    %c0_i32_0 = arith.constant 0 : i32
    %c0_i32_1 = arith.constant 0 : i32
    return %c0_i32, %c0_i32_0 : i32, i32
  }
  func.func @transform_5(%arg0: i32) -> (i32, i32) {
    %c0_i32 = arith.constant 0 : i32
    %c0_i32_0 = arith.constant 0 : i32
    %c0_i32_1 = arith.constant 0 : i32
    return %c0_i32, %c0_i32_0 : i32, i32
  }
  func.func @transform_6(%arg0: i32) -> (i32, i32) {
    %c0_i32 = arith.constant 0 : i32
    %c0_i32_0 = arith.constant 0 : i32
    return %arg0, %c0_i32 : i32, i32
  }
}

module attributes {stable_mosaic.version = 11 : i64} {
  func.func @_kv_proj_kernel(%arg0: i32, %arg1: memref<16x128xf32, #tpu.memory_space<vmem>>, %arg2: memref<2x128xf32, #tpu.memory_space<vmem>>, %arg3: memref<2x128xf32, #tpu.memory_space<vmem>>, %arg4: memref<128x128xbf16, #tpu.memory_space<vmem>>, %arg5: memref<128x128xbf16, #tpu.memory_space<vmem>>, %arg6: memref<16x128xbf16, #tpu.memory_space<vmem>>, %arg7: memref<16x128xbf16, #tpu.memory_space<vmem>>) attributes {dimension_semantics = [#tpu.dimension_semantics<parallel>], iteration_bounds = array<i64: 2>, scalar_prefetch = 0 : i64, scratch_operands = 0 : i64, tpu.core_type = #tpu.core_type<tc>, window_params = [{transform_indices = @transform_0, window_bounds = array<i64: 16, 128>}, {pipeline_mode = #tpu.pipeline_mode<synchronous>, transform_indices = @transform_1, window_bounds = array<i64: 2, 128>}, {pipeline_mode = #tpu.pipeline_mode<synchronous>, transform_indices = @transform_2, window_bounds = array<i64: 2, 128>}, {pipeline_mode = #tpu.pipeline_mode<synchronous>, transform_indices = @transform_3, window_bounds = array<i64: 128, 128>}, {pipeline_mode = #tpu.pipeline_mode<synchronous>, transform_indices = @transform_4, window_bounds = array<i64: 128, 128>}, {transform_indices = @transform_5, window_bounds = array<i64: 16, 128>}, {transform_indices = @transform_6, window_bounds = array<i64: 16, 128>}]} {
    %c0 = arith.constant 0 : index
    %c0_0 = arith.constant 0 : index
    %0 = vector.load %arg1[%c0, %c0_0] : memref<16x128xf32, #tpu.memory_space<vmem>>, vector<16x128xf32>
    %cst = arith.constant dense<0.000000e+00> : vector<16xf32>
    %1 = vector.multi_reduction <add>, %0, %cst [1] : vector<16x128xf32> to vector<16xf32>
    %2 = vector.shape_cast %1 : vector<16xf32> to vector<16x1xf32>
    %cst_1 = arith.constant 1.280000e+02 : f32
    %3 = vector.broadcast %cst_1 : f32 to vector<16x1xf32>
    %4 = arith.divf %2, %3 : vector<16x1xf32>
    %5 = vector.broadcast %4 : vector<16x1xf32> to vector<16x128xf32>
    %6 = arith.subf %0, %5 : vector<16x128xf32>
    %7 = arith.mulf %6, %6 : vector<16x128xf32>
    %cst_2 = arith.constant dense<0.000000e+00> : vector<16xf32>
    %8 = vector.multi_reduction <add>, %7, %cst_2 [1] : vector<16x128xf32> to vector<16xf32>
    %9 = vector.shape_cast %8 : vector<16xf32> to vector<16x1xf32>
    %cst_3 = arith.constant 1.280000e+02 : f32
    %10 = vector.broadcast %cst_3 : f32 to vector<16x1xf32>
    %11 = arith.divf %9, %10 : vector<16x1xf32>
    %cst_4 = arith.constant 9.99999974E-6 : f32
    %12 = vector.broadcast %cst_4 : f32 to vector<16x1xf32>
    %13 = arith.addf %11, %12 : vector<16x1xf32>
    %14 = math.rsqrt %13 : vector<16x1xf32>
    %15 = vector.broadcast %14 : vector<16x1xf32> to vector<16x128xf32>
    %16 = arith.mulf %6, %15 : vector<16x128xf32>
    %c0_5 = arith.constant 0 : index
    %c0_6 = arith.constant 0 : index
    %17 = vector.load %arg2[%c0_5, %c0_6] : memref<2x128xf32, #tpu.memory_space<vmem>>, vector<2x128xf32>
    %c0_7 = arith.constant 0 : index
    %c0_8 = arith.constant 0 : index
    %18 = vector.load %arg3[%c0_7, %c0_8] : memref<2x128xf32, #tpu.memory_space<vmem>>, vector<2x128xf32>
    %19 = vector.extract_strided_slice %17 {offsets = [0, 0], sizes = [1, 128], strides = [1, 1]} : vector<2x128xf32> to vector<1x128xf32>
    %20 = vector.broadcast %19 : vector<1x128xf32> to vector<16x128xf32>
    %21 = arith.mulf %16, %20 : vector<16x128xf32>
    %22 = vector.extract_strided_slice %17 {offsets = [1, 0], sizes = [1, 128], strides = [1, 1]} : vector<2x128xf32> to vector<1x128xf32>
    %23 = vector.broadcast %22 : vector<1x128xf32> to vector<16x128xf32>
    %24 = arith.addf %21, %23 : vector<16x128xf32>
    %25 = vector.extract_strided_slice %18 {offsets = [0, 0], sizes = [1, 128], strides = [1, 1]} : vector<2x128xf32> to vector<1x128xf32>
    %26 = vector.broadcast %25 : vector<1x128xf32> to vector<16x128xf32>
    %27 = arith.mulf %16, %26 : vector<16x128xf32>
    %28 = vector.extract_strided_slice %18 {offsets = [1, 0], sizes = [1, 128], strides = [1, 1]} : vector<2x128xf32> to vector<1x128xf32>
    %29 = vector.broadcast %28 : vector<1x128xf32> to vector<16x128xf32>
    %30 = arith.addf %27, %29 : vector<16x128xf32>
    %c0_9 = arith.constant 0 : index
    %c0_10 = arith.constant 0 : index
    %31 = vector.load %arg4[%c0_9, %c0_10] : memref<128x128xbf16, #tpu.memory_space<vmem>>, vector<128x128xbf16>
    %32 = arith.truncf %24 : vector<16x128xf32> to vector<16x128xbf16>
    %cst_11 = arith.constant dense<0.000000e+00> : vector<16x128xf32>
    %33 = tpu.matmul %32, %31, %cst_11 {dimension_numbers = #tpu.dot_dimension_numbers<[1], [0], [0], [1], [0, 0, 1, 1], [], []>} : vector<16x128xbf16>, vector<128x128xbf16>, vector<16x128xf32> -> vector<16x128xf32>
    %34 = arith.truncf %33 : vector<16x128xf32> to vector<16x128xbf16>
    %c0_12 = arith.constant 0 : index
    %c0_13 = arith.constant 0 : index
    %35 = vector.load %arg6[%c0_12, %c0_13] : memref<16x128xbf16, #tpu.memory_space<vmem>>, vector<16x128xbf16>
    tpu.vector_store %arg6[%c0_12, %c0_13], %34 {strides = array<i32>} : memref<16x128xbf16, #tpu.memory_space<vmem>>, vector<16x128xbf16>,
    %c0_14 = arith.constant 0 : index
    %c0_15 = arith.constant 0 : index
    %36 = vector.load %arg5[%c0_14, %c0_15] : memref<128x128xbf16, #tpu.memory_space<vmem>>, vector<128x128xbf16>
    %37 = arith.truncf %30 : vector<16x128xf32> to vector<16x128xbf16>
    %cst_16 = arith.constant dense<0.000000e+00> : vector<16x128xf32>
    %38 = tpu.matmul %37, %36, %cst_16 {dimension_numbers = #tpu.dot_dimension_numbers<[1], [0], [0], [1], [0, 0, 1, 1], [], []>} : vector<16x128xbf16>, vector<128x128xbf16>, vector<16x128xf32> -> vector<16x128xf32>
    %39 = arith.truncf %38 : vector<16x128xf32> to vector<16x128xbf16>
    %c0_17 = arith.constant 0 : index
    %c0_18 = arith.constant 0 : index
    %40 = vector.load %arg7[%c0_17, %c0_18] : memref<16x128xbf16, #tpu.memory_space<vmem>>, vector<16x128xbf16>
    tpu.vector_store %arg7[%c0_17, %c0_18], %39 {strides = array<i32>} : memref<16x128xbf16, #tpu.memory_space<vmem>>, vector<16x128xbf16>,
    return
  }
  func.func @transform_0(%arg0: i32) -> (i32, i32) {
    %c0_i32 = arith.constant 0 : i32
    %c0_i32_0 = arith.constant 0 : i32
    return %arg0, %c0_i32 : i32, i32
  }
  func.func @transform_1(%arg0: i32) -> (i32, i32) {
    %c0_i32 = arith.constant 0 : i32
    %c0_i32_0 = arith.constant 0 : i32
    %c0_i32_1 = arith.constant 0 : i32
    return %c0_i32, %c0_i32_0 : i32, i32
  }
  func.func @transform_2(%arg0: i32) -> (i32, i32) {
    %c0_i32 = arith.constant 0 : i32
    %c0_i32_0 = arith.constant 0 : i32
    %c0_i32_1 = arith.constant 0 : i32
    return %c0_i32, %c0_i32_0 : i32, i32
  }
  func.func @transform_3(%arg0: i32) -> (i32, i32) {
    %c0_i32 = arith.constant 0 : i32
    %c0_i32_0 = arith.constant 0 : i32
    %c0_i32_1 = arith.constant 0 : i32
    return %c0_i32, %c0_i32_0 : i32, i32
  }
  func.func @transform_4(%arg0: i32) -> (i32, i32) {
    %c0_i32 = arith.constant 0 : i32
    %c0_i32_0 = arith.constant 0 : i32
    %c0_i32_1 = arith.constant 0 : i32
    return %c0_i32, %c0_i32_0 : i32, i32
  }
  func.func @transform_5(%arg0: i32) -> (i32, i32) {
    %c0_i32 = arith.constant 0 : i32
    %c0_i32_0 = arith.constant 0 : i32
    return %arg0, %c0_i32 : i32, i32
  }
  func.func @transform_6(%arg0: i32) -> (i32, i32) {
    %c0_i32 = arith.constant 0 : i32
    %c0_i32_0 = arith.constant 0 : i32
    return %arg0, %c0_i32 : i32, i32
  }
}

module attributes {stable_mosaic.version = 11 : i64} {
  func.func @_ff_block_kernel(%arg0: i32, %arg1: memref<8x128xf32, #tpu.memory_space<vmem>>, %arg2: memref<2x128xf32, #tpu.memory_space<vmem>>, %arg3: memref<128x256xbf16, #tpu.memory_space<vmem>>, %arg4: memref<1x256xf32, #tpu.memory_space<vmem>>, %arg5: memref<256x128xbf16, #tpu.memory_space<vmem>>, %arg6: memref<1x128xf32, #tpu.memory_space<vmem>>, %arg7: memref<8x128xf32, #tpu.memory_space<vmem>>) attributes {dimension_semantics = [#tpu.dimension_semantics<parallel>], iteration_bounds = array<i64: 2>, scalar_prefetch = 0 : i64, scratch_operands = 0 : i64, tpu.core_type = #tpu.core_type<tc>, window_params = [{transform_indices = @transform_0, window_bounds = array<i64: 8, 128>}, {pipeline_mode = #tpu.pipeline_mode<synchronous>, transform_indices = @transform_1, window_bounds = array<i64: 2, 128>}, {pipeline_mode = #tpu.pipeline_mode<synchronous>, transform_indices = @transform_2, window_bounds = array<i64: 128, 256>}, {pipeline_mode = #tpu.pipeline_mode<synchronous>, transform_indices = @transform_3, window_bounds = array<i64: 1, 256>}, {pipeline_mode = #tpu.pipeline_mode<synchronous>, transform_indices = @transform_4, window_bounds = array<i64: 256, 128>}, {pipeline_mode = #tpu.pipeline_mode<synchronous>, transform_indices = @transform_5, window_bounds = array<i64: 1, 128>}, {transform_indices = @transform_6, window_bounds = array<i64: 8, 128>}]} {
    %c0 = arith.constant 0 : index
    %c0_0 = arith.constant 0 : index
    %0 = vector.load %arg1[%c0, %c0_0] : memref<8x128xf32, #tpu.memory_space<vmem>>, vector<8x128xf32>
    %c0_1 = arith.constant 0 : index
    %c0_2 = arith.constant 0 : index
    %1 = vector.load %arg2[%c0_1, %c0_2] : memref<2x128xf32, #tpu.memory_space<vmem>>, vector<2x128xf32>
    %cst = arith.constant dense<0.000000e+00> : vector<8xf32>
    %2 = vector.multi_reduction <add>, %0, %cst [1] : vector<8x128xf32> to vector<8xf32>
    %3 = vector.shape_cast %2 : vector<8xf32> to vector<8x1xf32>
    %cst_3 = arith.constant 1.280000e+02 : f32
    %4 = vector.broadcast %cst_3 : f32 to vector<8x1xf32>
    %5 = arith.divf %3, %4 : vector<8x1xf32>
    %6 = vector.broadcast %5 : vector<8x1xf32> to vector<8x128xf32>
    %7 = arith.subf %0, %6 : vector<8x128xf32>
    %8 = arith.mulf %7, %7 : vector<8x128xf32>
    %cst_4 = arith.constant dense<0.000000e+00> : vector<8xf32>
    %9 = vector.multi_reduction <add>, %8, %cst_4 [1] : vector<8x128xf32> to vector<8xf32>
    %10 = vector.shape_cast %9 : vector<8xf32> to vector<8x1xf32>
    %cst_5 = arith.constant 1.280000e+02 : f32
    %11 = vector.broadcast %cst_5 : f32 to vector<8x1xf32>
    %12 = arith.divf %10, %11 : vector<8x1xf32>
    %cst_6 = arith.constant 9.99999974E-6 : f32
    %13 = vector.broadcast %cst_6 : f32 to vector<8x1xf32>
    %14 = arith.addf %12, %13 : vector<8x1xf32>
    %15 = math.rsqrt %14 : vector<8x1xf32>
    %16 = vector.broadcast %15 : vector<8x1xf32> to vector<8x128xf32>
    %17 = arith.mulf %7, %16 : vector<8x128xf32>
    %18 = vector.extract_strided_slice %1 {offsets = [0, 0], sizes = [1, 128], strides = [1, 1]} : vector<2x128xf32> to vector<1x128xf32>
    %19 = vector.broadcast %18 : vector<1x128xf32> to vector<8x128xf32>
    %20 = arith.mulf %17, %19 : vector<8x128xf32>
    %21 = vector.extract_strided_slice %1 {offsets = [1, 0], sizes = [1, 128], strides = [1, 1]} : vector<2x128xf32> to vector<1x128xf32>
    %22 = vector.broadcast %21 : vector<1x128xf32> to vector<8x128xf32>
    %23 = arith.addf %20, %22 : vector<8x128xf32>
    %c0_7 = arith.constant 0 : index
    %c0_8 = arith.constant 0 : index
    %24 = vector.load %arg3[%c0_7, %c0_8] : memref<128x256xbf16, #tpu.memory_space<vmem>>, vector<128x256xbf16>
    %25 = arith.truncf %23 : vector<8x128xf32> to vector<8x128xbf16>
    %cst_9 = arith.constant dense<0.000000e+00> : vector<8x256xf32>
    %26 = tpu.matmul %25, %24, %cst_9 {dimension_numbers = #tpu.dot_dimension_numbers<[1], [0], [0], [1], [0, 0, 1, 1], [], []>} : vector<8x128xbf16>, vector<128x256xbf16>, vector<8x256xf32> -> vector<8x256xf32>
    %c0_10 = arith.constant 0 : index
    %c0_11 = arith.constant 0 : index
    %27 = vector.load %arg4[%c0_10, %c0_11] : memref<1x256xf32, #tpu.memory_space<vmem>>, vector<1x256xf32>
    %28 = vector.broadcast %27 : vector<1x256xf32> to vector<8x256xf32>
    %29 = arith.addf %26, %28 : vector<8x256xf32>
    %cst_12 = arith.constant 5.000000e-01 : f32
    %30 = vector.broadcast %cst_12 : f32 to vector<8x256xf32>
    %31 = arith.mulf %30, %29 : vector<8x256xf32>
    %cst_13 = arith.constant 4.471500e-02 : f32
    %32 = vector.broadcast %cst_13 : f32 to vector<8x256xf32>
    %33 = arith.mulf %32, %29 : vector<8x256xf32>
    %34 = arith.mulf %33, %29 : vector<8x256xf32>
    %35 = arith.mulf %34, %29 : vector<8x256xf32>
    %36 = arith.addf %29, %35 : vector<8x256xf32>
    %cst_14 = arith.constant 0.797884583 : f32
    %37 = vector.broadcast %cst_14 : f32 to vector<8x256xf32>
    %38 = arith.mulf %37, %36 : vector<8x256xf32>
    %39 = math.tanh %38 : vector<8x256xf32>
    %cst_15 = arith.constant 1.000000e+00 : f32
    %40 = vector.broadcast %cst_15 : f32 to vector<8x256xf32>
    %41 = arith.addf %40, %39 : vector<8x256xf32>
    %42 = arith.mulf %31, %41 : vector<8x256xf32>
    %c0_16 = arith.constant 0 : index
    %c0_17 = arith.constant 0 : index
    %43 = vector.load %arg5[%c0_16, %c0_17] : memref<256x128xbf16, #tpu.memory_space<vmem>>, vector<256x128xbf16>
    %44 = arith.truncf %42 : vector<8x256xf32> to vector<8x256xbf16>
    %cst_18 = arith.constant dense<0.000000e+00> : vector<8x128xf32>
    %45 = tpu.matmul %44, %43, %cst_18 {dimension_numbers = #tpu.dot_dimension_numbers<[1], [0], [0], [1], [0, 0, 1, 1], [], []>} : vector<8x256xbf16>, vector<256x128xbf16>, vector<8x128xf32> -> vector<8x128xf32>
    %c0_19 = arith.constant 0 : index
    %c0_20 = arith.constant 0 : index
    %46 = vector.load %arg6[%c0_19, %c0_20] : memref<1x128xf32, #tpu.memory_space<vmem>>, vector<1x128xf32>
    %47 = vector.broadcast %46 : vector<1x128xf32> to vector<8x128xf32>
    %48 = arith.addf %45, %47 : vector<8x128xf32>
    %49 = arith.addf %48, %0 : vector<8x128xf32>
    %c0_21 = arith.constant 0 : index
    %c0_22 = arith.constant 0 : index
    %50 = vector.load %arg7[%c0_21, %c0_22] : memref<8x128xf32, #tpu.memory_space<vmem>>, vector<8x128xf32>
    tpu.vector_store %arg7[%c0_21, %c0_22], %49 {strides = array<i32>} : memref<8x128xf32, #tpu.memory_space<vmem>>, vector<8x128xf32>,
    return
  }
  func.func @transform_0(%arg0: i32) -> (i32, i32) {
    %c0_i32 = arith.constant 0 : i32
    %c0_i32_0 = arith.constant 0 : i32
    return %arg0, %c0_i32 : i32, i32
  }
  func.func @transform_1(%arg0: i32) -> (i32, i32) {
    %c0_i32 = arith.constant 0 : i32
    %c0_i32_0 = arith.constant 0 : i32
    %c0_i32_1 = arith.constant 0 : i32
    return %c0_i32, %c0_i32_0 : i32, i32
  }
  func.func @transform_2(%arg0: i32) -> (i32, i32) {
    %c0_i32 = arith.constant 0 : i32
    %c0_i32_0 = arith.constant 0 : i32
    %c0_i32_1 = arith.constant 0 : i32
    return %c0_i32, %c0_i32_0 : i32, i32
  }
  func.func @transform_3(%arg0: i32) -> (i32, i32) {
    %c0_i32 = arith.constant 0 : i32
    %c0_i32_0 = arith.constant 0 : i32
    %c0_i32_1 = arith.constant 0 : i32
    return %c0_i32, %c0_i32_0 : i32, i32
  }
  func.func @transform_4(%arg0: i32) -> (i32, i32) {
    %c0_i32 = arith.constant 0 : i32
    %c0_i32_0 = arith.constant 0 : i32
    %c0_i32_1 = arith.constant 0 : i32
    return %c0_i32, %c0_i32_0 : i32, i32
  }
  func.func @transform_5(%arg0: i32) -> (i32, i32) {
    %c0_i32 = arith.constant 0 : i32
    %c0_i32_0 = arith.constant 0 : i32
    %c0_i32_1 = arith.constant 0 : i32
    return %c0_i32, %c0_i32_0 : i32, i32
  }
  func.func @transform_6(%arg0: i32) -> (i32, i32) {
    %c0_i32 = arith.constant 0 : i32
    %c0_i32_0 = arith.constant 0 : i32
    return %arg0, %c0_i32 : i32, i32
  }
}

</mosaic_0001>

<llo_original>
// kernel: cross_transformer_encoder.7
$region0: #{cross_transformer_encoder.7}
  #allocation0 [shape = 'u32[]', space=smem, size = 0x4, offset = 0x4, fixed_abs, tag = 'smem constant byte address 0x4 - core index']
  #allocation1 [shape = 'u32[144,128]{1,0:T(1,128)}', space=vmem, size = 0x12000, scoped, tag = 'internal scratch']
  %s0 = inlined_call_operand.vmem [shape: f32[2,8,128], index: 0, kind: input, shape index: {}]
  %s1 = inlined_call_operand.vmem [shape: f32[2,128], index: 1, kind: input, shape index: {}]
  %s2 = inlined_call_operand.vmem [shape: bf16[128,128], index: 2, kind: input, shape index: {}]
  %s3 = inlined_call_operand.vmem [shape: bf16[2,16,128], index: 3, kind: input, shape index: {}]
  %s4 = inlined_call_operand.vmem [shape: bf16[2,16,128], index: 4, kind: input, shape index: {}]
  %s5 = inlined_call_operand.vmem [shape: bf16[128,128], index: 5, kind: input, shape index: {}]
  %s6 = inlined_call_operand.vmem [shape: f32[1,128], index: 6, kind: input, shape index: {}]
  %s7 = inlined_call_operand.vmem [shape: f32[2,8,128], index: 7, kind: output, shape index: {}]
  %s8 = sld [smem:[#allocation0]]
  $region61: #{cross_transformer_encoder.7} parent=0
    _
  %s10 = ssub.s32 1, %s8
  %s11 = scalar_select 0, %s10, %s8
  loop: start=0, step=1, limit=4
  $region2: #{cross_transformer_encoder.7} parent=0 // loop_pre_header
    _
  $region3: #{cross_transformer_encoder.7} parent=0 // loop_header
    %s13 = sphi 0, %s17
    %p14 = scmp.ge.s32.totalorder %s13, 4
    %s20 = sphi 0, %s32
    %s21 = sphi 0, %s28
    %s22 = sphi 0, %s20
    %s23 = sphi 0, %s21
    %s24 = sphi 0, %s22
    %s25 = sphi 0, %s23
    %s37 = sphi 0, %s39
    %s40 = sphi 0, %s37
    %s41 = sphi 0, %s40
    %s57 = sphi 0, %s41
    %s61 = sphi 0, %s61
    %s63 = sphi 0, %s61
    %s64 = sphi 0, %s63
    %s78 = sphi 0, %s64
    %s82 = sphi 0, %s82
    %s84 = sphi 0, %s82
    %s85 = sphi 0, %s84
    %s99 = sphi 0, %s85
    %s105 = sphi 0, %s107
    %s108 = sphi 0, %s105
    %s109 = sphi 0, %s108
    %s125 = sphi 0, %s109
    %s131 = sphi 0, %s133
    %s134 = sphi 0, %s131
    %s135 = sphi 0, %s134
    %s151 = sphi 0, %s135
    %s155 = sphi 0, %s155
    %s157 = sphi 0, %s155
    %s158 = sphi 0, %s157
    %s172 = sphi 0, %s158
    %s176 = sphi 0, %s176
    %s178 = sphi 0, %s176
    %s179 = sphi 0, %s178
    %s193 = sphi 0, %s179
    %s201 = sphi 0, %s203
    %s204 = sphi 0, %s201
    %s205 = sphi 0, %s204
    %s221 = sphi 0, %s205
  $region4: #{cross_transformer_encoder.7} parent=0 // loop_header_branch
    %16 = sbr.rel (%p14) target = $region8
  $region5: #{cross_transformer_encoder.7} parent=0 // loop_body
    %s18 = ssub.s32 %s13, 1
    %s19 = ssub.s32 %s13, 2
    %s26 = sadd.s32 1, %s21
    %p27 = scmp.ge.s32.totalorder %s26, 1
    %s28 = scalar_select %p27, 0, %s26
    %s29 = sadd.s32 1, %s20
    %s30 = scalar_select %p27, %s29, %s20
    %p31 = scmp.ge.s32.totalorder %s30, 2
    %s32 = scalar_select %p31, 0, %s30
    %s33 = ssub.s32 %s20, %s32
    %s34 = ssub.s32 %s21, %s28
    %s35 = sor.u32 %s33, %s34
    %p36 = scmp.eq.s32.totalorder %s35, 0
    %s38 = sadd.s32 %s37, 1
    %s39 = scalar_select %p36, %s37, %s38
    %p42 = pneg %p36
    %p43 = scmp.eq.s32.totalorder %s13, 1
    %p44 = por %p42, %p43
    %p45 = scmp.ne.s32.totalorder %s37, %s40
    %p46 = scmp.eq.s32.totalorder %s13, 0
    %p47 = por %p45, %p46
    %p48 = scmp.ne.s32.totalorder %s37, %s40
    %p49 = scmp.eq.s32.totalorder %s18, 1
    %p50 = por %p48, %p49
    %p51 = scmp.ne.s32.totalorder %s40, %s41
    %p52 = scmp.eq.s32.totalorder %s18, 0
    %p53 = por %p51, %p52
    %p54 = scmp.ne.s32.totalorder %s40, %s41
    %p55 = scmp.eq.s32.totalorder %s19, 1
    %p56 = por %p54, %p55
    %p58 = scmp.ne.s32.totalorder %s41, %s57
    %p59 = scmp.eq.s32.totalorder %s19, 0
    %p60 = por %p58, %p59
    %s62 = sadd.s32 %s61, 1
    %p65 = scmp.eq.s32.totalorder %s13, 1
    %p66 = scmp.ne.s32.totalorder %s61, %s63
    %p67 = scmp.eq.s32.totalorder %s13, 0
    %p68 = por %p66, %p67
    %p69 = scmp.ne.s32.totalorder %s61, %s63
    %p70 = scmp.eq.s32.totalorder %s18, 1
    %p71 = por %p69, %p70
    %p72 = scmp.ne.s32.totalorder %s63, %s64
    %p73 = scmp.eq.s32.totalorder %s18, 0
    %p74 = por %p72, %p73
    %p75 = scmp.ne.s32.totalorder %s63, %s64
    %p76 = scmp.eq.s32.totalorder %s19, 1
    %p77 = por %p75, %p76
    %p79 = scmp.ne.s32.totalorder %s64, %s78
    %p80 = scmp.eq.s32.totalorder %s19, 0
    %p81 = por %p79, %p80
    %s83 = sadd.s32 %s82, 1
    %p86 = scmp.eq.s32.totalorder %s13, 1
    %p87 = scmp.ne.s32.totalorder %s82, %s84
    %p88 = scmp.eq.s32.totalorder %s13, 0
    %p89 = por %p87, %p88
    %p90 = scmp.ne.s32.totalorder %s82, %s84
    %p91 = scmp.eq.s32.totalorder %s18, 1
    %p92 = por %p90, %p91
    %p93 = scmp.ne.s32.totalorder %s84, %s85
    %p94 = scmp.eq.s32.totalorder %s18, 0
    %p95 = por %p93, %p94
    %p96 = scmp.ne.s32.totalorder %s84, %s85
    %p97 = scmp.eq.s32.totalorder %s19, 1
    %p98 = por %p96, %p97
    %p100 = scmp.ne.s32.totalorder %s85, %s99
    %p101 = scmp.eq.s32.totalorder %s19, 0
    %p102 = por %p100, %p101
    %s103 = ssub.s32 %s20, %s32
    %p104 = scmp.eq.s32.totalorder %s103, 0
    %s106 = sadd.s32 %s105, 1
    %s107 = scalar_select %p104, %s105, %s106
    %p110 = pneg %p104
    %p111 = scmp.eq.s32.totalorder %s13, 1
    %p112 = por %p110, %p111
    %p113 = scmp.ne.s32.totalorder %s105, %s108
    %p114 = scmp.eq.s32.totalorder %s13, 0
    %p115 = por %p113, %p114
    %p116 = scmp.ne.s32.totalorder %s105, %s108
    %p117 = scmp.eq.s32.totalorder %s18, 1
    %p118 = por %p116, %p117
    %p119 = scmp.ne.s32.totalorder %s108, %s109
    %p120 = scmp.eq.s32.totalorder %s18, 0
    %p121 = por %p119, %p120
    %p122 = scmp.ne.s32.totalorder %s108, %s109
    %p123 = scmp.eq.s32.totalorder %s19, 1
    %p124 = por %p122, %p123
    %p126 = scmp.ne.s32.totalorder %s109, %s125
    %p127 = scmp.eq.s32.totalorder %s19, 0
    %p128 = por %p126, %p127
    %s129 = ssub.s32 %s20, %s32
    %p130 = scmp.eq.s32.totalorder %s129, 0
    %s132 = sadd.s32 %s131, 1
    %s133 = scalar_select %p130, %s131, %s132
    %p136 = pneg %p130
    %p137 = scmp.eq.s32.totalorder %s13, 1
    %p138 = por %p136, %p137
    %p139 = scmp.ne.s32.totalorder %s131, %s134
    %p140 = scmp.eq.s32.totalorder %s13, 0
    %p141 = por %p139, %p140
    %p142 = scmp.ne.s32.totalorder %s131, %s134
    %p143 = scmp.eq.s32.totalorder %s18, 1
    %p144 = por %p142, %p143
    %p145 = scmp.ne.s32.totalorder %s134, %s135
    %p146 = scmp.eq.s32.totalorder %s18, 0
    %p147 = por %p145, %p146
    %p148 = scmp.ne.s32.totalorder %s134, %s135
    %p149 = scmp.eq.s32.totalorder %s19, 1
    %p150 = por %p148, %p149
    %p152 = scmp.ne.s32.totalorder %s135, %s151
    %p153 = scmp.eq.s32.totalorder %s19, 0
    %p154 = por %p152, %p153
    %s156 = sadd.s32 %s155, 1
    %p159 = scmp.eq.s32.totalorder %s13, 1
    %p160 = scmp.ne.s32.totalorder %s155, %s157
    %p161 = scmp.eq.s32.totalorder %s13, 0
    %p162 = por %p160, %p161
    %p163 = scmp.ne.s32.totalorder %s155, %s157
    %p164 = scmp.eq.s32.totalorder %s18, 1
    %p165 = por %p163, %p164
    %p166 = scmp.ne.s32.totalorder %s157, %s158
    %p167 = scmp.eq.s32.totalorder %s18, 0
    %p168 = por %p166, %p167
    %p169 = scmp.ne.s32.totalorder %s157, %s158
    %p170 = scmp.eq.s32.totalorder %s19, 1
    %p171 = por %p169, %p170
    %p173 = scmp.ne.s32.totalorder %s158, %s172
    %p174 = scmp.eq.s32.totalorder %s19, 0
    %p175 = por %p173, %p174
    %s177 = sadd.s32 %s176, 1
    %p180 = scmp.eq.s32.totalorder %s13, 1
    %p181 = scmp.ne.s32.totalorder %s176, %s178
    %p182 = scmp.eq.s32.totalorder %s13, 0
    %p183 = por %p181, %p182
    %p184 = scmp.ne.s32.totalorder %s176, %s178
    %p185 = scmp.eq.s32.totalorder %s18, 1
    %p186 = por %p184, %p185
    %p187 = scmp.ne.s32.totalorder %s178, %s179
    %p188 = scmp.eq.s32.totalorder %s18, 0
    %p189 = por %p187, %p188
    %p190 = scmp.ne.s32.totalorder %s178, %s179
    %p191 = scmp.eq.s32.totalorder %s19, 1
    %p192 = por %p190, %p191
    %p194 = scmp.ne.s32.totalorder %s179, %s193
    %p195 = scmp.eq.s32.totalorder %s19, 0
    %p196 = por %p194, %p195
    %s197 = ssub.s32 %s20, %s32
    %s198 = ssub.s32 %s21, %s28
    %s199 = sor.u32 %s197, %s198
    %p200 = scmp.eq.s32.totalorder %s199, 0
    %s202 = sadd.s32 %s201, 1
    %s203 = scalar_select %p200, %s201, %s202
    %p206 = pneg %p200
    %p207 = scmp.eq.s32.totalorder %s13, 1
    %p208 = por %p206, %p207
    %p209 = scmp.ne.s32.totalorder %s201, %s204
    %p210 = scmp.eq.s32.totalorder %s13, 0
    %p211 = por %p209, %p210
    %p212 = scmp.ne.s32.totalorder %s201, %s204
    %p213 = scmp.eq.s32.totalorder %s18, 1
    %p214 = por %p212, %p213
    %p215 = scmp.ne.s32.totalorder %s204, %s205
    %p216 = scmp.eq.s32.totalorder %s18, 0
    %p217 = por %p215, %p216
    %p218 = scmp.ne.s32.totalorder %s204, %s205
    %p219 = scmp.eq.s32.totalorder %s19, 1
    %p220 = por %p218, %p219
    %p222 = scmp.ne.s32.totalorder %s205, %s221
    %p223 = scmp.eq.s32.totalorder %s19, 0
    %p224 = por %p222, %p223
    %p225 = scmp.le.s32.totalorder 1, %s13
    %p226 = scmp.lt.s32.totalorder %s13, 3
    %p227 = pnand %p225, %p226
    %p228 = pneg %p227
    // Predicated region
    $region9: #{cross_transformer_encoder.7} parent=5 // pred_check
      _
    $region10: #{cross_transformer_encoder.7} parent=5 // pred_check_branch
      %230 = sbr.rel (%p227) target = $region12
    $region11: #{cross_transformer_encoder.7} parent=5 // pred_region
      %s231 = ssub.s32 %s13, 1
      // Predicated region
      $region13: #{cross_transformer_encoder.7} parent=11 // pred_check
        %p232 = pneg %p74
      $region14: #{cross_transformer_encoder.7} parent=11 // pred_check_branch
        %234 = sbr.rel (%p232) target = $region16
      $region15: #{cross_transformer_encoder.7} parent=11 // pred_region
        _
      $region16: #{cross_transformer_encoder.7} parent=11 // pred_fallthru
        _
      // Predicated region
      $region17: #{cross_transformer_encoder.7} parent=11 // pred_check
        %p235 = pneg %p95
      $region18: #{cross_transformer_encoder.7} parent=11 // pred_check_branch
        %237 = sbr.rel (%p235) target = $region20
      $region19: #{cross_transformer_encoder.7} parent=11 // pred_region
        _
      $region20: #{cross_transformer_encoder.7} parent=11 // pred_fallthru
        _
      // Predicated region
      $region21: #{cross_transformer_encoder.7} parent=11 // pred_check
        %p238 = pneg %p168
      $region22: #{cross_transformer_encoder.7} parent=11 // pred_check_branch
        %240 = sbr.rel (%p238) target = $region24
      $region23: #{cross_transformer_encoder.7} parent=11 // pred_region
        _
      $region24: #{cross_transformer_encoder.7} parent=11 // pred_fallthru
        _
      // Predicated region
      $region25: #{cross_transformer_encoder.7} parent=11 // pred_check
        %p241 = pneg %p189
      $region26: #{cross_transformer_encoder.7} parent=11 // pred_check_branch
        %243 = sbr.rel (%p241) target = $region28
      $region27: #{cross_transformer_encoder.7} parent=11 // pred_region
        _
      $region28: #{cross_transformer_encoder.7} parent=11 // pred_fallthru
        _
    $region12: #{cross_transformer_encoder.7} parent=5 // pred_fallthru
      _
    %p244 = scmp.lt.s32.totalorder %s13, 2
    // Predicated region
    $region29: #{cross_transformer_encoder.7} parent=5 // pred_check
      %p245 = pneg %p244
    $region30: #{cross_transformer_encoder.7} parent=5 // pred_check_branch
      %247 = sbr.rel (%p245) target = $region32
    $region31: #{cross_transformer_encoder.7} parent=5 // pred_region
      // Predicated region
      $region33: #{cross_transformer_encoder.7} parent=31 // pred_check
        %p248 = pneg %p47
      $region34: #{cross_transformer_encoder.7} parent=31 // pred_check_branch
        %250 = sbr.rel (%p248) target = $region36
      $region35: #{cross_transformer_encoder.7} parent=31 // pred_region
        %p251 = scmp.lt.s32.totalorder %s20, 1
        %s252 = scalar_select %p251, %s20, 1
        %p253 = scmp.lt.s32.totalorder %s21, 0
        %s254 = scalar_select %p253, %s21, 0
        %s255 = sadd.s32 %s254, %s252
        %s256 = smul.addr %s255, 8
        %s257 = scalar_lea.vmem %s0, %s256
      $region36: #{cross_transformer_encoder.7} parent=31 // pred_fallthru
        _
      // Predicated region
      $region37: #{cross_transformer_encoder.7} parent=31 // pred_check
        %p258 = pneg %p115
      $region38: #{cross_transformer_encoder.7} parent=31 // pred_check_branch
        %260 = sbr.rel (%p258) target = $region40
      $region39: #{cross_transformer_encoder.7} parent=31 // pred_region
        %p261 = scmp.lt.s32.totalorder %s20, 1
        %s262 = scalar_select %p261, %s20, 1
        %s263 = smul.addr %s262, 2
        %s264 = smul.addr %s263, 4
        %s265 = scalar_lea.vmem %s3, %s264
      $region40: #{cross_transformer_encoder.7} parent=31 // pred_fallthru
        _
      // Predicated region
      $region41: #{cross_transformer_encoder.7} parent=31 // pred_check
        %p266 = pneg %p141
      $region42: #{cross_transformer_encoder.7} parent=31 // pred_check_branch
        %268 = sbr.rel (%p266) target = $region44
      $region43: #{cross_transformer_encoder.7} parent=31 // pred_region
        %p269 = scmp.lt.s32.totalorder %s20, 1
        %s270 = scalar_select %p269, %s20, 1
        %s271 = smul.addr %s270, 2
        %s272 = smul.addr %s271, 4
        %s273 = scalar_lea.vmem %s4, %s272
      $region44: #{cross_transformer_encoder.7} parent=31 // pred_fallthru
        _
    $region32: #{cross_transformer_encoder.7} parent=5 // pred_fallthru
      _
    %p274 = scmp.le.s32.totalorder 1, %s13
    %p275 = scmp.lt.s32.totalorder %s13, 3
    %p276 = pnand %p274, %p275
    %p277 = pneg %p276
    // Predicated region
    $region45: #{cross_transformer_encoder.7} parent=5 // pred_check
      _
    $region46: #{cross_transformer_encoder.7} parent=5 // pred_check_branch
      %279 = sbr.rel (%p276) target = $region48
    $region47: #{cross_transformer_encoder.7} parent=5 // pred_region
      %s280 = ssub.s32 %s13, 1
      %p281 = scmp.lt.s32.totalorder %s22, 1
      %s282 = scalar_select %p281, %s22, 1
      %p283 = scmp.lt.s32.totalorder %s23, 0
      %s284 = scalar_select %p283, %s23, 0
      %s285 = sadd.s32 %s284, %s282
      %s286 = smul.addr %s285, 8
      %s287 = scalar_lea.vmem %s0, %s286
      %p288 = pneg %p53
      %p289 = pneg %p50
      %p290 = pneg %p74
      %p291 = pneg %p71
      %p292 = pneg %p95
      %p293 = pneg %p92
      %p294 = scmp.lt.s32.totalorder %s22, 1
      %s295 = scalar_select %p294, %s22, 1
      %s296 = smul.addr %s295, 2
      %s297 = smul.addr %s296, 4
      %s298 = scalar_lea.vmem %s3, %s297
      %p299 = pneg %p121
      %p300 = pneg %p118
      %p301 = scmp.lt.s32.totalorder %s22, 1
      %s302 = scalar_select %p301, %s22, 1
      %s303 = smul.addr %s302, 2
      %s304 = smul.addr %s303, 4
      %s305 = scalar_lea.vmem %s4, %s304
      %p306 = pneg %p147
      %p307 = pneg %p144
      %p308 = pneg %p168
      %p309 = pneg %p165
      %p310 = pneg %p189
      %p311 = pneg %p186
      %p312 = pneg %p217
      %p313 = pneg %p214
      %p314 = scmp.lt.s32.totalorder %s22, 1
      %s315 = scalar_select %p314, %s22, 1
      %p316 = scmp.lt.s32.totalorder %s23, 0
      %s317 = scalar_select %p316, %s23, 0
      %s318 = sadd.s32 %s317, %s315
      %s319 = smul.addr %s318, 8
      %s320 = scalar_lea.vmem %s7, %s319
      %p321 = scmp.lt.s32.totalorder %s22, 1
      %s322 = scalar_select %p321, %s22, 1
      %p323 = scmp.lt.s32.totalorder %s23, 0
      %s324 = scalar_select %p323, %s23, 0
      %s325 = sadd.s32 %s324, %s322
      %s326 = smul.addr %s325, 8
      %s327 = scalar_lea.vmem %s0, %s326
      %p328 = scmp.lt.s32.totalorder %s22, 1
      %s329 = scalar_select %p328, %s22, 1
      %s330 = smul.addr %s329, 2
      %s331 = smul.addr %s330, 4
      %s332 = scalar_lea.vmem %s3, %s331
      %p333 = scmp.lt.s32.totalorder %s22, 1
      %s334 = scalar_select %p333, %s22, 1
      %s335 = smul.addr %s334, 2
      %s336 = smul.addr %s335, 4
      %s337 = scalar_lea.vmem %s4, %s336
      %p338 = scmp.lt.s32.totalorder %s22, 1
      %s339 = scalar_select %p338, %s22, 1
      %p340 = scmp.lt.s32.totalorder %s23, 0
      %s341 = scalar_select %p340, %s23, 0
      %s342 = sadd.s32 %s341, %s339
      %s343 = smul.addr %s342, 8
      %s344 = scalar_lea.vmem %s7, %s343
      %v346 = vld [vmem:[%s327] sm:$0xff]
      %v347 = vld [vmem:[%s1] sm:$0x3]
      %348 = vadd.xlane.f32.xlu0 %v346
      %v349 = vpop.xlane.xlu0 %348
      %v350 = vrcp.pop 128.0
      %v351 = vmul.f32 %v349, %v350
      %v352 = vsub.f32 %v346, %v351
      %v353 = vmul.f32 %v352, %v352
      %354 = vadd.xlane.f32.xlu0 %v353
      %v355 = vpop.xlane.xlu0 %354
      %v356 = vmul.f32 %v355, %v350
      %v357 = vadd.f32 %v356, 1e-05
      %v358 = vrsqrt.pop %v357
      %v359 = vmul.f32 %v352, %v358
      %v360 = vlaneseq
      %v361 = vshrl.u32 %v360, 7
      %v362 = vsub.s32 0, %v361
      %v363 = vrot.slane %v347, %v362
      %v364 = vmul.f32 %v359, %v363
      %v365 = vlaneseq
      %v366 = vshrl.u32 %v365, 7
      %v367 = vsub.s32 1, %v366
      %v368 = vrot.slane %v347, %v367
      %v369 = vadd.f32 %v364, %v368
      %v370 = vld [vmem:[%s2] sm:$0xf]
      %v371 = vld [vmem:[%s2 + $0x4] sm:$0xf]
      %v372 = vld [vmem:[%s2 + $0x8] sm:$0xf]
      %v373 = vld [vmem:[%s2 + $0xc] sm:$0xf]
      %v374 = vld [vmem:[%s2 + $0x10] sm:$0xf]
      %v375 = vld [vmem:[%s2 + $0x14] sm:$0xf]
      %v376 = vld [vmem:[%s2 + $0x18] sm:$0xf]
      %v377 = vld [vmem:[%s2 + $0x1c] sm:$0xf]
      %v378 = vld [vmem:[%s2 + $0x20] sm:$0xf]
      %v379 = vld [vmem:[%s2 + $0x24] sm:$0xf]
      %v380 = vld [vmem:[%s2 + $0x28] sm:$0xf]
      %v381 = vld [vmem:[%s2 + $0x2c] sm:$0xf]
      %v382 = vld [vmem:[%s2 + $0x30] sm:$0xf]
      %v383 = vld [vmem:[%s2 + $0x34] sm:$0xf]
      %v384 = vld [vmem:[%s2 + $0x38] sm:$0xf]
      %v385 = vld [vmem:[%s2 + $0x3c] sm:$0xf]
      %v386 = vpack.c.bf16 %v369, %v369
      %v403 = vunpack.c.l.b16 %v370
      %v404 = vunpack.c.l.b16 %v371
      %v405 = vunpack.c.l.b16 %v372
      %v406 = vunpack.c.l.b16 %v373
      %v407 = vunpack.c.l.b16 %v374
      %v408 = vunpack.c.l.b16 %v375
      %v409 = vunpack.c.l.b16 %v376
      %v410 = vunpack.c.l.b16 %v377
      %v411 = vunpack.c.l.b16 %v378
      %v412 = vunpack.c.l.b16 %v379
      %v413 = vunpack.c.l.b16 %v380
      %v414 = vunpack.c.l.b16 %v381
      %v415 = vunpack.c.l.b16 %v382
      %v416 = vunpack.c.l.b16 %v383
      %v417 = vunpack.c.l.b16 %v384
      %v418 = vunpack.c.l.b16 %v385
      %v419 = vpack.c.b16 %v404, %v403
      %v420 = vpack.c.b16 %v406, %v405
      %v421 = vpack.c.b16 %v408, %v407
      %v422 = vpack.c.b16 %v410, %v409
      %v423 = vpack.c.b16 %v412, %v411
      %v424 = vpack.c.b16 %v414, %v413
      %v425 = vpack.c.b16 %v416, %v415
      %v426 = vpack.c.b16 %v418, %v417
      %435 = vmatprep.subr.bf16.mxu0 0
      %436 = vmatpush1.bf16.msra.mxu0 %v419
      %437 = vmatprep.subr.bf16.mxu0 0
      %438 = vmatpush1.bf16.msra.mxu0 %v420
      %439 = vmatprep.subr.bf16.mxu0 0
      %440 = vmatpush1.bf16.msra.mxu0 %v421
      %441 = vmatprep.subr.bf16.mxu0 0
      %442 = vmatpush1.bf16.msra.mxu0 %v422
      %443 = vmatprep.subr.bf16.mxu0 0
      %444 = vmatpush1.bf16.msra.mxu0 %v423
      %445 = vmatprep.subr.bf16.mxu0 0
      %446 = vmatpush1.bf16.msra.mxu0 %v424
      %447 = vmatprep.subr.bf16.mxu0 0
      %448 = vmatpush1.bf16.msra.mxu0 %v425
      %449 = vmatprep.subr.bf16.mxu0 0
      %450 = vmatpush1.bf16.msra.mxu0 %v426
      %451 = vmatprep.subr.bf16.mxu0 0
      %452 = vmatpush1.bf16.msra.mxu0 0
      %453 = vmatprep.subr.bf16.mxu0 0
      %454 = vmatpush1.bf16.msra.mxu0 0
      %455 = vmatprep.subr.bf16.mxu0 0
      %456 = vmatpush1.bf16.msra.mxu0 0
      %457 = vmatprep.subr.bf16.mxu0 0
      %458 = vmatpush1.bf16.msra.mxu0 0
      %459 = vmatprep.subr.bf16.mxu0 0
      %460 = vmatpush1.bf16.msra.mxu0 0
      %461 = vmatprep.subr.bf16.mxu0 0
      %462 = vmatpush1.bf16.msra.mxu0 0
      %463 = vmatprep.subr.bf16.mxu0 0
      %464 = vmatpush1.bf16.msra.mxu0 0
      %465 = vmatprep.subr.bf16.mxu0 0
      %466 = vmatpush1.bf16.msra.mxu0 0
      %467 = vmatprep.mubr.bf16.mxu0 0
      %468 = vmatmul.mubr.bf16.gmra.mrb[0].mxu0 %v386
      %v469 = vpop.f32.mrb[0].mxu0
      %v470 = vadd.f32 0.0, %v469
      %v471 = vpop.f32.mrb[0].mxu0
      %v472 = vpop.f32.mrb[0].mxu0
      %v473 = vpop.f32.mrb[0].mxu0
      %474 = vdwg.mxu0
      %v475 = vmul.f32 %v470, 0.125
      %v476 = vld [vmem:[%s332] sm:$0xf]
      %v477 = vld [vmem:[%s332 + $0x4] sm:$0xf]
      %v478 = vld [vmem:[%s337] sm:$0xf]
      %v479 = vld [vmem:[%s337 + $0x4] sm:$0xf]
      %v480 = vpack.c.bf16 %v475, %v475
      %v483 = vunpack.c.l.b16 %v476
      %v484 = vunpack.c.l.b16 %v477
      %v485 = vpack.c.b16 %v484, %v483
      %vm486 = vcmask 523264
      %v488 = vsel %vm486, %v480, 0
      %v491 = vsel %vm486, %v485, 0
      %493 = vmatprep.subr.bf16.mxu0 0
      %494 = vmatpush1.bf16.xpose.msra.mxu0 %v491
      %495 = vmatprep.subr.bf16.mxu0 0
      %496 = vmatpush1.bf16.xpose.msra.mxu0 0
      %497 = vmatprep.subr.bf16.mxu0 0
      %498 = vmatpush1.bf16.xpose.msra.mxu0 0
      %499 = vmatprep.subr.bf16.mxu0 0
      %500 = vmatpush1.bf16.xpose.msra.mxu0 0
      %501 = vmatprep.subr.bf16.mxu0 0
      %502 = vmatpush1.bf16.xpose.msra.mxu0 0
      %503 = vmatprep.subr.bf16.mxu0 0
      %504 = vmatpush1.bf16.xpose.msra.mxu0 0
      %505 = vmatprep.subr.bf16.mxu0 0
      %506 = vmatpush1.bf16.xpose.msra.mxu0 0
      %507 = vmatprep.subr.bf16.mxu0 0
      %508 = vmatpush1.bf16.xpose.msra.mxu0 0
      %509 = vmatprep.subr.bf16.mxu0 0
      %510 = vmatpush1.bf16.xpose.msra.mxu0 0
      %511 = vmatprep.subr.bf16.mxu0 0
      %512 = vmatpush1.bf16.xpose.msra.mxu0 0
      %513 = vmatprep.subr.bf16.mxu0 0
      %514 = vmatpush1.bf16.xpose.msra.mxu0 0
      %515 = vmatprep.subr.bf16.mxu0 0
      %516 = vmatpush1.bf16.xpose.msra.mxu0 0
      %517 = vmatprep.subr.bf16.mxu0 0
      %518 = vmatpush1.bf16.xpose.msra.mxu0 0
      %519 = vmatprep.subr.bf16.mxu0 0
      %520 = vmatpush1.bf16.xpose.msra.mxu0 0
      %521 = vmatprep.subr.bf16.mxu0 0
      %522 = vmatpush1.bf16.xpose.msra.mxu0 0
      %523 = vmatprep.subr.bf16.mxu0 0
      %524 = vmatpush1.bf16.xpose.msra.mxu0 0
      %525 = vmatprep.mubr.bf16.mxu0 0
      %526 = vmatmul.mubr.bf16.gmra.mrb[0].mxu0 %v488
      %v527 = vpop.f32.mrb[0].mxu0
      %v528 = vadd.f32 0.0, %v527
      %v529 = vpop.f32.mrb[0].mxu0
      %v530 = vpop.f32.mrb[0].mxu0
      %v531 = vpop.f32.mrb[0].mxu0
      %532 = vdwg.mxu0
      %vm533 = vcmask 130048
      %v534 = vsel %vm533, %v528, -inf
      %535 = vmax.xlane.f32.xlu0 %v534
      %v536 = vpop.xlane.xlu0 %535
      %v537 = vsub.f32 %v528, %v536
      %v538 = vmul.f32 %v537, 1.442695
      %v539 = vpow.pop %v538
      %v540 = vsel %vm533, %v539, 0.0
      %541 = vadd.xlane.f32.xlu0 %v540
      %v542 = vpop.xlane.xlu0 %541
      %v543 = vrcp.pop %v542
      %v544 = vmul.f32 %v539, %v543
      %v545 = vpack.c.bf16 %v544, %v544
      %v548 = vunpack.c.l.b16 %v478
      %v549 = vunpack.c.l.b16 %v479
      %v550 = vpack.c.b16 %v549, %v548
      %v553 = vsel %vm533, %v545, 0
      %555 = vmatprep.subr.bf16.mxu0 0
      %556 = vmatpush1.bf16.msra.mxu0 %v550
      %557 = vmatprep.subr.bf16.mxu0 0
      %558 = vmatpush1.bf16.msra.mxu0 0
      %559 = vmatprep.subr.bf16.mxu0 0
      %560 = vmatpush1.bf16.msra.mxu0 0
      %561 = vmatprep.subr.bf16.mxu0 0
      %562 = vmatpush1.bf16.msra.mxu0 0
      %563 = vmatprep.subr.bf16.mxu0 0
      %564 = vmatpush1.bf16.msra.mxu0 0
      %565 = vmatprep.subr.bf16.mxu0 0
      %566 = vmatpush1.bf16.msra.mxu0 0
      %567 = vmatprep.subr.bf16.mxu0 0
      %568 = vmatpush1.bf16.msra.mxu0 0
      %569 = vmatprep.subr.bf16.mxu0 0
      %570 = vmatpush1.bf16.msra.mxu0 0
      %571 = vmatprep.subr.bf16.mxu0 0
      %572 = vmatpush1.bf16.msra.mxu0 0
      %573 = vmatprep.subr.bf16.mxu0 0
      %574 = vmatpush1.bf16.msra.mxu0 0
      %575 = vmatprep.subr.bf16.mxu0 0
      %576 = vmatpush1.bf16.msra.mxu0 0
      %577 = vmatprep.subr.bf16.mxu0 0
      %578 = vmatpush1.bf16.msra.mxu0 0
      %579 = vmatprep.subr.bf16.mxu0 0
      %580 = vmatpush1.bf16.msra.mxu0 0
      %581 = vmatprep.subr.bf16.mxu0 0
      %582 = vmatpush1.bf16.msra.mxu0 0
      %583 = vmatprep.subr.bf16.mxu0 0
      %584 = vmatpush1.bf16.msra.mxu0 0
      %585 = vmatprep.subr.bf16.mxu0 0
      %586 = vmatpush1.bf16.msra.mxu0 0
      %587 = vmatprep.mubr.bf16.mxu0 0
      %588 = vmatmul.mubr.bf16.gmra.mrb[0].mxu0 %v553
      %v589 = vpop.f32.mrb[0].mxu0
      %v590 = vadd.f32 0.0, %v589
      %v591 = vpop.f32.mrb[0].mxu0
      %v592 = vpop.f32.mrb[0].mxu0
      %v593 = vpop.f32.mrb[0].mxu0
      %594 = vdwg.mxu0
      %596 = vrot.lane.b32.xlu0 %v480, 64
      %v597 = vpop.permute.xlu0 %596
      %598 = vrot.lane.b32.xlu0 %v485, 64
      %v599 = vpop.permute.xlu0 %598
      %v601 = vsel %vm486, %v597, 0
      %v604 = vsel %vm486, %v599, 0
      %606 = vmatprep.subr.bf16.mxu0 0
      %607 = vmatpush1.bf16.xpose.msra.mxu0 %v604
      %608 = vmatprep.subr.bf16.mxu0 0
      %609 = vmatpush1.bf16.xpose.msra.mxu0 0
      %610 = vmatprep.subr.bf16.mxu0 0
      %611 = vmatpush1.bf16.xpose.msra.mxu0 0
      %612 = vmatprep.subr.bf16.mxu0 0
      %613 = vmatpush1.bf16.xpose.msra.mxu0 0
      %614 = vmatprep.subr.bf16.mxu0 0
      %615 = vmatpush1.bf16.xpose.msra.mxu0 0
      %616 = vmatprep.subr.bf16.mxu0 0
      %617 = vmatpush1.bf16.xpose.msra.mxu0 0
      %618 = vmatprep.subr.bf16.mxu0 0
      %619 = vmatpush1.bf16.xpose.msra.mxu0 0
      %620 = vmatprep.subr.bf16.mxu0 0
      %621 = vmatpush1.bf16.xpose.msra.mxu0 0
      %622 = vmatprep.subr.bf16.mxu0 0
      %623 = vmatpush1.bf16.xpose.msra.mxu0 0
      %624 = vmatprep.subr.bf16.mxu0 0
      %625 = vmatpush1.bf16.xpose.msra.mxu0 0
      %626 = vmatprep.subr.bf16.mxu0 0
      %627 = vmatpush1.bf16.xpose.msra.mxu0 0
      %628 = vmatprep.subr.bf16.mxu0 0
      %629 = vmatpush1.bf16.xpose.msra.mxu0 0
      %630 = vmatprep.subr.bf16.mxu0 0
      %631 = vmatpush1.bf16.xpose.msra.mxu0 0
      %632 = vmatprep.subr.bf16.mxu0 0
      %633 = vmatpush1.bf16.xpose.msra.mxu0 0
      %634 = vmatprep.subr.bf16.mxu0 0
      %635 = vmatpush1.bf16.xpose.msra.mxu0 0
      %636 = vmatprep.subr.bf16.mxu0 0
      %637 = vmatpush1.bf16.xpose.msra.mxu0 0
      %638 = vmatprep.mubr.bf16.mxu0 0
      %639 = vmatmul.mubr.bf16.gmra.mrb[0].mxu0 %v601
      %v640 = vpop.f32.mrb[0].mxu0
      %v641 = vadd.f32 0.0, %v640
      %v642 = vpop.f32.mrb[0].mxu0
      %v643 = vpop.f32.mrb[0].mxu0
      %v644 = vpop.f32.mrb[0].mxu0
      %645 = vdwg.mxu0
      %v646 = vsel %vm533, %v641, -inf
      %647 = vmax.xlane.f32.xlu0 %v646
      %v648 = vpop.xlane.xlu0 %647
      %v649 = vsub.f32 %v641, %v648
      %v650 = vmul.f32 %v649, 1.442695
      %v651 = vpow.pop %v650
      %v652 = vsel %vm533, %v651, 0.0
      %653 = vadd.xlane.f32.xlu0 %v652
      %v654 = vpop.xlane.xlu0 %653
      %v655 = vrcp.pop %v654
      %v656 = vmul.f32 %v651, %v655
      %v657 = vpack.c.bf16 %v656, %v656
      %658 = vrot.lane.b32.xlu0 %v550, 64
      %v659 = vpop.permute.xlu0 %658
      %v662 = vsel %vm533, %v657, 0
      %664 = vmatprep.subr.bf16.mxu0 0
      %665 = vmatpush1.bf16.msra.mxu0 %v659
      %666 = vmatprep.subr.bf16.mxu0 0
      %667 = vmatpush1.bf16.msra.mxu0 0
      %668 = vmatprep.subr.bf16.mxu0 0
      %669 = vmatpush1.bf16.msra.mxu0 0
      %670 = vmatprep.subr.bf16.mxu0 0
      %671 = vmatpush1.bf16.msra.mxu0 0
      %672 = vmatprep.subr.bf16.mxu0 0
      %673 = vmatpush1.bf16.msra.mxu0 0
      %674 = vmatprep.subr.bf16.mxu0 0
      %675 = vmatpush1.bf16.msra.mxu0 0
      %676 = vmatprep.subr.bf16.mxu0 0
      %677 = vmatpush1.bf16.msra.mxu0 0
      %678 = vmatprep.subr.bf16.mxu0 0
      %679 = vmatpush1.bf16.msra.mxu0 0
      %680 = vmatprep.subr.bf16.mxu0 0
      %681 = vmatpush1.bf16.msra.mxu0 0
      %682 = vmatprep.subr.bf16.mxu0 0
      %683 = vmatpush1.bf16.msra.mxu0 0
      %684 = vmatprep.subr.bf16.mxu0 0
      %685 = vmatpush1.bf16.msra.mxu0 0
      %686 = vmatprep.subr.bf16.mxu0 0
      %687 = vmatpush1.bf16.msra.mxu0 0
      %688 = vmatprep.subr.bf16.mxu0 0
      %689 = vmatpush1.bf16.msra.mxu0 0
      %690 = vmatprep.subr.bf16.mxu0 0
      %691 = vmatpush1.bf16.msra.mxu0 0
      %692 = vmatprep.subr.bf16.mxu0 0
      %693 = vmatpush1.bf16.msra.mxu0 0
      %694 = vmatprep.subr.bf16.mxu0 0
      %695 = vmatpush1.bf16.msra.mxu0 0
      %696 = vmatprep.mubr.bf16.mxu0 0
      %697 = vmatmul.mubr.bf16.gmra.mrb[0].mxu0 %v662
      %v698 = vpop.f32.mrb[0].mxu0
      %v699 = vadd.f32 0.0, %v698
      %v700 = vpop.f32.mrb[0].mxu0
      %v701 = vpop.f32.mrb[0].mxu0
      %v702 = vpop.f32.mrb[0].mxu0
      %703 = vdwg.mxu0
      %705 = vrot.lane.b32.xlu0 %v699, 64
      %v706 = vpop.permute.xlu0 %705
      %v708 = vsel %vm486, %v590, %v706
      %v709 = vld [vmem:[%s5] sm:$0xf]
      %v710 = vld [vmem:[%s5 + $0x4] sm:$0xf]
      %v711 = vld [vmem:[%s5 + $0x8] sm:$0xf]
      %v712 = vld [vmem:[%s5 + $0xc] sm:$0xf]
      %v713 = vld [vmem:[%s5 + $0x10] sm:$0xf]
      %v714 = vld [vmem:[%s5 + $0x14] sm:$0xf]
      %v715 = vld [vmem:[%s5 + $0x18] sm:$0xf]
      %v716 = vld [vmem:[%s5 + $0x1c] sm:$0xf]
      %v717 = vld [vmem:[%s5 + $0x20] sm:$0xf]
      %v718 = vld [vmem:[%s5 + $0x24] sm:$0xf]
      %v719 = vld [vmem:[%s5 + $0x28] sm:$0xf]
      %v720 = vld [vmem:[%s5 + $0x2c] sm:$0xf]
      %v721 = vld [vmem:[%s5 + $0x30] sm:$0xf]
      %v722 = vld [vmem:[%s5 + $0x34] sm:$0xf]
      %v723 = vld [vmem:[%s5 + $0x38] sm:$0xf]
      %v724 = vld [vmem:[%s5 + $0x3c] sm:$0xf]
      %v725 = vpack.c.bf16 %v708, %v708
      %v726 = vld [vmem:[%s6] sm:$0x1]
      %v728 = vlaneseq
      %v729 = vshrl.u32 %v728, 7
      %v730 = vsub.s32 0, %v729
      %v731 = vrot.slane %v726, %v730
      %v749 = vunpack.c.l.b16 %v709
      %v750 = vunpack.c.l.b16 %v710
      %v751 = vunpack.c.l.b16 %v711
      %v752 = vunpack.c.l.b16 %v712
      %v753 = vunpack.c.l.b16 %v713
      %v754 = vunpack.c.l.b16 %v714
      %v755 = vunpack.c.l.b16 %v715
      %v756 = vunpack.c.l.b16 %v716
      %v757 = vunpack.c.l.b16 %v717
      %v758 = vunpack.c.l.b16 %v718
      %v759 = vunpack.c.l.b16 %v719
      %v760 = vunpack.c.l.b16 %v720
      %v761 = vunpack.c.l.b16 %v721
      %v762 = vunpack.c.l.b16 %v722
      %v763 = vunpack.c.l.b16 %v723
      %v764 = vunpack.c.l.b16 %v724
      %v765 = vpack.c.b16 %v750, %v749
      %v766 = vpack.c.b16 %v752, %v751
      %v767 = vpack.c.b16 %v754, %v753
      %v768 = vpack.c.b16 %v756, %v755
      %v769 = vpack.c.b16 %v758, %v757
      %v770 = vpack.c.b16 %v760, %v759
      %v771 = vpack.c.b16 %v762, %v761
      %v772 = vpack.c.b16 %v764, %v763
      %781 = vmatprep.subr.bf16.mxu0 0
      %782 = vmatpush1.bf16.msra.mxu0 %v765
      %783 = vmatprep.subr.bf16.mxu0 0
      %784 = vmatpush1.bf16.msra.mxu0 %v766
      %785 = vmatprep.subr.bf16.mxu0 0
      %786 = vmatpush1.bf16.msra.mxu0 %v767
      %787 = vmatprep.subr.bf16.mxu0 0
      %788 = vmatpush1.bf16.msra.mxu0 %v768
      %789 = vmatprep.subr.bf16.mxu0 0
      %790 = vmatpush1.bf16.msra.mxu0 %v769
      %791 = vmatprep.subr.bf16.mxu0 0
      %792 = vmatpush1.bf16.msra.mxu0 %v770
      %793 = vmatprep.subr.bf16.mxu0 0
      %794 = vmatpush1.bf16.msra.mxu0 %v771
      %795 = vmatprep.subr.bf16.mxu0 0
      %796 = vmatpush1.bf16.msra.mxu0 %v772
      %797 = vmatprep.subr.bf16.mxu0 0
      %798 = vmatpush1.bf16.msra.mxu0 0
      %799 = vmatprep.subr.bf16.mxu0 0
      %800 = vmatpush1.bf16.msra.mxu0 0
      %801 = vmatprep.subr.bf16.mxu0 0
      %802 = vmatpush1.bf16.msra.mxu0 0
      %803 = vmatprep.subr.bf16.mxu0 0
      %804 = vmatpush1.bf16.msra.mxu0 0
      %805 = vmatprep.subr.bf16.mxu0 0
      %806 = vmatpush1.bf16.msra.mxu0 0
      %807 = vmatprep.subr.bf16.mxu0 0
      %808 = vmatpush1.bf16.msra.mxu0 0
      %809 = vmatprep.subr.bf16.mxu0 0
      %810 = vmatpush1.bf16.msra.mxu0 0
      %811 = vmatprep.subr.bf16.mxu0 0
      %812 = vmatpush1.bf16.msra.mxu0 0
      %813 = vmatprep.mubr.bf16.mxu0 0
      %814 = vmatmul.mubr.bf16.gmra.mrb[0].mxu0 %v725
      %v815 = vpop.f32.mrb[0].mxu0
      %v816 = vadd.f32 %v731, %v815
      %v817 = vpop.f32.mrb[0].mxu0
      %v818 = vpop.f32.mrb[0].mxu0
      %v819 = vpop.f32.mrb[0].mxu0
      %820 = vdwg.mxu0
      %v821 = vadd.f32 %v816, %v346
      %822 = vst [vmem:[%s344] sm:$0xff] %v821
      %p823 = scmp.lt.s32.totalorder %s22, 1
      %s824 = scalar_select %p823, %s22, 1
      %p825 = scmp.lt.s32.totalorder %s23, 0
      %s826 = scalar_select %p825, %s23, 0
      %s827 = sadd.s32 %s826, %s824
      %s828 = smul.addr %s827, 8
      %s829 = scalar_lea.vmem %s7, %s828
      // Predicated region
      $region49: #{cross_transformer_encoder.7} parent=47 // pred_check
        %p830 = pneg %p214
      $region50: #{cross_transformer_encoder.7} parent=47 // pred_check_branch
        %832 = sbr.rel (%p830) target = $region52
      $region51: #{cross_transformer_encoder.7} parent=47 // pred_region
        _
      $region52: #{cross_transformer_encoder.7} parent=47 // pred_fallthru
        _
    $region48: #{cross_transformer_encoder.7} parent=5 // pred_fallthru
      _
    %p833 = scmp.le.s32.totalorder 2, %s13
    // Predicated region
    $region53: #{cross_transformer_encoder.7} parent=5 // pred_check
      %p834 = pneg %p833
    $region54: #{cross_transformer_encoder.7} parent=5 // pred_check_branch
      %836 = sbr.rel (%p834) target = $region56
    $region55: #{cross_transformer_encoder.7} parent=5 // pred_region
      %s837 = ssub.s32 %s13, 2
      // Predicated region
      $region57: #{cross_transformer_encoder.7} parent=55 // pred_check
        %p838 = pneg %p220
      $region58: #{cross_transformer_encoder.7} parent=55 // pred_check_branch
        %840 = sbr.rel (%p838) target = $region60
      $region59: #{cross_transformer_encoder.7} parent=55 // pred_region
        %p841 = scmp.lt.s32.totalorder %s24, 1
        %s842 = scalar_select %p841, %s24, 1
        %p843 = scmp.lt.s32.totalorder %s25, 0
        %s844 = scalar_select %p843, %s25, 0
        %s845 = sadd.s32 %s844, %s842
        %s846 = smul.addr %s845, 8
        %s847 = scalar_lea.vmem %s7, %s846
      $region60: #{cross_transformer_encoder.7} parent=55 // pred_fallthru
        _
    $region56: #{cross_transformer_encoder.7} parent=5 // pred_fallthru
      _
  $region6: #{cross_transformer_encoder.7} parent=0 // loop_footer
    %s17 = sadd.s32 1, %s13
  $region7: #{cross_transformer_encoder.7} parent=0 // loop_footer_branch
    %12 = sbr.rel target = $region3
  $region8: #{cross_transformer_encoder.7} parent=0 // loop_exit
    _

// kernel: cross_transformer_encoder.8
$region0: #{cross_transformer_encoder.8}
  #allocation0 [shape = 'u32[]', space=smem, size = 0x4, offset = 0x4, fixed_abs, tag = 'smem constant byte address 0x4 - core index']
  #allocation1 [shape = 'u32[144,128]{1,0:T(1,128)}', space=vmem, size = 0x12000, scoped, tag = 'internal scratch']
  %s0 = inlined_call_operand.vmem [shape: f32[16,128], index: 0, kind: input, shape index: {}]
  %s1 = inlined_call_operand.vmem [shape: f32[2,128], index: 1, kind: input, shape index: {}]
  %s2 = inlined_call_operand.vmem [shape: bf16[128,256], index: 2, kind: input, shape index: {}]
  %s3 = inlined_call_operand.vmem [shape: f32[1,256], index: 3, kind: input, shape index: {}]
  %s4 = inlined_call_operand.vmem [shape: bf16[256,128], index: 4, kind: input, shape index: {}]
  %s5 = inlined_call_operand.hbm [shape: f32[1,128], index: 5, kind: input, shape index: {}]
  %s6 = inlined_call_operand.vmem [shape: f32[16,128], index: 6, kind: output, shape index: {}]
  %s7 = sld [smem:[#allocation0]]
  $region61: #{cross_transformer_encoder.8} parent=0
    _
  %s9 = ssub.s32 1, %s7
  %s10 = scalar_select 0, %s9, %s7
  $region1: #{cross_transformer_encoder.8} parent=0
    #allocation2 [shape = 'u8[512]{0}', space=vmem, size = 0x400, scoped, tag = 'input window, operand 5, single buffered']
    #allocation3 [shape = 's32[2]{0}', space=sflag, size = 0x8, scoped, tag = 'scoped memory for cross_transformer_encoder.8']
    %11 = vsyncpa [#allocation3], 0
    loop: start=0, step=1, limit=4
    $region2: #{cross_transformer_encoder.8} parent=1 // loop_pre_header
      _
    $region3: #{cross_transformer_encoder.8} parent=1 // loop_header
      %s13 = sphi 0, %s17
      %p14 = scmp.ge.s32.totalorder %s13, 4
      %s23 = sphi 0, %s25
      %s26 = sphi 0, %s23
      %s27 = sphi 0, %s26
      %s43 = sphi 0, %s27
      %s47 = sphi 0, %s47
      %s49 = sphi 0, %s47
      %s50 = sphi 0, %s49
      %s64 = sphi 0, %s50
      %s68 = sphi 0, %s68
      %s70 = sphi 0, %s68
      %s71 = sphi 0, %s70
      %s85 = sphi 0, %s71
      %s89 = sphi 0, %s89
      %s91 = sphi 0, %s89
      %s92 = sphi 0, %s91
      %s106 = sphi 0, %s92
      %s110 = sphi 0, %s110
      %s112 = sphi 0, %s110
      %s113 = sphi 0, %s112
      %s127 = sphi 0, %s113
      %s131 = sphi 0, %s131
      %s133 = sphi 0, %s131
      %s134 = sphi 0, %s133
      %s148 = sphi 0, %s134
      %s154 = sphi 0, %s156
      %s157 = sphi 0, %s154
      %s158 = sphi 0, %s157
      %s174 = sphi 0, %s158
    $region4: #{cross_transformer_encoder.8} parent=1 // loop_header_branch
      %16 = sbr.rel (%p14) target = $region8
    $region5: #{cross_transformer_encoder.8} parent=1 // loop_body
      %s18 = ssub.s32 %s13, 1
      %s19 = ssub.s32 %s13, 2
      %s20 = sadd.s32 %s13, 1
      %s21 = ssub.s32 %s13, %s20
      %p22 = scmp.eq.s32.totalorder %s21, 0
      %s24 = sadd.s32 %s23, 1
      %s25 = scalar_select %p22, %s23, %s24
      %p28 = pneg %p22
      %p29 = scmp.eq.s32.totalorder %s13, 1
      %p30 = por %p28, %p29
      %p31 = scmp.ne.s32.totalorder %s23, %s26
      %p32 = scmp.eq.s32.totalorder %s13, 0
      %p33 = por %p31, %p32
      %p34 = scmp.ne.s32.totalorder %s23, %s26
      %p35 = scmp.eq.s32.totalorder %s18, 1
      %p36 = por %p34, %p35
      %p37 = scmp.ne.s32.totalorder %s26, %s27
      %p38 = scmp.eq.s32.totalorder %s18, 0
      %p39 = por %p37, %p38
      %p40 = scmp.ne.s32.totalorder %s26, %s27
      %p41 = scmp.eq.s32.totalorder %s19, 1
      %p42 = por %p40, %p41
      %p44 = scmp.ne.s32.totalorder %s27, %s43
      %p45 = scmp.eq.s32.totalorder %s19, 0
      %p46 = por %p44, %p45
      %s48 = sadd.s32 %s47, 1
      %p51 = scmp.eq.s32.totalorder %s13, 1
      %p52 = scmp.ne.s32.totalorder %s47, %s49
      %p53 = scmp.eq.s32.totalorder %s13, 0
      %p54 = por %p52, %p53
      %p55 = scmp.ne.s32.totalorder %s47, %s49
      %p56 = scmp.eq.s32.totalorder %s18, 1
      %p57 = por %p55, %p56
      %p58 = scmp.ne.s32.totalorder %s49, %s50
      %p59 = scmp.eq.s32.totalorder %s18, 0
      %p60 = por %p58, %p59
      %p61 = scmp.ne.s32.totalorder %s49, %s50
      %p62 = scmp.eq.s32.totalorder %s19, 1
      %p63 = por %p61, %p62
      %p65 = scmp.ne.s32.totalorder %s50, %s64
      %p66 = scmp.eq.s32.totalorder %s19, 0
      %p67 = por %p65, %p66
      %s69 = sadd.s32 %s68, 1
      %p72 = scmp.eq.s32.totalorder %s13, 1
      %p73 = scmp.ne.s32.totalorder %s68, %s70
      %p74 = scmp.eq.s32.totalorder %s13, 0
      %p75 = por %p73, %p74
      %p76 = scmp.ne.s32.totalorder %s68, %s70
      %p77 = scmp.eq.s32.totalorder %s18, 1
      %p78 = por %p76, %p77
      %p79 = scmp.ne.s32.totalorder %s70, %s71
      %p80 = scmp.eq.s32.totalorder %s18, 0
      %p81 = por %p79, %p80
      %p82 = scmp.ne.s32.totalorder %s70, %s71
      %p83 = scmp.eq.s32.totalorder %s19, 1
      %p84 = por %p82, %p83
      %p86 = scmp.ne.s32.totalorder %s71, %s85
      %p87 = scmp.eq.s32.totalorder %s19, 0
      %p88 = por %p86, %p87
      %s90 = sadd.s32 %s89, 1
      %p93 = scmp.eq.s32.totalorder %s13, 1
      %p94 = scmp.ne.s32.totalorder %s89, %s91
      %p95 = scmp.eq.s32.totalorder %s13, 0
      %p96 = por %p94, %p95
      %p97 = scmp.ne.s32.totalorder %s89, %s91
      %p98 = scmp.eq.s32.totalorder %s18, 1
      %p99 = por %p97, %p98
      %p100 = scmp.ne.s32.totalorder %s91, %s92
      %p101 = scmp.eq.s32.totalorder %s18, 0
      %p102 = por %p100, %p101
      %p103 = scmp.ne.s32.totalorder %s91, %s92
      %p104 = scmp.eq.s32.totalorder %s19, 1
      %p105 = por %p103, %p104
      %p107 = scmp.ne.s32.totalorder %s92, %s106
      %p108 = scmp.eq.s32.totalorder %s19, 0
      %p109 = por %p107, %p108
      %s111 = sadd.s32 %s110, 1
      %p114 = scmp.eq.s32.totalorder %s13, 1
      %p115 = scmp.ne.s32.totalorder %s110, %s112
      %p116 = scmp.eq.s32.totalorder %s13, 0
      %p117 = por %p115, %p116
      %p118 = scmp.ne.s32.totalorder %s110, %s112
      %p119 = scmp.eq.s32.totalorder %s18, 1
      %p120 = por %p118, %p119
      %p121 = scmp.ne.s32.totalorder %s112, %s113
      %p122 = scmp.eq.s32.totalorder %s18, 0
      %p123 = por %p121, %p122
      %p124 = scmp.ne.s32.totalorder %s112, %s113
      %p125 = scmp.eq.s32.totalorder %s19, 1
      %p126 = por %p124, %p125
      %p128 = scmp.ne.s32.totalorder %s113, %s127
      %p129 = scmp.eq.s32.totalorder %s19, 0
      %p130 = por %p128, %p129
      %s132 = sadd.s32 %s131, 1
      %p135 = scmp.eq.s32.totalorder %s13, 1
      %p136 = scmp.ne.s32.totalorder %s131, %s133
      %p137 = scmp.eq.s32.totalorder %s13, 0
      %p138 = por %p136, %p137
      %p139 = scmp.ne.s32.totalorder %s131, %s133
      %p140 = scmp.eq.s32.totalorder %s18, 1
      %p141 = por %p139, %p140
      %p142 = scmp.ne.s32.totalorder %s133, %s134
      %p143 = scmp.eq.s32.totalorder %s18, 0
      %p144 = por %p142, %p143
      %p145 = scmp.ne.s32.totalorder %s133, %s134
      %p146 = scmp.eq.s32.totalorder %s19, 1
      %p147 = por %p145, %p146
      %p149 = scmp.ne.s32.totalorder %s134, %s148
      %p150 = scmp.eq.s32.totalorder %s19, 0
      %p151 = por %p149, %p150
      %s152 = ssub.s32 %s13, %s20
      %p153 = scmp.eq.s32.totalorder %s152, 0
      %s155 = sadd.s32 %s154, 1
      %s156 = scalar_select %p153, %s154, %s155
      %p159 = pneg %p153
      %p160 = scmp.eq.s32.totalorder %s13, 1
      %p161 = por %p159, %p160
      %p162 = scmp.ne.s32.totalorder %s154, %s157
      %p163 = scmp.eq.s32.totalorder %s13, 0
      %p164 = por %p162, %p163
      %p165 = scmp.ne.s32.totalorder %s154, %s157
      %p166 = scmp.eq.s32.totalorder %s18, 1
      %p167 = por %p165, %p166
      %p168 = scmp.ne.s32.totalorder %s157, %s158
      %p169 = scmp.eq.s32.totalorder %s18, 0
      %p170 = por %p168, %p169
      %p171 = scmp.ne.s32.totalorder %s157, %s158
      %p172 = scmp.eq.s32.totalorder %s19, 1
      %p173 = por %p171, %p172
      %p175 = scmp.ne.s32.totalorder %s158, %s174
      %p176 = scmp.eq.s32.totalorder %s19, 0
      %p177 = por %p175, %p176
      %p178 = scmp.le.s32.totalorder 1, %s13
      %p179 = scmp.lt.s32.totalorder %s13, 3
      %p180 = pnand %p178, %p179
      %p181 = pneg %p180
      // Predicated region
      $region9: #{cross_transformer_encoder.8} parent=5 // pred_check
        _
      $region10: #{cross_transformer_encoder.8} parent=5 // pred_check_branch
        %183 = sbr.rel (%p180) target = $region12
      $region11: #{cross_transformer_encoder.8} parent=5 // pred_region
        %s184 = ssub.s32 %s13, 1
        // Predicated region
        $region13: #{cross_transformer_encoder.8} parent=11 // pred_check
          %p185 = pneg %p60
        $region14: #{cross_transformer_encoder.8} parent=11 // pred_check_branch
          %187 = sbr.rel (%p185) target = $region16
        $region15: #{cross_transformer_encoder.8} parent=11 // pred_region
          _
        $region16: #{cross_transformer_encoder.8} parent=11 // pred_fallthru
          _
        // Predicated region
        $region17: #{cross_transformer_encoder.8} parent=11 // pred_check
          %p188 = pneg %p81
        $region18: #{cross_transformer_encoder.8} parent=11 // pred_check_branch
          %190 = sbr.rel (%p188) target = $region20
        $region19: #{cross_transformer_encoder.8} parent=11 // pred_region
          _
        $region20: #{cross_transformer_encoder.8} parent=11 // pred_fallthru
          _
        // Predicated region
        $region21: #{cross_transformer_encoder.8} parent=11 // pred_check
          %p191 = pneg %p102
        $region22: #{cross_transformer_encoder.8} parent=11 // pred_check_branch
          %193 = sbr.rel (%p191) target = $region24
        $region23: #{cross_transformer_encoder.8} parent=11 // pred_region
          _
        $region24: #{cross_transformer_encoder.8} parent=11 // pred_fallthru
          _
        // Predicated region
        $region25: #{cross_transformer_encoder.8} parent=11 // pred_check
          %p194 = pneg %p123
        $region26: #{cross_transformer_encoder.8} parent=11 // pred_check_branch
          %196 = sbr.rel (%p194) target = $region28
        $region27: #{cross_transformer_encoder.8} parent=11 // pred_region
          _
        $region28: #{cross_transformer_encoder.8} parent=11 // pred_fallthru
          _
        // Predicated region
        $region29: #{cross_transformer_encoder.8} parent=11 // pred_check
          %p197 = pneg %p144
        $region30: #{cross_transformer_encoder.8} parent=11 // pred_check_branch
          %199 = sbr.rel (%p197) target = $region32
        $region31: #{cross_transformer_encoder.8} parent=11 // pred_region
          %s201 = ssub.s32 16, 16
          %202 = vsyncadd [#allocation3], %s201
          %s204 = sshll.u32 [#allocation2], 4
          %s205 = int_to_ptr.vmem [resolvable:$true] %s204
          %207 = dma.hbm_to_vmem [thread:$0]  %s5, 16, %s205, [#allocation3]
        $region32: #{cross_transformer_encoder.8} parent=11 // pred_fallthru
          _
      $region12: #{cross_transformer_encoder.8} parent=5 // pred_fallthru
        _
      %p208 = scmp.lt.s32.totalorder %s13, 2
      // Predicated region
      $region33: #{cross_transformer_encoder.8} parent=5 // pred_check
        %p209 = pneg %p208
      $region34: #{cross_transformer_encoder.8} parent=5 // pred_check_branch
        %211 = sbr.rel (%p209) target = $region36
      $region35: #{cross_transformer_encoder.8} parent=5 // pred_region
        // Predicated region
        $region37: #{cross_transformer_encoder.8} parent=35 // pred_check
          %p212 = pneg %p33
        $region38: #{cross_transformer_encoder.8} parent=35 // pred_check_branch
          %214 = sbr.rel (%p212) target = $region40
        $region39: #{cross_transformer_encoder.8} parent=35 // pred_region
          %p215 = scmp.lt.s32.totalorder %s13, 1
          %s216 = scalar_select %p215, %s13, 1
          %s217 = smul.addr %s216, 8
          %s218 = scalar_lea.vmem %s0, %s217
        $region40: #{cross_transformer_encoder.8} parent=35 // pred_fallthru
          _
      $region36: #{cross_transformer_encoder.8} parent=5 // pred_fallthru
        _
      %p219 = scmp.le.s32.totalorder 1, %s13
      %p220 = scmp.lt.s32.totalorder %s13, 3
      %p221 = pnand %p219, %p220
      %p222 = pneg %p221
      // Predicated region
      $region41: #{cross_transformer_encoder.8} parent=5 // pred_check
        _
      $region42: #{cross_transformer_encoder.8} parent=5 // pred_check_branch
        %224 = sbr.rel (%p221) target = $region44
      $region43: #{cross_transformer_encoder.8} parent=5 // pred_region
        %s225 = ssub.s32 %s13, 1
        // Predicated region
        $region45: #{cross_transformer_encoder.8} parent=43 // pred_check
          %p226 = pneg %p144
        $region46: #{cross_transformer_encoder.8} parent=43 // pred_check_branch
          %228 = sbr.rel (%p226) target = $region48
        $region47: #{cross_transformer_encoder.8} parent=43 // pred_region
          %229 = dma.done [#allocation3], 16
        $region48: #{cross_transformer_encoder.8} parent=43 // pred_fallthru
          _
        %p230 = scmp.lt.s32.totalorder %s18, 1
        %s231 = scalar_select %p230, %s18, 1
        %s232 = smul.addr %s231, 8
        %s233 = scalar_lea.vmem %s0, %s232
        %p234 = pneg %p39
        %p235 = pneg %p36
        %p236 = pneg %p60
        %p237 = pneg %p57
        %p238 = pneg %p81
        %p239 = pneg %p78
        %p240 = pneg %p102
        %p241 = pneg %p99
        %p242 = pneg %p123
        %p243 = pneg %p120
        %p244 = pneg %p144
        %p245 = pneg %p141
        %p246 = pneg %p170
        %p247 = pneg %p167
        %p248 = scmp.lt.s32.totalorder %s18, 1
        %s249 = scalar_select %p248, %s18, 1
        %s250 = smul.addr %s249, 8
        %s251 = scalar_lea.vmem %s6, %s250
        %p252 = scmp.lt.s32.totalorder %s18, 1
        %s253 = scalar_select %p252, %s18, 1
        %s254 = smul.addr %s253, 8
        %s255 = scalar_lea.vmem %s0, %s254
        %p256 = scmp.lt.s32.totalorder %s18, 1
        %s257 = scalar_select %p256, %s18, 1
        %s258 = smul.addr %s257, 8
        %s259 = scalar_lea.vmem %s6, %s258
        %v261 = vld [vmem:[%s255] sm:$0xff]
        %v262 = vld [vmem:[%s1] sm:$0x3]
        %263 = vadd.xlane.f32.xlu0 %v261
        %v264 = vpop.xlane.xlu0 %263
        %v265 = vrcp.pop 128.0
        %v266 = vmul.f32 %v264, %v265
        %v267 = vsub.f32 %v261, %v266
        %v268 = vmul.f32 %v267, %v267
        %269 = vadd.xlane.f32.xlu0 %v268
        %v270 = vpop.xlane.xlu0 %269
        %v271 = vmul.f32 %v270, %v265
        %v272 = vadd.f32 %v271, 1e-05
        %v273 = vrsqrt.pop %v272
        %v274 = vmul.f32 %v267, %v273
        %v275 = vlaneseq
        %v276 = vshrl.u32 %v275, 7
        %v277 = vsub.s32 0, %v276
        %v278 = vrot.slane %v262, %v277
        %v279 = vmul.f32 %v274, %v278
        %v280 = vlaneseq
        %v281 = vshrl.u32 %v280, 7
        %v282 = vsub.s32 1, %v281
        %v283 = vrot.slane %v262, %v282
        %v284 = vadd.f32 %v279, %v283
        %v285 = vld [vmem:[%s2] sm:$0xff]
        %v286 = vld [vmem:[%s2 + $0x8] sm:$0xff]
        %v287 = vld [vmem:[%s2 + $0x10] sm:$0xff]
        %v288 = vld [vmem:[%s2 + $0x18] sm:$0xff]
        %v289 = vld [vmem:[%s2 + $0x20] sm:$0xff]
        %v290 = vld [vmem:[%s2 + $0x28] sm:$0xff]
        %v291 = vld [vmem:[%s2 + $0x30] sm:$0xff]
        %v292 = vld [vmem:[%s2 + $0x38] sm:$0xff]
        %v293 = vld [vmem:[%s2 + $0x40] sm:$0xff]
        %v294 = vld [vmem:[%s2 + $0x48] sm:$0xff]
        %v295 = vld [vmem:[%s2 + $0x50] sm:$0xff]
        %v296 = vld [vmem:[%s2 + $0x58] sm:$0xff]
        %v297 = vld [vmem:[%s2 + $0x60] sm:$0xff]
        %v298 = vld [vmem:[%s2 + $0x68] sm:$0xff]
        %v299 = vld [vmem:[%s2 + $0x70] sm:$0xff]
        %v300 = vld [vmem:[%s2 + $0x78] sm:$0xff]
        %v301 = vpack.c.bf16 %v284, %v284
        %v302 = vld [vmem:[%s3] sm:$0x3]
        %v304 = vlaneseq
        %v305 = vshrl.u32 %v304, 7
        %v306 = vsub.s32 0, %v305
        %v307 = vrot.slane %v302, %v306
        %v308 = vlaneseq
        %v309 = vshrl.u32 %v308, 7
        %v310 = vsub.s32 1, %v309
        %v311 = vrot.slane %v302, %v310
        %v330 = vunpack.c.l.b16 %v285
        %v331 = vunpack.c.h.b16 %v285
        %v332 = vunpack.c.l.b16 %v286
        %v333 = vunpack.c.h.b16 %v286
        %v334 = vunpack.c.l.b16 %v287
        %v335 = vunpack.c.h.b16 %v287
        %v336 = vunpack.c.l.b16 %v288
        %v337 = vunpack.c.h.b16 %v288
        %v338 = vunpack.c.l.b16 %v289
        %v339 = vunpack.c.h.b16 %v289
        %v340 = vunpack.c.l.b16 %v290
        %v341 = vunpack.c.h.b16 %v290
        %v342 = vunpack.c.l.b16 %v291
        %v343 = vunpack.c.h.b16 %v291
        %v344 = vunpack.c.l.b16 %v292
        %v345 = vunpack.c.h.b16 %v292
        %v346 = vunpack.c.l.b16 %v293
        %v347 = vunpack.c.h.b16 %v293
        %v348 = vunpack.c.l.b16 %v294
        %v349 = vunpack.c.h.b16 %v294
        %v350 = vunpack.c.l.b16 %v295
        %v351 = vunpack.c.h.b16 %v295
        %v352 = vunpack.c.l.b16 %v296
        %v353 = vunpack.c.h.b16 %v296
        %v354 = vunpack.c.l.b16 %v297
        %v355 = vunpack.c.h.b16 %v297
        %v356 = vunpack.c.l.b16 %v298
        %v357 = vunpack.c.h.b16 %v298
        %v358 = vunpack.c.l.b16 %v299
        %v359 = vunpack.c.h.b16 %v299
        %v360 = vunpack.c.l.b16 %v300
        %v361 = vunpack.c.h.b16 %v300
        %v362 = vpack.c.b16 %v332, %v330
        %v363 = vpack.c.b16 %v333, %v331
        %v364 = vpack.c.b16 %v336, %v334
        %v365 = vpack.c.b16 %v337, %v335
        %v366 = vpack.c.b16 %v340, %v338
        %v367 = vpack.c.b16 %v341, %v339
        %v368 = vpack.c.b16 %v344, %v342
        %v369 = vpack.c.b16 %v345, %v343
        %v370 = vpack.c.b16 %v348, %v346
        %v371 = vpack.c.b16 %v349, %v347
        %v372 = vpack.c.b16 %v352, %v350
        %v373 = vpack.c.b16 %v353, %v351
        %v374 = vpack.c.b16 %v356, %v354
        %v375 = vpack.c.b16 %v357, %v355
        %v376 = vpack.c.b16 %v360, %v358
        %v377 = vpack.c.b16 %v361, %v359
        %394 = vmatprep.subr.bf16.mxu0 %v363
        %395 = vmatpush1.bf16.msra.mxu0 %v362
        %396 = vmatprep.subr.bf16.mxu0 %v365
        %397 = vmatpush1.bf16.msra.mxu0 %v364
        %398 = vmatprep.subr.bf16.mxu0 %v367
        %399 = vmatpush1.bf16.msra.mxu0 %v366
        %400 = vmatprep.subr.bf16.mxu0 %v369
        %401 = vmatpush1.bf16.msra.mxu0 %v368
        %402 = vmatprep.subr.bf16.mxu0 %v371
        %403 = vmatpush1.bf16.msra.mxu0 %v370
        %404 = vmatprep.subr.bf16.mxu0 %v373
        %405 = vmatpush1.bf16.msra.mxu0 %v372
        %406 = vmatprep.subr.bf16.mxu0 %v375
        %407 = vmatpush1.bf16.msra.mxu0 %v374
        %408 = vmatprep.subr.bf16.mxu0 %v377
        %409 = vmatpush1.bf16.msra.mxu0 %v376
        %410 = vmatprep.subr.bf16.mxu0 0
        %411 = vmatpush1.bf16.msra.mxu0 0
        %412 = vmatprep.subr.bf16.mxu0 0
        %413 = vmatpush1.bf16.msra.mxu0 0
        %414 = vmatprep.subr.bf16.mxu0 0
        %415 = vmatpush1.bf16.msra.mxu0 0
        %416 = vmatprep.subr.bf16.mxu0 0
        %417 = vmatpush1.bf16.msra.mxu0 0
        %418 = vmatprep.subr.bf16.mxu0 0
        %419 = vmatpush1.bf16.msra.mxu0 0
        %420 = vmatprep.subr.bf16.mxu0 0
        %421 = vmatpush1.bf16.msra.mxu0 0
        %422 = vmatprep.subr.bf16.mxu0 0
        %423 = vmatpush1.bf16.msra.mxu0 0
        %424 = vmatprep.subr.bf16.mxu0 0
        %425 = vmatpush1.bf16.msra.mxu0 0
        %426 = vmatprep.mubr.bf16.mxu0 0
        %427 = vmatmul.mubr.bf16.gmra.mrb[0].mxu0 %v301
        %v428 = vpop.f32.mrb[0].mxu0
        %v429 = vadd.f32 %v307, %v428
        %v430 = vpop.f32.mrb[0].mxu0
        %v431 = vadd.f32 %v311, %v430
        %v432 = vpop.f32.mrb[0].mxu0
        %v433 = vpop.f32.mrb[0].mxu0
        %434 = vdwg.mxu0
        %v435 = vmul.f32 %v429, 0.5
        %v436 = vmul.f32 %v431, 0.5
        %v437 = vmul.f32 %v429, 0.044715
        %v438 = vmul.f32 %v431, 0.044715
        %v439 = vmul.f32 %v437, %v429
        %v440 = vmul.f32 %v438, %v431
        %v441 = vmul.f32 %v439, %v429
        %v442 = vmul.f32 %v440, %v431
        %v443 = vadd.f32 %v429, %v441
        %v444 = vadd.f32 %v431, %v442
        %v445 = vmul.f32 %v443, 0.7978846
        %v446 = vmul.f32 %v444, 0.7978846
        %v447 = vtanh.pop %v445
        %v448 = vtanh.pop %v446
        %v449 = vadd.f32 %v447, 1.0
        %v450 = vadd.f32 %v448, 1.0
        %v451 = vmul.f32 %v435, %v449
        %v452 = vmul.f32 %v436, %v450
        %v453 = vld [vmem:[%s4] sm:$0xf]
        %v454 = vld [vmem:[%s4 + $0x4] sm:$0xf]
        %v455 = vld [vmem:[%s4 + $0x8] sm:$0xf]
        %v456 = vld [vmem:[%s4 + $0xc] sm:$0xf]
        %v457 = vld [vmem:[%s4 + $0x10] sm:$0xf]
        %v458 = vld [vmem:[%s4 + $0x14] sm:$0xf]
        %v459 = vld [vmem:[%s4 + $0x18] sm:$0xf]
        %v460 = vld [vmem:[%s4 + $0x1c] sm:$0xf]
        %v461 = vld [vmem:[%s4 + $0x20] sm:$0xf]
        %v462 = vld [vmem:[%s4 + $0x24] sm:$0xf]
        %v463 = vld [vmem:[%s4 + $0x28] sm:$0xf]
        %v464 = vld [vmem:[%s4 + $0x2c] sm:$0xf]
        %v465 = vld [vmem:[%s4 + $0x30] sm:$0xf]
        %v466 = vld [vmem:[%s4 + $0x34] sm:$0xf]
        %v467 = vld [vmem:[%s4 + $0x38] sm:$0xf]
        %v468 = vld [vmem:[%s4 + $0x3c] sm:$0xf]
        %v469 = vld [vmem:[%s4 + $0x40] sm:$0xf]
        %v470 = vld [vmem:[%s4 + $0x44] sm:$0xf]
        %v471 = vld [vmem:[%s4 + $0x48] sm:$0xf]
        %v472 = vld [vmem:[%s4 + $0x4c] sm:$0xf]
        %v473 = vld [vmem:[%s4 + $0x50] sm:$0xf]
        %v474 = vld [vmem:[%s4 + $0x54] sm:$0xf]
        %v475 = vld [vmem:[%s4 + $0x58] sm:$0xf]
        %v476 = vld [vmem:[%s4 + $0x5c] sm:$0xf]
        %v477 = vld [vmem:[%s4 + $0x60] sm:$0xf]
        %v478 = vld [vmem:[%s4 + $0x64] sm:$0xf]
        %v479 = vld [vmem:[%s4 + $0x68] sm:$0xf]
        %v480 = vld [vmem:[%s4 + $0x6c] sm:$0xf]
        %v481 = vld [vmem:[%s4 + $0x70] sm:$0xf]
        %v482 = vld [vmem:[%s4 + $0x74] sm:$0xf]
        %v483 = vld [vmem:[%s4 + $0x78] sm:$0xf]
        %v484 = vld [vmem:[%s4 + $0x7c] sm:$0xf]
        %v485 = vpack.c.bf16 %v451, %v451
        %v486 = vpack.c.bf16 %v452, %v452
        %v487 = vld [vmem:[#allocation2] sm:$0x1]
        %v489 = vlaneseq
        %v490 = vshrl.u32 %v489, 7
        %v491 = vsub.s32 0, %v490
        %v492 = vrot.slane %v487, %v491
        %v526 = vunpack.c.l.b16 %v453
        %v527 = vunpack.c.l.b16 %v454
        %v528 = vunpack.c.l.b16 %v455
        %v529 = vunpack.c.l.b16 %v456
        %v530 = vunpack.c.l.b16 %v457
        %v531 = vunpack.c.l.b16 %v458
        %v532 = vunpack.c.l.b16 %v459
        %v533 = vunpack.c.l.b16 %v460
        %v534 = vunpack.c.l.b16 %v461
        %v535 = vunpack.c.l.b16 %v462
        %v536 = vunpack.c.l.b16 %v463
        %v537 = vunpack.c.l.b16 %v464
        %v538 = vunpack.c.l.b16 %v465
        %v539 = vunpack.c.l.b16 %v466
        %v540 = vunpack.c.l.b16 %v467
        %v541 = vunpack.c.l.b16 %v468
        %v542 = vunpack.c.l.b16 %v469
        %v543 = vunpack.c.l.b16 %v470
        %v544 = vunpack.c.l.b16 %v471
        %v545 = vunpack.c.l.b16 %v472
        %v546 = vunpack.c.l.b16 %v473
        %v547 = vunpack.c.l.b16 %v474
        %v548 = vunpack.c.l.b16 %v475
        %v549 = vunpack.c.l.b16 %v476
        %v550 = vunpack.c.l.b16 %v477
        %v551 = vunpack.c.l.b16 %v478
        %v552 = vunpack.c.l.b16 %v479
        %v553 = vunpack.c.l.b16 %v480
        %v554 = vunpack.c.l.b16 %v481
        %v555 = vunpack.c.l.b16 %v482
        %v556 = vunpack.c.l.b16 %v483
        %v557 = vunpack.c.l.b16 %v484
        %v558 = vpack.c.b16 %v527, %v526
        %v559 = vpack.c.b16 %v529, %v528
        %v560 = vpack.c.b16 %v531, %v530
        %v561 = vpack.c.b16 %v533, %v532
        %v562 = vpack.c.b16 %v535, %v534
        %v563 = vpack.c.b16 %v537, %v536
        %v564 = vpack.c.b16 %v539, %v538
        %v565 = vpack.c.b16 %v541, %v540
        %v566 = vpack.c.b16 %v543, %v542
        %v567 = vpack.c.b16 %v545, %v544
        %v568 = vpack.c.b16 %v547, %v546
        %v569 = vpack.c.b16 %v549, %v548
        %v570 = vpack.c.b16 %v551, %v550
        %v571 = vpack.c.b16 %v553, %v552
        %v572 = vpack.c.b16 %v555, %v554
        %v573 = vpack.c.b16 %v557, %v556
        %590 = vmatprep.subr.bf16.mxu0 0
        %591 = vmatpush1.bf16.msra.mxu0 %v558
        %592 = vmatprep.subr.bf16.mxu0 0
        %593 = vmatpush1.bf16.msra.mxu0 %v559
        %594 = vmatprep.subr.bf16.mxu0 0
        %595 = vmatpush1.bf16.msra.mxu0 %v560
        %596 = vmatprep.subr.bf16.mxu0 0
        %597 = vmatpush1.bf16.msra.mxu0 %v561
        %598 = vmatprep.subr.bf16.mxu0 0
        %599 = vmatpush1.bf16.msra.mxu0 %v562
        %600 = vmatprep.subr.bf16.mxu0 0
        %601 = vmatpush1.bf16.msra.mxu0 %v563
        %602 = vmatprep.subr.bf16.mxu0 0
        %603 = vmatpush1.bf16.msra.mxu0 %v564
        %604 = vmatprep.subr.bf16.mxu0 0
        %605 = vmatpush1.bf16.msra.mxu0 %v565
        %606 = vmatprep.subr.bf16.mxu0 0
        %607 = vmatpush1.bf16.msra.mxu0 %v566
        %608 = vmatprep.subr.bf16.mxu0 0
        %609 = vmatpush1.bf16.msra.mxu0 %v567
        %610 = vmatprep.subr.bf16.mxu0 0
        %611 = vmatpush1.bf16.msra.mxu0 %v568
        %612 = vmatprep.subr.bf16.mxu0 0
        %613 = vmatpush1.bf16.msra.mxu0 %v569
        %614 = vmatprep.subr.bf16.mxu0 0
        %615 = vmatpush1.bf16.msra.mxu0 %v570
        %616 = vmatprep.subr.bf16.mxu0 0
        %617 = vmatpush1.bf16.msra.mxu0 %v571
        %618 = vmatprep.subr.bf16.mxu0 0
        %619 = vmatpush1.bf16.msra.mxu0 %v572
        %620 = vmatprep.subr.bf16.mxu0 0
        %621 = vmatpush1.bf16.msra.mxu0 %v573
        %622 = vmatprep.mubr.bf16.mxu0 %v486
        %623 = vmatmul.mubr.bf16.gmra.mrb[0].mxu0 %v485
        %v624 = vpop.f32.mrb[0].mxu0
        %v625 = vadd.f32 %v492, %v624
        %v626 = vpop.f32.mrb[0].mxu0
        %v627 = vpop.f32.mrb[0].mxu0
        %v628 = vpop.f32.mrb[0].mxu0
        %629 = vdwg.mxu0
        %v630 = vadd.f32 %v625, %v261
        %631 = vst [vmem:[%s259] sm:$0xff] %v630
        %p632 = scmp.lt.s32.totalorder %s18, 1
        %s633 = scalar_select %p632, %s18, 1
        %s634 = smul.addr %s633, 8
        %s635 = scalar_lea.vmem %s6, %s634
        // Predicated region
        $region49: #{cross_transformer_encoder.8} parent=43 // pred_check
          %p636 = pneg %p167
        $region50: #{cross_transformer_encoder.8} parent=43 // pred_check_branch
          %638 = sbr.rel (%p636) target = $region52
        $region51: #{cross_transformer_encoder.8} parent=43 // pred_region
          _
        $region52: #{cross_transformer_encoder.8} parent=43 // pred_fallthru
          _
      $region44: #{cross_transformer_encoder.8} parent=5 // pred_fallthru
        _
      %p639 = scmp.le.s32.totalorder 2, %s13
      // Predicated region
      $region53: #{cross_transformer_encoder.8} parent=5 // pred_check
        %p640 = pneg %p639
      $region54: #{cross_transformer_encoder.8} parent=5 // pred_check_branch
        %642 = sbr.rel (%p640) target = $region56
      $region55: #{cross_transformer_encoder.8} parent=5 // pred_region
        %s643 = ssub.s32 %s13, 2
        // Predicated region
        $region57: #{cross_transformer_encoder.8} parent=55 // pred_check
          %p644 = pneg %p173
        $region58: #{cross_transformer_encoder.8} parent=55 // pred_check_branch
          %646 = sbr.rel (%p644) target = $region60
        $region59: #{cross_transformer_encoder.8} parent=55 // pred_region
          %p647 = scmp.lt.s32.totalorder %s19, 1
          %s648 = scalar_select %p647, %s19, 1
          %s649 = smul.addr %s648, 8
          %s650 = scalar_lea.vmem %s6, %s649
        $region60: #{cross_transformer_encoder.8} parent=55 // pred_fallthru
          _
      $region56: #{cross_transformer_encoder.8} parent=5 // pred_fallthru
        _
    $region6: #{cross_transformer_encoder.8} parent=1 // loop_footer
      %s17 = sadd.s32 1, %s13
    $region7: #{cross_transformer_encoder.8} parent=1 // loop_footer_branch
      %12 = sbr.rel target = $region3
    $region8: #{cross_transformer_encoder.8} parent=1 // loop_exit
      _
    %651 = vsyncpa [#allocation3], 1
    %s652 = scalar_lea.sflag [#allocation3], 1
    %653 = vsyncpa %s652, 1

// kernel: cross_transformer_encoder.9
$region0: #{cross_transformer_encoder.9}
  #allocation0 [shape = 'u32[]', space=smem, size = 0x4, offset = 0x4, fixed_abs, tag = 'smem constant byte address 0x4 - core index']
  #allocation1 [shape = 'u32[144,128]{1,0:T(1,128)}', space=vmem, size = 0x12000, scoped, tag = 'internal scratch']
  %s0 = inlined_call_operand.vmem [shape: f32[32,128], index: 0, kind: input, shape index: {}]
  %s1 = inlined_call_operand.vmem [shape: f32[2,128], index: 1, kind: input, shape index: {}]
  %s2 = inlined_call_operand.vmem [shape: f32[2,128], index: 2, kind: input, shape index: {}]
  %s3 = inlined_call_operand.vmem [shape: bf16[128,128], index: 3, kind: input, shape index: {}]
  %s4 = inlined_call_operand.vmem [shape: bf16[128,128], index: 4, kind: input, shape index: {}]
  %s5 = inlined_call_operand.vmem [shape: bf16[32,128], index: 5, kind: output, shape index: {0}]
  %s6 = inlined_call_operand.vmem [shape: bf16[32,128], index: 6, kind: output, shape index: {1}]
  %7 = xla_tuple %s5, %s6
  %s8 = sld [smem:[#allocation0]]
  $region61: #{cross_transformer_encoder.9} parent=0
    _
  %s10 = ssub.s32 1, %s8
  %s11 = scalar_select 0, %s10, %s8
  loop: start=0, step=1, limit=4
  $region2: #{cross_transformer_encoder.9} parent=0 // loop_pre_header
    _
  $region3: #{cross_transformer_encoder.9} parent=0 // loop_header
    %s13 = sphi 0, %s17
    %p14 = scmp.ge.s32.totalorder %s13, 4
    %s23 = sphi 0, %s25
    %s26 = sphi 0, %s23
    %s27 = sphi 0, %s26
    %s43 = sphi 0, %s27
    %s47 = sphi 0, %s47
    %s49 = sphi 0, %s47
    %s50 = sphi 0, %s49
    %s64 = sphi 0, %s50
    %s68 = sphi 0, %s68
    %s70 = sphi 0, %s68
    %s71 = sphi 0, %s70
    %s85 = sphi 0, %s71
    %s89 = sphi 0, %s89
    %s91 = sphi 0, %s89
    %s92 = sphi 0, %s91
    %s106 = sphi 0, %s92
    %s110 = sphi 0, %s110
    %s112 = sphi 0, %s110
    %s113 = sphi 0, %s112
    %s127 = sphi 0, %s113
    %s133 = sphi 0, %s135
    %s136 = sphi 0, %s133
    %s137 = sphi 0, %s136
    %s153 = sphi 0, %s137
    %s159 = sphi 0, %s161
    %s162 = sphi 0, %s159
    %s163 = sphi 0, %s162
    %s179 = sphi 0, %s163
  $region4: #{cross_transformer_encoder.9} parent=0 // loop_header_branch
    %16 = sbr.rel (%p14) target = $region8
  $region5: #{cross_transformer_encoder.9} parent=0 // loop_body
    %s18 = ssub.s32 %s13, 1
    %s19 = ssub.s32 %s13, 2
    %s20 = sadd.s32 %s13, 1
    %s21 = ssub.s32 %s13, %s20
    %p22 = scmp.eq.s32.totalorder %s21, 0
    %s24 = sadd.s32 %s23, 1
    %s25 = scalar_select %p22, %s23, %s24
    %p28 = pneg %p22
    %p29 = scmp.eq.s32.totalorder %s13, 1
    %p30 = por %p28, %p29
    %p31 = scmp.ne.s32.totalorder %s23, %s26
    %p32 = scmp.eq.s32.totalorder %s13, 0
    %p33 = por %p31, %p32
    %p34 = scmp.ne.s32.totalorder %s23, %s26
    %p35 = scmp.eq.s32.totalorder %s18, 1
    %p36 = por %p34, %p35
    %p37 = scmp.ne.s32.totalorder %s26, %s27
    %p38 = scmp.eq.s32.totalorder %s18, 0
    %p39 = por %p37, %p38
    %p40 = scmp.ne.s32.totalorder %s26, %s27
    %p41 = scmp.eq.s32.totalorder %s19, 1
    %p42 = por %p40, %p41
    %p44 = scmp.ne.s32.totalorder %s27, %s43
    %p45 = scmp.eq.s32.totalorder %s19, 0
    %p46 = por %p44, %p45
    %s48 = sadd.s32 %s47, 1
    %p51 = scmp.eq.s32.totalorder %s13, 1
    %p52 = scmp.ne.s32.totalorder %s47, %s49
    %p53 = scmp.eq.s32.totalorder %s13, 0
    %p54 = por %p52, %p53
    %p55 = scmp.ne.s32.totalorder %s47, %s49
    %p56 = scmp.eq.s32.totalorder %s18, 1
    %p57 = por %p55, %p56
    %p58 = scmp.ne.s32.totalorder %s49, %s50
    %p59 = scmp.eq.s32.totalorder %s18, 0
    %p60 = por %p58, %p59
    %p61 = scmp.ne.s32.totalorder %s49, %s50
    %p62 = scmp.eq.s32.totalorder %s19, 1
    %p63 = por %p61, %p62
    %p65 = scmp.ne.s32.totalorder %s50, %s64
    %p66 = scmp.eq.s32.totalorder %s19, 0
    %p67 = por %p65, %p66
    %s69 = sadd.s32 %s68, 1
    %p72 = scmp.eq.s32.totalorder %s13, 1
    %p73 = scmp.ne.s32.totalorder %s68, %s70
    %p74 = scmp.eq.s32.totalorder %s13, 0
    %p75 = por %p73, %p74
    %p76 = scmp.ne.s32.totalorder %s68, %s70
    %p77 = scmp.eq.s32.totalorder %s18, 1
    %p78 = por %p76, %p77
    %p79 = scmp.ne.s32.totalorder %s70, %s71
    %p80 = scmp.eq.s32.totalorder %s18, 0
    %p81 = por %p79, %p80
    %p82 = scmp.ne.s32.totalorder %s70, %s71
    %p83 = scmp.eq.s32.totalorder %s19, 1
    %p84 = por %p82, %p83
    %p86 = scmp.ne.s32.totalorder %s71, %s85
    %p87 = scmp.eq.s32.totalorder %s19, 0
    %p88 = por %p86, %p87
    %s90 = sadd.s32 %s89, 1
    %p93 = scmp.eq.s32.totalorder %s13, 1
    %p94 = scmp.ne.s32.totalorder %s89, %s91
    %p95 = scmp.eq.s32.totalorder %s13, 0
    %p96 = por %p94, %p95
    %p97 = scmp.ne.s32.totalorder %s89, %s91
    %p98 = scmp.eq.s32.totalorder %s18, 1
    %p99 = por %p97, %p98
    %p100 = scmp.ne.s32.totalorder %s91, %s92
    %p101 = scmp.eq.s32.totalorder %s18, 0
    %p102 = por %p100, %p101
    %p103 = scmp.ne.s32.totalorder %s91, %s92
    %p104 = scmp.eq.s32.totalorder %s19, 1
    %p105 = por %p103, %p104
    %p107 = scmp.ne.s32.totalorder %s92, %s106
    %p108 = scmp.eq.s32.totalorder %s19, 0
    %p109 = por %p107, %p108
    %s111 = sadd.s32 %s110, 1
    %p114 = scmp.eq.s32.totalorder %s13, 1
    %p115 = scmp.ne.s32.totalorder %s110, %s112
    %p116 = scmp.eq.s32.totalorder %s13, 0
    %p117 = por %p115, %p116
    %p118 = scmp.ne.s32.totalorder %s110, %s112
    %p119 = scmp.eq.s32.totalorder %s18, 1
    %p120 = por %p118, %p119
    %p121 = scmp.ne.s32.totalorder %s112, %s113
    %p122 = scmp.eq.s32.totalorder %s18, 0
    %p123 = por %p121, %p122
    %p124 = scmp.ne.s32.totalorder %s112, %s113
    %p125 = scmp.eq.s32.totalorder %s19, 1
    %p126 = por %p124, %p125
    %p128 = scmp.ne.s32.totalorder %s113, %s127
    %p129 = scmp.eq.s32.totalorder %s19, 0
    %p130 = por %p128, %p129
    %s131 = ssub.s32 %s13, %s20
    %p132 = scmp.eq.s32.totalorder %s131, 0
    %s134 = sadd.s32 %s133, 1
    %s135 = scalar_select %p132, %s133, %s134
    %p138 = pneg %p132
    %p139 = scmp.eq.s32.totalorder %s13, 1
    %p140 = por %p138, %p139
    %p141 = scmp.ne.s32.totalorder %s133, %s136
    %p142 = scmp.eq.s32.totalorder %s13, 0
    %p143 = por %p141, %p142
    %p144 = scmp.ne.s32.totalorder %s133, %s136
    %p145 = scmp.eq.s32.totalorder %s18, 1
    %p146 = por %p144, %p145
    %p147 = scmp.ne.s32.totalorder %s136, %s137
    %p148 = scmp.eq.s32.totalorder %s18, 0
    %p149 = por %p147, %p148
    %p150 = scmp.ne.s32.totalorder %s136, %s137
    %p151 = scmp.eq.s32.totalorder %s19, 1
    %p152 = por %p150, %p151
    %p154 = scmp.ne.s32.totalorder %s137, %s153
    %p155 = scmp.eq.s32.totalorder %s19, 0
    %p156 = por %p154, %p155
    %s157 = ssub.s32 %s13, %s20
    %p158 = scmp.eq.s32.totalorder %s157, 0
    %s160 = sadd.s32 %s159, 1
    %s161 = scalar_select %p158, %s159, %s160
    %p164 = pneg %p158
    %p165 = scmp.eq.s32.totalorder %s13, 1
    %p166 = por %p164, %p165
    %p167 = scmp.ne.s32.totalorder %s159, %s162
    %p168 = scmp.eq.s32.totalorder %s13, 0
    %p169 = por %p167, %p168
    %p170 = scmp.ne.s32.totalorder %s159, %s162
    %p171 = scmp.eq.s32.totalorder %s18, 1
    %p172 = por %p170, %p171
    %p173 = scmp.ne.s32.totalorder %s162, %s163
    %p174 = scmp.eq.s32.totalorder %s18, 0
    %p175 = por %p173, %p174
    %p176 = scmp.ne.s32.totalorder %s162, %s163
    %p177 = scmp.eq.s32.totalorder %s19, 1
    %p178 = por %p176, %p177
    %p180 = scmp.ne.s32.totalorder %s163, %s179
    %p181 = scmp.eq.s32.totalorder %s19, 0
    %p182 = por %p180, %p181
    %p183 = scmp.le.s32.totalorder 1, %s13
    %p184 = scmp.lt.s32.totalorder %s13, 3
    %p185 = pnand %p183, %p184
    %p186 = pneg %p185
    // Predicated region
    $region9: #{cross_transformer_encoder.9} parent=5 // pred_check
      _
    $region10: #{cross_transformer_encoder.9} parent=5 // pred_check_branch
      %188 = sbr.rel (%p185) target = $region12
    $region11: #{cross_transformer_encoder.9} parent=5 // pred_region
      %s189 = ssub.s32 %s13, 1
      // Predicated region
      $region13: #{cross_transformer_encoder.9} parent=11 // pred_check
        %p190 = pneg %p60
      $region14: #{cross_transformer_encoder.9} parent=11 // pred_check_branch
        %192 = sbr.rel (%p190) target = $region16
      $region15: #{cross_transformer_encoder.9} parent=11 // pred_region
        _
      $region16: #{cross_transformer_encoder.9} parent=11 // pred_fallthru
        _
      // Predicated region
      $region17: #{cross_transformer_encoder.9} parent=11 // pred_check
        %p193 = pneg %p81
      $region18: #{cross_transformer_encoder.9} parent=11 // pred_check_branch
        %195 = sbr.rel (%p193) target = $region20
      $region19: #{cross_transformer_encoder.9} parent=11 // pred_region
        _
      $region20: #{cross_transformer_encoder.9} parent=11 // pred_fallthru
        _
      // Predicated region
      $region21: #{cross_transformer_encoder.9} parent=11 // pred_check
        %p196 = pneg %p102
      $region22: #{cross_transformer_encoder.9} parent=11 // pred_check_branch
        %198 = sbr.rel (%p196) target = $region24
      $region23: #{cross_transformer_encoder.9} parent=11 // pred_region
        _
      $region24: #{cross_transformer_encoder.9} parent=11 // pred_fallthru
        _
      // Predicated region
      $region25: #{cross_transformer_encoder.9} parent=11 // pred_check
        %p199 = pneg %p123
      $region26: #{cross_transformer_encoder.9} parent=11 // pred_check_branch
        %201 = sbr.rel (%p199) target = $region28
      $region27: #{cross_transformer_encoder.9} parent=11 // pred_region
        _
      $region28: #{cross_transformer_encoder.9} parent=11 // pred_fallthru
        _
    $region12: #{cross_transformer_encoder.9} parent=5 // pred_fallthru
      _
    %p202 = scmp.lt.s32.totalorder %s13, 2
    // Predicated region
    $region29: #{cross_transformer_encoder.9} parent=5 // pred_check
      %p203 = pneg %p202
    $region30: #{cross_transformer_encoder.9} parent=5 // pred_check_branch
      %205 = sbr.rel (%p203) target = $region32
    $region31: #{cross_transformer_encoder.9} parent=5 // pred_region
      // Predicated region
      $region33: #{cross_transformer_encoder.9} parent=31 // pred_check
        %p206 = pneg %p33
      $region34: #{cross_transformer_encoder.9} parent=31 // pred_check_branch
        %208 = sbr.rel (%p206) target = $region36
      $region35: #{cross_transformer_encoder.9} parent=31 // pred_region
        %s209 = smul.u32 2, %s13
        %p210 = scmp.lt.s32.totalorder %s209, 3
        %s211 = scalar_select %p210, %s209, 3
        %s212 = smul.addr %s211, 8
        %s213 = scalar_lea.vmem %s0, %s212
        %s214 = smul.u32 2, %s13
      $region36: #{cross_transformer_encoder.9} parent=31 // pred_fallthru
        _
    $region32: #{cross_transformer_encoder.9} parent=5 // pred_fallthru
      _
    %p215 = scmp.le.s32.totalorder 1, %s13
    %p216 = scmp.lt.s32.totalorder %s13, 3
    %p217 = pnand %p215, %p216
    %p218 = pneg %p217
    // Predicated region
    $region37: #{cross_transformer_encoder.9} parent=5 // pred_check
      _
    $region38: #{cross_transformer_encoder.9} parent=5 // pred_check_branch
      %220 = sbr.rel (%p217) target = $region40
    $region39: #{cross_transformer_encoder.9} parent=5 // pred_region
      %s221 = ssub.s32 %s13, 1
      %s222 = smul.u32 2, %s18
      %p223 = scmp.lt.s32.totalorder %s222, 3
      %s224 = scalar_select %p223, %s222, 3
      %s225 = smul.addr %s224, 8
      %s226 = scalar_lea.vmem %s0, %s225
      %p227 = pneg %p39
      %p228 = pneg %p36
      %p229 = pneg %p60
      %p230 = pneg %p57
      %p231 = pneg %p81
      %p232 = pneg %p78
      %p233 = pneg %p102
      %p234 = pneg %p99
      %p235 = pneg %p123
      %p236 = pneg %p120
      %p237 = pneg %p149
      %p238 = pneg %p146
      %s239 = smul.u32 2, %s18
      %p240 = scmp.lt.s32.totalorder %s239, 3
      %s241 = scalar_select %p240, %s239, 3
      %s242 = smul.addr %s241, 4
      %s243 = scalar_lea.vmem %s5, %s242
      %p244 = pneg %p175
      %p245 = pneg %p172
      %s246 = smul.u32 2, %s18
      %p247 = scmp.lt.s32.totalorder %s246, 3
      %s248 = scalar_select %p247, %s246, 3
      %s249 = smul.addr %s248, 4
      %s250 = scalar_lea.vmem %s6, %s249
      %s251 = smul.u32 2, %s18
      %p252 = scmp.lt.s32.totalorder %s251, 3
      %s253 = scalar_select %p252, %s251, 3
      %s254 = smul.addr %s253, 8
      %s255 = scalar_lea.vmem %s0, %s254
      %s256 = smul.u32 2, %s18
      %s257 = smul.u32 2, %s18
      %p258 = scmp.lt.s32.totalorder %s257, 3
      %s259 = scalar_select %p258, %s257, 3
      %s260 = smul.addr %s259, 4
      %s261 = scalar_lea.vmem %s5, %s260
      %s262 = smul.u32 2, %s18
      %s263 = smul.u32 2, %s18
      %p264 = scmp.lt.s32.totalorder %s263, 3
      %s265 = scalar_select %p264, %s263, 3
      %s266 = smul.addr %s265, 4
      %s267 = scalar_lea.vmem %s6, %s266
      %s268 = smul.u32 2, %s18
      %v270 = vld [vmem:[%s255] sm:$0xff]
      %v271 = vld [vmem:[%s255 + $0x8] sm:$0xff]
      %272 = vadd.xlane.f32.xlu0 %v270
      %v273 = vpop.xlane.xlu0 %272
      %274 = vadd.xlane.f32.xlu0 %v271
      %v275 = vpop.xlane.xlu0 %274
      %v276 = vrcp.pop 128.0
      %v277 = vmul.f32 %v273, %v276
      %v278 = vmul.f32 %v275, %v276
      %v279 = vsub.f32 %v270, %v277
      %v280 = vsub.f32 %v271, %v278
      %v281 = vmul.f32 %v279, %v279
      %v282 = vmul.f32 %v280, %v280
      %283 = vadd.xlane.f32.xlu0 %v281
      %v284 = vpop.xlane.xlu0 %283
      %285 = vadd.xlane.f32.xlu0 %v282
      %v286 = vpop.xlane.xlu0 %285
      %v287 = vmul.f32 %v284, %v276
      %v288 = vmul.f32 %v286, %v276
      %v289 = vadd.f32 %v287, 1e-05
      %v290 = vadd.f32 %v288, 1e-05
      %v291 = vrsqrt.pop %v289
      %v292 = vrsqrt.pop %v290
      %v293 = vmul.f32 %v279, %v291
      %v294 = vmul.f32 %v280, %v292
      %v295 = vld [vmem:[%s1] sm:$0x3]
      %v296 = vld [vmem:[%s2] sm:$0x3]
      %v297 = vlaneseq
      %v298 = vshrl.u32 %v297, 7
      %v299 = vsub.s32 0, %v298
      %v300 = vrot.slane %v295, %v299
      %v301 = vmul.f32 %v293, %v300
      %v302 = vmul.f32 %v294, %v300
      %v303 = vlaneseq
      %v304 = vshrl.u32 %v303, 7
      %v305 = vsub.s32 1, %v304
      %v306 = vrot.slane %v295, %v305
      %v307 = vadd.f32 %v301, %v306
      %v308 = vadd.f32 %v302, %v306
      %v309 = vlaneseq
      %v310 = vshrl.u32 %v309, 7
      %v311 = vsub.s32 0, %v310
      %v312 = vrot.slane %v296, %v311
      %v313 = vmul.f32 %v293, %v312
      %v314 = vmul.f32 %v294, %v312
      %v315 = vlaneseq
      %v316 = vshrl.u32 %v315, 7
      %v317 = vsub.s32 1, %v316
      %v318 = vrot.slane %v296, %v317
      %v319 = vadd.f32 %v313, %v318
      %v320 = vadd.f32 %v314, %v318
      %v321 = vld [vmem:[%s3] sm:$0xf]
      %v322 = vld [vmem:[%s3 + $0x4] sm:$0xf]
      %v323 = vld [vmem:[%s3 + $0x8] sm:$0xf]
      %v324 = vld [vmem:[%s3 + $0xc] sm:$0xf]
      %v325 = vld [vmem:[%s3 + $0x10] sm:$0xf]
      %v326 = vld [vmem:[%s3 + $0x14] sm:$0xf]
      %v327 = vld [vmem:[%s3 + $0x18] sm:$0xf]
      %v328 = vld [vmem:[%s3 + $0x1c] sm:$0xf]
      %v329 = vld [vmem:[%s3 + $0x20] sm:$0xf]
      %v330 = vld [vmem:[%s3 + $0x24] sm:$0xf]
      %v331 = vld [vmem:[%s3 + $0x28] sm:$0xf]
      %v332 = vld [vmem:[%s3 + $0x2c] sm:$0xf]
      %v333 = vld [vmem:[%s3 + $0x30] sm:$0xf]
      %v334 = vld [vmem:[%s3 + $0x34] sm:$0xf]
      %v335 = vld [vmem:[%s3 + $0x38] sm:$0xf]
      %v336 = vld [vmem:[%s3 + $0x3c] sm:$0xf]
      %v337 = vpack.c.bf16 %v308, %v307
      %v354 = vunpack.c.l.b16 %v321
      %v355 = vunpack.c.l.b16 %v322
      %v356 = vunpack.c.l.b16 %v323
      %v357 = vunpack.c.l.b16 %v324
      %v358 = vunpack.c.l.b16 %v325
      %v359 = vunpack.c.l.b16 %v326
      %v360 = vunpack.c.l.b16 %v327
      %v361 = vunpack.c.l.b16 %v328
      %v362 = vunpack.c.l.b16 %v329
      %v363 = vunpack.c.l.b16 %v330
      %v364 = vunpack.c.l.b16 %v331
      %v365 = vunpack.c.l.b16 %v332
      %v366 = vunpack.c.l.b16 %v333
      %v367 = vunpack.c.l.b16 %v334
      %v368 = vunpack.c.l.b16 %v335
      %v369 = vunpack.c.l.b16 %v336
      %v370 = vpack.c.b16 %v355, %v354
      %v371 = vpack.c.b16 %v357, %v356
      %v372 = vpack.c.b16 %v359, %v358
      %v373 = vpack.c.b16 %v361, %v360
      %v374 = vpack.c.b16 %v363, %v362
      %v375 = vpack.c.b16 %v365, %v364
      %v376 = vpack.c.b16 %v367, %v366
      %v377 = vpack.c.b16 %v369, %v368
      %386 = vmatprep.subr.bf16.mxu0 0
      %387 = vmatpush1.bf16.msra.mxu0 %v370
      %388 = vmatprep.subr.bf16.mxu0 0
      %389 = vmatpush1.bf16.msra.mxu0 %v371
      %390 = vmatprep.subr.bf16.mxu0 0
      %391 = vmatpush1.bf16.msra.mxu0 %v372
      %392 = vmatprep.subr.bf16.mxu0 0
      %393 = vmatpush1.bf16.msra.mxu0 %v373
      %394 = vmatprep.subr.bf16.mxu0 0
      %395 = vmatpush1.bf16.msra.mxu0 %v374
      %396 = vmatprep.subr.bf16.mxu0 0
      %397 = vmatpush1.bf16.msra.mxu0 %v375
      %398 = vmatprep.subr.bf16.mxu0 0
      %399 = vmatpush1.bf16.msra.mxu0 %v376
      %400 = vmatprep.subr.bf16.mxu0 0
      %401 = vmatpush1.bf16.msra.mxu0 %v377
      %402 = vmatprep.subr.bf16.mxu0 0
      %403 = vmatpush1.bf16.msra.mxu0 0
      %404 = vmatprep.subr.bf16.mxu0 0
      %405 = vmatpush1.bf16.msra.mxu0 0
      %406 = vmatprep.subr.bf16.mxu0 0
      %407 = vmatpush1.bf16.msra.mxu0 0
      %408 = vmatprep.subr.bf16.mxu0 0
      %409 = vmatpush1.bf16.msra.mxu0 0
      %410 = vmatprep.subr.bf16.mxu0 0
      %411 = vmatpush1.bf16.msra.mxu0 0
      %412 = vmatprep.subr.bf16.mxu0 0
      %413 = vmatpush1.bf16.msra.mxu0 0
      %414 = vmatprep.subr.bf16.mxu0 0
      %415 = vmatpush1.bf16.msra.mxu0 0
      %416 = vmatprep.subr.bf16.mxu0 0
      %417 = vmatpush1.bf16.msra.mxu0 0
      %418 = vmatprep.mubr.bf16.mxu0 0
      %419 = vmatmul.mubr.bf16.gmra.mrb[0].mxu0 %v337
      %v420 = vpop.f32.mrb[0].mxu0
      %v421 = vadd.f32 0.0, %v420
      %v422 = vpop.f32.mrb[0].mxu0
      %v423 = vpop.f32.mrb[0].mxu0
      %v424 = vadd.f32 0.0, %v423
      %v425 = vpop.f32.mrb[0].mxu0
      %426 = vdwg.mxu0
      %v427 = vpack.c.bf16 %v424, %v421
      %v429 = vunpack.c.l.b16 %v427
      %v430 = vunpack.c.h.b16 %v427
      %v431 = vpack.c.b16 %v429, %v429
      %v432 = vpack.c.b16 %v430, %v430
      %435 = vst [vmem:[%s261] sm:$0xf] %v431
      %436 = vst [vmem:[%s261 + $0x4] sm:$0xf] %v432
      %v437 = vld [vmem:[%s4] sm:$0xf]
      %v438 = vld [vmem:[%s4 + $0x4] sm:$0xf]
      %v439 = vld [vmem:[%s4 + $0x8] sm:$0xf]
      %v440 = vld [vmem:[%s4 + $0xc] sm:$0xf]
      %v441 = vld [vmem:[%s4 + $0x10] sm:$0xf]
      %v442 = vld [vmem:[%s4 + $0x14] sm:$0xf]
      %v443 = vld [vmem:[%s4 + $0x18] sm:$0xf]
      %v444 = vld [vmem:[%s4 + $0x1c] sm:$0xf]
      %v445 = vld [vmem:[%s4 + $0x20] sm:$0xf]
      %v446 = vld [vmem:[%s4 + $0x24] sm:$0xf]
      %v447 = vld [vmem:[%s4 + $0x28] sm:$0xf]
      %v448 = vld [vmem:[%s4 + $0x2c] sm:$0xf]
      %v449 = vld [vmem:[%s4 + $0x30] sm:$0xf]
      %v450 = vld [vmem:[%s4 + $0x34] sm:$0xf]
      %v451 = vld [vmem:[%s4 + $0x38] sm:$0xf]
      %v452 = vld [vmem:[%s4 + $0x3c] sm:$0xf]
      %v453 = vpack.c.bf16 %v320, %v319
      %v470 = vunpack.c.l.b16 %v437
      %v471 = vunpack.c.l.b16 %v438
      %v472 = vunpack.c.l.b16 %v439
      %v473 = vunpack.c.l.b16 %v440
      %v474 = vunpack.c.l.b16 %v441
      %v475 = vunpack.c.l.b16 %v442
      %v476 = vunpack.c.l.b16 %v443
      %v477 = vunpack.c.l.b16 %v444
      %v478 = vunpack.c.l.b16 %v445
      %v479 = vunpack.c.l.b16 %v446
      %v480 = vunpack.c.l.b16 %v447
      %v481 = vunpack.c.l.b16 %v448
      %v482 = vunpack.c.l.b16 %v449
      %v483 = vunpack.c.l.b16 %v450
      %v484 = vunpack.c.l.b16 %v451
      %v485 = vunpack.c.l.b16 %v452
      %v486 = vpack.c.b16 %v471, %v470
      %v487 = vpack.c.b16 %v473, %v472
      %v488 = vpack.c.b16 %v475, %v474
      %v489 = vpack.c.b16 %v477, %v476
      %v490 = vpack.c.b16 %v479, %v478
      %v491 = vpack.c.b16 %v481, %v480
      %v492 = vpack.c.b16 %v483, %v482
      %v493 = vpack.c.b16 %v485, %v484
      %502 = vmatprep.subr.bf16.mxu0 0
      %503 = vmatpush1.bf16.msra.mxu0 %v486
      %504 = vmatprep.subr.bf16.mxu0 0
      %505 = vmatpush1.bf16.msra.mxu0 %v487
      %506 = vmatprep.subr.bf16.mxu0 0
      %507 = vmatpush1.bf16.msra.mxu0 %v488
      %508 = vmatprep.subr.bf16.mxu0 0
      %509 = vmatpush1.bf16.msra.mxu0 %v489
      %510 = vmatprep.subr.bf16.mxu0 0
      %511 = vmatpush1.bf16.msra.mxu0 %v490
      %512 = vmatprep.subr.bf16.mxu0 0
      %513 = vmatpush1.bf16.msra.mxu0 %v491
      %514 = vmatprep.subr.bf16.mxu0 0
      %515 = vmatpush1.bf16.msra.mxu0 %v492
      %516 = vmatprep.subr.bf16.mxu0 0
      %517 = vmatpush1.bf16.msra.mxu0 %v493
      %518 = vmatprep.subr.bf16.mxu0 0
      %519 = vmatpush1.bf16.msra.mxu0 0
      %520 = vmatprep.subr.bf16.mxu0 0
      %521 = vmatpush1.bf16.msra.mxu0 0
      %522 = vmatprep.subr.bf16.mxu0 0
      %523 = vmatpush1.bf16.msra.mxu0 0
      %524 = vmatprep.subr.bf16.mxu0 0
      %525 = vmatpush1.bf16.msra.mxu0 0
      %526 = vmatprep.subr.bf16.mxu0 0
      %527 = vmatpush1.bf16.msra.mxu0 0
      %528 = vmatprep.subr.bf16.mxu0 0
      %529 = vmatpush1.bf16.msra.mxu0 0
      %530 = vmatprep.subr.bf16.mxu0 0
      %531 = vmatpush1.bf16.msra.mxu0 0
      %532 = vmatprep.subr.bf16.mxu0 0
      %533 = vmatpush1.bf16.msra.mxu0 0
      %534 = vmatprep.mubr.bf16.mxu0 0
      %535 = vmatmul.mubr.bf16.gmra.mrb[0].mxu0 %v453
      %v536 = vpop.f32.mrb[0].mxu0
      %v537 = vadd.f32 0.0, %v536
      %v538 = vpop.f32.mrb[0].mxu0
      %v539 = vpop.f32.mrb[0].mxu0
      %v540 = vadd.f32 0.0, %v539
      %v541 = vpop.f32.mrb[0].mxu0
      %542 = vdwg.mxu0
      %v543 = vpack.c.bf16 %v540, %v537
      %v545 = vunpack.c.l.b16 %v543
      %v546 = vunpack.c.h.b16 %v543
      %v547 = vpack.c.b16 %v545, %v545
      %v548 = vpack.c.b16 %v546, %v546
      %551 = vst [vmem:[%s267] sm:$0xf] %v547
      %552 = vst [vmem:[%s267 + $0x4] sm:$0xf] %v548
      %s553 = smul.u32 2, %s18
      %p554 = scmp.lt.s32.totalorder %s553, 3
      %s555 = scalar_select %p554, %s553, 3
      %s556 = smul.addr %s555, 4
      %s557 = scalar_lea.vmem %s5, %s556
      %s558 = smul.u32 2, %s18
      %p559 = scmp.lt.s32.totalorder %s558, 3
      %s560 = scalar_select %p559, %s558, 3
      %s561 = smul.addr %s560, 4
      %s562 = scalar_lea.vmem %s6, %s561
      // Predicated region
      $region41: #{cross_transformer_encoder.9} parent=39 // pred_check
        %p563 = pneg %p146
      $region42: #{cross_transformer_encoder.9} parent=39 // pred_check_branch
        %565 = sbr.rel (%p563) target = $region44
      $region43: #{cross_transformer_encoder.9} parent=39 // pred_region
        %s566 = smul.u32 2, %s18
      $region44: #{cross_transformer_encoder.9} parent=39 // pred_fallthru
        _
      // Predicated region
      $region45: #{cross_transformer_encoder.9} parent=39 // pred_check
        %p567 = pneg %p172
      $region46: #{cross_transformer_encoder.9} parent=39 // pred_check_branch
        %569 = sbr.rel (%p567) target = $region48
      $region47: #{cross_transformer_encoder.9} parent=39 // pred_region
        %s570 = smul.u32 2, %s18
      $region48: #{cross_transformer_encoder.9} parent=39 // pred_fallthru
        _
    $region40: #{cross_transformer_encoder.9} parent=5 // pred_fallthru
      _
    %p571 = scmp.le.s32.totalorder 2, %s13
    // Predicated region
    $region49: #{cross_transformer_encoder.9} parent=5 // pred_check
      %p572 = pneg %p571
    $region50: #{cross_transformer_encoder.9} parent=5 // pred_check_branch
      %574 = sbr.rel (%p572) target = $region52
    $region51: #{cross_transformer_encoder.9} parent=5 // pred_region
      %s575 = ssub.s32 %s13, 2
      // Predicated region
      $region53: #{cross_transformer_encoder.9} parent=51 // pred_check
        %p576 = pneg %p152
      $region54: #{cross_transformer_encoder.9} parent=51 // pred_check_branch
        %578 = sbr.rel (%p576) target = $region56
      $region55: #{cross_transformer_encoder.9} parent=51 // pred_region
        %s579 = smul.u32 2, %s19
        %p580 = scmp.lt.s32.totalorder %s579, 3
        %s581 = scalar_select %p580, %s579, 3
        %s582 = smul.addr %s581, 4
        %s583 = scalar_lea.vmem %s5, %s582
      $region56: #{cross_transformer_encoder.9} parent=51 // pred_fallthru
        _
      // Predicated region
      $region57: #{cross_transformer_encoder.9} parent=51 // pred_check
        %p584 = pneg %p178
      $region58: #{cross_transformer_encoder.9} parent=51 // pred_check_branch
        %586 = sbr.rel (%p584) target = $region60
      $region59: #{cross_transformer_encoder.9} parent=51 // pred_region
        %s587 = smul.u32 2, %s19
        %p588 = scmp.lt.s32.totalorder %s587, 3
        %s589 = scalar_select %p588, %s587, 3
        %s590 = smul.addr %s589, 4
        %s591 = scalar_lea.vmem %s6, %s590
      $region60: #{cross_transformer_encoder.9} parent=51 // pred_fallthru
        _
    $region52: #{cross_transformer_encoder.9} parent=5 // pred_fallthru
      _
  $region6: #{cross_transformer_encoder.9} parent=0 // loop_footer
    %s17 = sadd.s32 1, %s13
  $region7: #{cross_transformer_encoder.9} parent=0 // loop_footer_branch
    %12 = sbr.rel target = $region3
  $region8: #{cross_transformer_encoder.9} parent=0 // loop_exit
    _

// kernel: cross_transformer_encoder.6
$region0: #{cross_transformer_encoder.6}
  #allocation0 [shape = 'u32[]', space=smem, size = 0x4, offset = 0x4, fixed_abs, tag = 'smem constant byte address 0x4 - core index']
  #allocation1 [shape = 'u32[144,128]{1,0:T(1,128)}', space=vmem, size = 0x12000, scoped, tag = 'internal scratch']
  %s0 = inlined_call_operand.vmem [shape: f32[32,128], index: 0, kind: input, shape index: {}]
  %s1 = inlined_call_operand.vmem [shape: f32[2,128], index: 1, kind: input, shape index: {}]
  %s2 = inlined_call_operand.vmem [shape: f32[2,128], index: 2, kind: input, shape index: {}]
  %s3 = inlined_call_operand.hbm [shape: bf16[128,128], index: 3, kind: input, shape index: {}]
  %s4 = inlined_call_operand.hbm [shape: bf16[128,128], index: 4, kind: input, shape index: {}]
  %s5 = inlined_call_operand.vmem [shape: bf16[32,128], index: 5, kind: output, shape index: {0}]
  %s6 = inlined_call_operand.vmem [shape: bf16[32,128], index: 6, kind: output, shape index: {1}]
  %7 = xla_tuple %s5, %s6
  %s8 = sld [smem:[#allocation0]]
  $region69: #{cross_transformer_encoder.6} parent=0
    _
  %s10 = ssub.s32 1, %s8
  %s11 = scalar_select 0, %s10, %s8
  $region1: #{cross_transformer_encoder.6} parent=0
    #allocation2 [shape = 'u8[32768]{0}', space=vmem, size = 0x8000, scoped, tag = 'input window, operand 3, single buffered']
    #allocation3 [shape = 's32[2]{0}', space=sflag, size = 0x8, scoped, tag = 'scoped memory for cross_transformer_encoder.6']
    #allocation4 [shape = 'u8[32768]{0}', space=vmem, size = 0x8000, scoped, tag = 'input window, operand 4, single buffered']
    #allocation5 [shape = 's32[1]{0}', space=sflag, size = 0x4, scoped, tag = 'scoped memory for cross_transformer_encoder.6']
    %12 = vsyncpa [#allocation3], 0
    %13 = vsyncpa [#allocation5], 0
    loop: start=0, step=1, limit=4
    $region2: #{cross_transformer_encoder.6} parent=1 // loop_pre_header
      _
    $region3: #{cross_transformer_encoder.6} parent=1 // loop_header
      %s15 = sphi 0, %s19
      %p16 = scmp.ge.s32.totalorder %s15, 4
      %s25 = sphi 0, %s27
      %s28 = sphi 0, %s25
      %s29 = sphi 0, %s28
      %s45 = sphi 0, %s29
      %s49 = sphi 0, %s49
      %s51 = sphi 0, %s49
      %s52 = sphi 0, %s51
      %s66 = sphi 0, %s52
      %s70 = sphi 0, %s70
      %s72 = sphi 0, %s70
      %s73 = sphi 0, %s72
      %s87 = sphi 0, %s73
      %s91 = sphi 0, %s91
      %s93 = sphi 0, %s91
      %s94 = sphi 0, %s93
      %s108 = sphi 0, %s94
      %s112 = sphi 0, %s112
      %s114 = sphi 0, %s112
      %s115 = sphi 0, %s114
      %s129 = sphi 0, %s115
      %s135 = sphi 0, %s137
      %s138 = sphi 0, %s135
      %s139 = sphi 0, %s138
      %s155 = sphi 0, %s139
      %s161 = sphi 0, %s163
      %s164 = sphi 0, %s161
      %s165 = sphi 0, %s164
      %s181 = sphi 0, %s165
    $region4: #{cross_transformer_encoder.6} parent=1 // loop_header_branch
      %18 = sbr.rel (%p16) target = $region8
    $region5: #{cross_transformer_encoder.6} parent=1 // loop_body
      %s20 = ssub.s32 %s15, 1
      %s21 = ssub.s32 %s15, 2
      %s22 = sadd.s32 %s15, 1
      %s23 = ssub.s32 %s15, %s22
      %p24 = scmp.eq.s32.totalorder %s23, 0
      %s26 = sadd.s32 %s25, 1
      %s27 = scalar_select %p24, %s25, %s26
      %p30 = pneg %p24
      %p31 = scmp.eq.s32.totalorder %s15, 1
      %p32 = por %p30, %p31
      %p33 = scmp.ne.s32.totalorder %s25, %s28
      %p34 = scmp.eq.s32.totalorder %s15, 0
      %p35 = por %p33, %p34
      %p36 = scmp.ne.s32.totalorder %s25, %s28
      %p37 = scmp.eq.s32.totalorder %s20, 1
      %p38 = por %p36, %p37
      %p39 = scmp.ne.s32.totalorder %s28, %s29
      %p40 = scmp.eq.s32.totalorder %s20, 0
      %p41 = por %p39, %p40
      %p42 = scmp.ne.s32.totalorder %s28, %s29
      %p43 = scmp.eq.s32.totalorder %s21, 1
      %p44 = por %p42, %p43
      %p46 = scmp.ne.s32.totalorder %s29, %s45
      %p47 = scmp.eq.s32.totalorder %s21, 0
      %p48 = por %p46, %p47
      %s50 = sadd.s32 %s49, 1
      %p53 = scmp.eq.s32.totalorder %s15, 1
      %p54 = scmp.ne.s32.totalorder %s49, %s51
      %p55 = scmp.eq.s32.totalorder %s15, 0
      %p56 = por %p54, %p55
      %p57 = scmp.ne.s32.totalorder %s49, %s51
      %p58 = scmp.eq.s32.totalorder %s20, 1
      %p59 = por %p57, %p58
      %p60 = scmp.ne.s32.totalorder %s51, %s52
      %p61 = scmp.eq.s32.totalorder %s20, 0
      %p62 = por %p60, %p61
      %p63 = scmp.ne.s32.totalorder %s51, %s52
      %p64 = scmp.eq.s32.totalorder %s21, 1
      %p65 = por %p63, %p64
      %p67 = scmp.ne.s32.totalorder %s52, %s66
      %p68 = scmp.eq.s32.totalorder %s21, 0
      %p69 = por %p67, %p68
      %s71 = sadd.s32 %s70, 1
      %p74 = scmp.eq.s32.totalorder %s15, 1
      %p75 = scmp.ne.s32.totalorder %s70, %s72
      %p76 = scmp.eq.s32.totalorder %s15, 0
      %p77 = por %p75, %p76
      %p78 = scmp.ne.s32.totalorder %s70, %s72
      %p79 = scmp.eq.s32.totalorder %s20, 1
      %p80 = por %p78, %p79
      %p81 = scmp.ne.s32.totalorder %s72, %s73
      %p82 = scmp.eq.s32.totalorder %s20, 0
      %p83 = por %p81, %p82
      %p84 = scmp.ne.s32.totalorder %s72, %s73
      %p85 = scmp.eq.s32.totalorder %s21, 1
      %p86 = por %p84, %p85
      %p88 = scmp.ne.s32.totalorder %s73, %s87
      %p89 = scmp.eq.s32.totalorder %s21, 0
      %p90 = por %p88, %p89
      %s92 = sadd.s32 %s91, 1
      %p95 = scmp.eq.s32.totalorder %s15, 1
      %p96 = scmp.ne.s32.totalorder %s91, %s93
      %p97 = scmp.eq.s32.totalorder %s15, 0
      %p98 = por %p96, %p97
      %p99 = scmp.ne.s32.totalorder %s91, %s93
      %p100 = scmp.eq.s32.totalorder %s20, 1
      %p101 = por %p99, %p100
      %p102 = scmp.ne.s32.totalorder %s93, %s94
      %p103 = scmp.eq.s32.totalorder %s20, 0
      %p104 = por %p102, %p103
      %p105 = scmp.ne.s32.totalorder %s93, %s94
      %p106 = scmp.eq.s32.totalorder %s21, 1
      %p107 = por %p105, %p106
      %p109 = scmp.ne.s32.totalorder %s94, %s108
      %p110 = scmp.eq.s32.totalorder %s21, 0
      %p111 = por %p109, %p110
      %s113 = sadd.s32 %s112, 1
      %p116 = scmp.eq.s32.totalorder %s15, 1
      %p117 = scmp.ne.s32.totalorder %s112, %s114
      %p118 = scmp.eq.s32.totalorder %s15, 0
      %p119 = por %p117, %p118
      %p120 = scmp.ne.s32.totalorder %s112, %s114
      %p121 = scmp.eq.s32.totalorder %s20, 1
      %p122 = por %p120, %p121
      %p123 = scmp.ne.s32.totalorder %s114, %s115
      %p124 = scmp.eq.s32.totalorder %s20, 0
      %p125 = por %p123, %p124
      %p126 = scmp.ne.s32.totalorder %s114, %s115
      %p127 = scmp.eq.s32.totalorder %s21, 1
      %p128 = por %p126, %p127
      %p130 = scmp.ne.s32.totalorder %s115, %s129
      %p131 = scmp.eq.s32.totalorder %s21, 0
      %p132 = por %p130, %p131
      %s133 = ssub.s32 %s15, %s22
      %p134 = scmp.eq.s32.totalorder %s133, 0
      %s136 = sadd.s32 %s135, 1
      %s137 = scalar_select %p134, %s135, %s136
      %p140 = pneg %p134
      %p141 = scmp.eq.s32.totalorder %s15, 1
      %p142 = por %p140, %p141
      %p143 = scmp.ne.s32.totalorder %s135, %s138
      %p144 = scmp.eq.s32.totalorder %s15, 0
      %p145 = por %p143, %p144
      %p146 = scmp.ne.s32.totalorder %s135, %s138
      %p147 = scmp.eq.s32.totalorder %s20, 1
      %p148 = por %p146, %p147
      %p149 = scmp.ne.s32.totalorder %s138, %s139
      %p150 = scmp.eq.s32.totalorder %s20, 0
      %p151 = por %p149, %p150
      %p152 = scmp.ne.s32.totalorder %s138, %s139
      %p153 = scmp.eq.s32.totalorder %s21, 1
      %p154 = por %p152, %p153
      %p156 = scmp.ne.s32.totalorder %s139, %s155
      %p157 = scmp.eq.s32.totalorder %s21, 0
      %p158 = por %p156, %p157
      %s159 = ssub.s32 %s15, %s22
      %p160 = scmp.eq.s32.totalorder %s159, 0
      %s162 = sadd.s32 %s161, 1
      %s163 = scalar_select %p160, %s161, %s162
      %p166 = pneg %p160
      %p167 = scmp.eq.s32.totalorder %s15, 1
      %p168 = por %p166, %p167
      %p169 = scmp.ne.s32.totalorder %s161, %s164
      %p170 = scmp.eq.s32.totalorder %s15, 0
      %p171 = por %p169, %p170
      %p172 = scmp.ne.s32.totalorder %s161, %s164
      %p173 = scmp.eq.s32.totalorder %s20, 1
      %p174 = por %p172, %p173
      %p175 = scmp.ne.s32.totalorder %s164, %s165
      %p176 = scmp.eq.s32.totalorder %s20, 0
      %p177 = por %p175, %p176
      %p178 = scmp.ne.s32.totalorder %s164, %s165
      %p179 = scmp.eq.s32.totalorder %s21, 1
      %p180 = por %p178, %p179
      %p182 = scmp.ne.s32.totalorder %s165, %s181
      %p183 = scmp.eq.s32.totalorder %s21, 0
      %p184 = por %p182, %p183
      %p185 = scmp.le.s32.totalorder 1, %s15
      %p186 = scmp.lt.s32.totalorder %s15, 3
      %p187 = pnand %p185, %p186
      %p188 = pneg %p187
      // Predicated region
      $region9: #{cross_transformer_encoder.6} parent=5 // pred_check
        _
      $region10: #{cross_transformer_encoder.6} parent=5 // pred_check_branch
        %190 = sbr.rel (%p187) target = $region12
      $region11: #{cross_transformer_encoder.6} parent=5 // pred_region
        %s191 = ssub.s32 %s15, 1
        // Predicated region
        $region13: #{cross_transformer_encoder.6} parent=11 // pred_check
          %p192 = pneg %p62
        $region14: #{cross_transformer_encoder.6} parent=11 // pred_check_branch
          %194 = sbr.rel (%p192) target = $region16
        $region15: #{cross_transformer_encoder.6} parent=11 // pred_region
          _
        $region16: #{cross_transformer_encoder.6} parent=11 // pred_fallthru
          _
        // Predicated region
        $region17: #{cross_transformer_encoder.6} parent=11 // pred_check
          %p195 = pneg %p83
        $region18: #{cross_transformer_encoder.6} parent=11 // pred_check_branch
          %197 = sbr.rel (%p195) target = $region20
        $region19: #{cross_transformer_encoder.6} parent=11 // pred_region
          _
        $region20: #{cross_transformer_encoder.6} parent=11 // pred_fallthru
          _
        // Predicated region
        $region21: #{cross_transformer_encoder.6} parent=11 // pred_check
          %p198 = pneg %p104
        $region22: #{cross_transformer_encoder.6} parent=11 // pred_check_branch
          %200 = sbr.rel (%p198) target = $region24
        $region23: #{cross_transformer_encoder.6} parent=11 // pred_region
          %s202 = ssub.s32 1024, 1024
          %203 = vsyncadd [#allocation3], %s202
          %s204 = sshll.u32 [#allocation2], 4
          %s205 = int_to_ptr.vmem [resolvable:$true] %s204
          %210 = dma.hbm_to_vmem [thread:$0]  %s3, 1024, %s205, [#allocation3], 64, 64, 4
        $region24: #{cross_transformer_encoder.6} parent=11 // pred_fallthru
          _
        // Predicated region
        $region25: #{cross_transformer_encoder.6} parent=11 // pred_check
          %p211 = pneg %p125
        $region26: #{cross_transformer_encoder.6} parent=11 // pred_check_branch
          %213 = sbr.rel (%p211) target = $region28
        $region27: #{cross_transformer_encoder.6} parent=11 // pred_region
          %s215 = ssub.s32 1024, 1024
          %216 = vsyncadd [#allocation5], %s215
          %s217 = sshll.u32 [#allocation4], 4
          %s218 = int_to_ptr.vmem [resolvable:$true] %s217
          %223 = dma.hbm_to_vmem [thread:$0]  %s4, 1024, %s218, [#allocation5], 64, 64, 4
        $region28: #{cross_transformer_encoder.6} parent=11 // pred_fallthru
          _
      $region12: #{cross_transformer_encoder.6} parent=5 // pred_fallthru
        _
      %p224 = scmp.lt.s32.totalorder %s15, 2
      // Predicated region
      $region29: #{cross_transformer_encoder.6} parent=5 // pred_check
        %p225 = pneg %p224
      $region30: #{cross_transformer_encoder.6} parent=5 // pred_check_branch
        %227 = sbr.rel (%p225) target = $region32
      $region31: #{cross_transformer_encoder.6} parent=5 // pred_region
        // Predicated region
        $region33: #{cross_transformer_encoder.6} parent=31 // pred_check
          %p228 = pneg %p35
        $region34: #{cross_transformer_encoder.6} parent=31 // pred_check_branch
          %230 = sbr.rel (%p228) target = $region36
        $region35: #{cross_transformer_encoder.6} parent=31 // pred_region
          %s231 = smul.u32 2, %s15
          %p232 = scmp.lt.s32.totalorder %s231, 3
          %s233 = scalar_select %p232, %s231, 3
          %s234 = smul.addr %s233, 8
          %s235 = scalar_lea.vmem %s0, %s234
          %s236 = smul.u32 2, %s15
        $region36: #{cross_transformer_encoder.6} parent=31 // pred_fallthru
          _
      $region32: #{cross_transformer_encoder.6} parent=5 // pred_fallthru
        _
      %p237 = scmp.le.s32.totalorder 1, %s15
      %p238 = scmp.lt.s32.totalorder %s15, 3
      %p239 = pnand %p237, %p238
      %p240 = pneg %p239
      // Predicated region
      $region37: #{cross_transformer_encoder.6} parent=5 // pred_check
        _
      $region38: #{cross_transformer_encoder.6} parent=5 // pred_check_branch
        %242 = sbr.rel (%p239) target = $region40
      $region39: #{cross_transformer_encoder.6} parent=5 // pred_region
        %s243 = ssub.s32 %s15, 1
        // Predicated region
        $region41: #{cross_transformer_encoder.6} parent=39 // pred_check
          %p244 = pneg %p104
        $region42: #{cross_transformer_encoder.6} parent=39 // pred_check_branch
          %246 = sbr.rel (%p244) target = $region44
        $region43: #{cross_transformer_encoder.6} parent=39 // pred_region
          %247 = dma.done [#allocation3], 1024
        $region44: #{cross_transformer_encoder.6} parent=39 // pred_fallthru
          _
        // Predicated region
        $region45: #{cross_transformer_encoder.6} parent=39 // pred_check
          %p248 = pneg %p125
        $region46: #{cross_transformer_encoder.6} parent=39 // pred_check_branch
          %250 = sbr.rel (%p248) target = $region48
        $region47: #{cross_transformer_encoder.6} parent=39 // pred_region
          %251 = dma.done [#allocation5], 1024
        $region48: #{cross_transformer_encoder.6} parent=39 // pred_fallthru
          _
        %s252 = smul.u32 2, %s20
        %p253 = scmp.lt.s32.totalorder %s252, 3
        %s254 = scalar_select %p253, %s252, 3
        %s255 = smul.addr %s254, 8
        %s256 = scalar_lea.vmem %s0, %s255
        %p257 = pneg %p41
        %p258 = pneg %p38
        %p259 = pneg %p62
        %p260 = pneg %p59
        %p261 = pneg %p83
        %p262 = pneg %p80
        %p263 = pneg %p104
        %p264 = pneg %p101
        %p265 = pneg %p125
        %p266 = pneg %p122
        %p267 = pneg %p151
        %p268 = pneg %p148
        %s269 = smul.u32 2, %s20
        %p270 = scmp.lt.s32.totalorder %s269, 3
        %s271 = scalar_select %p270, %s269, 3
        %s272 = smul.addr %s271, 4
        %s273 = scalar_lea.vmem %s5, %s272
        %p274 = pneg %p177
        %p275 = pneg %p174
        %s276 = smul.u32 2, %s20
        %p277 = scmp.lt.s32.totalorder %s276, 3
        %s278 = scalar_select %p277, %s276, 3
        %s279 = smul.addr %s278, 4
        %s280 = scalar_lea.vmem %s6, %s279
        %s281 = smul.u32 2, %s20
        %p282 = scmp.lt.s32.totalorder %s281, 3
        %s283 = scalar_select %p282, %s281, 3
        %s284 = smul.addr %s283, 8
        %s285 = scalar_lea.vmem %s0, %s284
        %s286 = smul.u32 2, %s20
        %s287 = smul.u32 2, %s20
        %p288 = scmp.lt.s32.totalorder %s287, 3
        %s289 = scalar_select %p288, %s287, 3
        %s290 = smul.addr %s289, 4
        %s291 = scalar_lea.vmem %s5, %s290
        %s292 = smul.u32 2, %s20
        %s293 = smul.u32 2, %s20
        %p294 = scmp.lt.s32.totalorder %s293, 3
        %s295 = scalar_select %p294, %s293, 3
        %s296 = smul.addr %s295, 4
        %s297 = scalar_lea.vmem %s6, %s296
        %s298 = smul.u32 2, %s20
        %v300 = vld [vmem:[%s285] sm:$0xff]
        %v301 = vld [vmem:[%s285 + $0x8] sm:$0xff]
        %302 = vadd.xlane.f32.xlu0 %v300
        %v303 = vpop.xlane.xlu0 %302
        %304 = vadd.xlane.f32.xlu0 %v301
        %v305 = vpop.xlane.xlu0 %304
        %v306 = vrcp.pop 128.0
        %v307 = vmul.f32 %v303, %v306
        %v308 = vmul.f32 %v305, %v306
        %v309 = vsub.f32 %v300, %v307
        %v310 = vsub.f32 %v301, %v308
        %v311 = vmul.f32 %v309, %v309
        %v312 = vmul.f32 %v310, %v310
        %313 = vadd.xlane.f32.xlu0 %v311
        %v314 = vpop.xlane.xlu0 %313
        %315 = vadd.xlane.f32.xlu0 %v312
        %v316 = vpop.xlane.xlu0 %315
        %v317 = vmul.f32 %v314, %v306
        %v318 = vmul.f32 %v316, %v306
        %v319 = vadd.f32 %v317, 1e-05
        %v320 = vadd.f32 %v318, 1e-05
        %v321 = vrsqrt.pop %v319
        %v322 = vrsqrt.pop %v320
        %v323 = vmul.f32 %v309, %v321
        %v324 = vmul.f32 %v310, %v322
        %v325 = vld [vmem:[%s1] sm:$0x3]
        %v326 = vld [vmem:[%s2] sm:$0x3]
        %v327 = vlaneseq
        %v328 = vshrl.u32 %v327, 7
        %v329 = vsub.s32 0, %v328
        %v330 = vrot.slane %v325, %v329
        %v331 = vmul.f32 %v323, %v330
        %v332 = vmul.f32 %v324, %v330
        %v333 = vlaneseq
        %v334 = vshrl.u32 %v333, 7
        %v335 = vsub.s32 1, %v334
        %v336 = vrot.slane %v325, %v335
        %v337 = vadd.f32 %v331, %v336
        %v338 = vadd.f32 %v332, %v336
        %v339 = vlaneseq
        %v340 = vshrl.u32 %v339, 7
        %v341 = vsub.s32 0, %v340
        %v342 = vrot.slane %v326, %v341
        %v343 = vmul.f32 %v323, %v342
        %v344 = vmul.f32 %v324, %v342
        %v345 = vlaneseq
        %v346 = vshrl.u32 %v345, 7
        %v347 = vsub.s32 1, %v346
        %v348 = vrot.slane %v326, %v347
        %v349 = vadd.f32 %v343, %v348
        %v350 = vadd.f32 %v344, %v348
        %v351 = vld [vmem:[#allocation2] sm:$0xf]
        %v352 = vld [vmem:[#allocation2 + $0x4] sm:$0xf]
        %v353 = vld [vmem:[#allocation2 + $0x8] sm:$0xf]
        %v354 = vld [vmem:[#allocation2 + $0xc] sm:$0xf]
        %v355 = vld [vmem:[#allocation2 + $0x10] sm:$0xf]
        %v356 = vld [vmem:[#allocation2 + $0x14] sm:$0xf]
        %v357 = vld [vmem:[#allocation2 + $0x18] sm:$0xf]
        %v358 = vld [vmem:[#allocation2 + $0x1c] sm:$0xf]
        %v359 = vld [vmem:[#allocation2 + $0x20] sm:$0xf]
        %v360 = vld [vmem:[#allocation2 + $0x24] sm:$0xf]
        %v361 = vld [vmem:[#allocation2 + $0x28] sm:$0xf]
        %v362 = vld [vmem:[#allocation2 + $0x2c] sm:$0xf]
        %v363 = vld [vmem:[#allocation2 + $0x30] sm:$0xf]
        %v364 = vld [vmem:[#allocation2 + $0x34] sm:$0xf]
        %v365 = vld [vmem:[#allocation2 + $0x38] sm:$0xf]
        %v366 = vld [vmem:[#allocation2 + $0x3c] sm:$0xf]
        %v367 = vpack.c.bf16 %v338, %v337
        %v384 = vunpack.c.l.b16 %v351
        %v385 = vunpack.c.l.b16 %v352
        %v386 = vunpack.c.l.b16 %v353
        %v387 = vunpack.c.l.b16 %v354
        %v388 = vunpack.c.l.b16 %v355
        %v389 = vunpack.c.l.b16 %v356
        %v390 = vunpack.c.l.b16 %v357
        %v391 = vunpack.c.l.b16 %v358
        %v392 = vunpack.c.l.b16 %v359
        %v393 = vunpack.c.l.b16 %v360
        %v394 = vunpack.c.l.b16 %v361
        %v395 = vunpack.c.l.b16 %v362
        %v396 = vunpack.c.l.b16 %v363
        %v397 = vunpack.c.l.b16 %v364
        %v398 = vunpack.c.l.b16 %v365
        %v399 = vunpack.c.l.b16 %v366
        %v400 = vpack.c.b16 %v385, %v384
        %v401 = vpack.c.b16 %v387, %v386
        %v402 = vpack.c.b16 %v389, %v388
        %v403 = vpack.c.b16 %v391, %v390
        %v404 = vpack.c.b16 %v393, %v392
        %v405 = vpack.c.b16 %v395, %v394
        %v406 = vpack.c.b16 %v397, %v396
        %v407 = vpack.c.b16 %v399, %v398
        %416 = vmatprep.subr.bf16.mxu0 0
        %417 = vmatpush1.bf16.msra.mxu0 %v400
        %418 = vmatprep.subr.bf16.mxu0 0
        %419 = vmatpush1.bf16.msra.mxu0 %v401
        %420 = vmatprep.subr.bf16.mxu0 0
        %421 = vmatpush1.bf16.msra.mxu0 %v402
        %422 = vmatprep.subr.bf16.mxu0 0
        %423 = vmatpush1.bf16.msra.mxu0 %v403
        %424 = vmatprep.subr.bf16.mxu0 0
        %425 = vmatpush1.bf16.msra.mxu0 %v404
        %426 = vmatprep.subr.bf16.mxu0 0
        %427 = vmatpush1.bf16.msra.mxu0 %v405
        %428 = vmatprep.subr.bf16.mxu0 0
        %429 = vmatpush1.bf16.msra.mxu0 %v406
        %430 = vmatprep.subr.bf16.mxu0 0
        %431 = vmatpush1.bf16.msra.mxu0 %v407
        %432 = vmatprep.subr.bf16.mxu0 0
        %433 = vmatpush1.bf16.msra.mxu0 0
        %434 = vmatprep.subr.bf16.mxu0 0
        %435 = vmatpush1.bf16.msra.mxu0 0
        %436 = vmatprep.subr.bf16.mxu0 0
        %437 = vmatpush1.bf16.msra.mxu0 0
        %438 = vmatprep.subr.bf16.mxu0 0
        %439 = vmatpush1.bf16.msra.mxu0 0
        %440 = vmatprep.subr.bf16.mxu0 0
        %441 = vmatpush1.bf16.msra.mxu0 0
        %442 = vmatprep.subr.bf16.mxu0 0
        %443 = vmatpush1.bf16.msra.mxu0 0
        %444 = vmatprep.subr.bf16.mxu0 0
        %445 = vmatpush1.bf16.msra.mxu0 0
        %446 = vmatprep.subr.bf16.mxu0 0
        %447 = vmatpush1.bf16.msra.mxu0 0
        %448 = vmatprep.mubr.bf16.mxu0 0
        %449 = vmatmul.mubr.bf16.gmra.mrb[0].mxu0 %v367
        %v450 = vpop.f32.mrb[0].mxu0
        %v451 = vadd.f32 0.0, %v450
        %v452 = vpop.f32.mrb[0].mxu0
        %v453 = vpop.f32.mrb[0].mxu0
        %v454 = vadd.f32 0.0, %v453
        %v455 = vpop.f32.mrb[0].mxu0
        %456 = vdwg.mxu0
        %v457 = vpack.c.bf16 %v454, %v451
        %v459 = vunpack.c.l.b16 %v457
        %v460 = vunpack.c.h.b16 %v457
        %v461 = vpack.c.b16 %v459, %v459
        %v462 = vpack.c.b16 %v460, %v460
        %465 = vst [vmem:[%s291] sm:$0xf] %v461
        %466 = vst [vmem:[%s291 + $0x4] sm:$0xf] %v462
        %v467 = vld [vmem:[#allocation4] sm:$0xf]
        %v468 = vld [vmem:[#allocation4 + $0x4] sm:$0xf]
        %v469 = vld [vmem:[#allocation4 + $0x8] sm:$0xf]
        %v470 = vld [vmem:[#allocation4 + $0xc] sm:$0xf]
        %v471 = vld [vmem:[#allocation4 + $0x10] sm:$0xf]
        %v472 = vld [vmem:[#allocation4 + $0x14] sm:$0xf]
        %v473 = vld [vmem:[#allocation4 + $0x18] sm:$0xf]
        %v474 = vld [vmem:[#allocation4 + $0x1c] sm:$0xf]
        %v475 = vld [vmem:[#allocation4 + $0x20] sm:$0xf]
        %v476 = vld [vmem:[#allocation4 + $0x24] sm:$0xf]
        %v477 = vld [vmem:[#allocation4 + $0x28] sm:$0xf]
        %v478 = vld [vmem:[#allocation4 + $0x2c] sm:$0xf]
        %v479 = vld [vmem:[#allocation4 + $0x30] sm:$0xf]
        %v480 = vld [vmem:[#allocation4 + $0x34] sm:$0xf]
        %v481 = vld [vmem:[#allocation4 + $0x38] sm:$0xf]
        %v482 = vld [vmem:[#allocation4 + $0x3c] sm:$0xf]
        %v483 = vpack.c.bf16 %v350, %v349
        %v500 = vunpack.c.l.b16 %v467
        %v501 = vunpack.c.l.b16 %v468
        %v502 = vunpack.c.l.b16 %v469
        %v503 = vunpack.c.l.b16 %v470
        %v504 = vunpack.c.l.b16 %v471
        %v505 = vunpack.c.l.b16 %v472
        %v506 = vunpack.c.l.b16 %v473
        %v507 = vunpack.c.l.b16 %v474
        %v508 = vunpack.c.l.b16 %v475
        %v509 = vunpack.c.l.b16 %v476
        %v510 = vunpack.c.l.b16 %v477
        %v511 = vunpack.c.l.b16 %v478
        %v512 = vunpack.c.l.b16 %v479
        %v513 = vunpack.c.l.b16 %v480
        %v514 = vunpack.c.l.b16 %v481
        %v515 = vunpack.c.l.b16 %v482
        %v516 = vpack.c.b16 %v501, %v500
        %v517 = vpack.c.b16 %v503, %v502
        %v518 = vpack.c.b16 %v505, %v504
        %v519 = vpack.c.b16 %v507, %v506
        %v520 = vpack.c.b16 %v509, %v508
        %v521 = vpack.c.b16 %v511, %v510
        %v522 = vpack.c.b16 %v513, %v512
        %v523 = vpack.c.b16 %v515, %v514
        %532 = vmatprep.subr.bf16.mxu0 0
        %533 = vmatpush1.bf16.msra.mxu0 %v516
        %534 = vmatprep.subr.bf16.mxu0 0
        %535 = vmatpush1.bf16.msra.mxu0 %v517
        %536 = vmatprep.subr.bf16.mxu0 0
        %537 = vmatpush1.bf16.msra.mxu0 %v518
        %538 = vmatprep.subr.bf16.mxu0 0
        %539 = vmatpush1.bf16.msra.mxu0 %v519
        %540 = vmatprep.subr.bf16.mxu0 0
        %541 = vmatpush1.bf16.msra.mxu0 %v520
        %542 = vmatprep.subr.bf16.mxu0 0
        %543 = vmatpush1.bf16.msra.mxu0 %v521
        %544 = vmatprep.subr.bf16.mxu0 0
        %545 = vmatpush1.bf16.msra.mxu0 %v522
        %546 = vmatprep.subr.bf16.mxu0 0
        %547 = vmatpush1.bf16.msra.mxu0 %v523
        %548 = vmatprep.subr.bf16.mxu0 0
        %549 = vmatpush1.bf16.msra.mxu0 0
        %550 = vmatprep.subr.bf16.mxu0 0
        %551 = vmatpush1.bf16.msra.mxu0 0
        %552 = vmatprep.subr.bf16.mxu0 0
        %553 = vmatpush1.bf16.msra.mxu0 0
        %554 = vmatprep.subr.bf16.mxu0 0
        %555 = vmatpush1.bf16.msra.mxu0 0
        %556 = vmatprep.subr.bf16.mxu0 0
        %557 = vmatpush1.bf16.msra.mxu0 0
        %558 = vmatprep.subr.bf16.mxu0 0
        %559 = vmatpush1.bf16.msra.mxu0 0
        %560 = vmatprep.subr.bf16.mxu0 0
        %561 = vmatpush1.bf16.msra.mxu0 0
        %562 = vmatprep.subr.bf16.mxu0 0
        %563 = vmatpush1.bf16.msra.mxu0 0
        %564 = vmatprep.mubr.bf16.mxu0 0
        %565 = vmatmul.mubr.bf16.gmra.mrb[0].mxu0 %v483
        %v566 = vpop.f32.mrb[0].mxu0
        %v567 = vadd.f32 0.0, %v566
        %v568 = vpop.f32.mrb[0].mxu0
        %v569 = vpop.f32.mrb[0].mxu0
        %v570 = vadd.f32 0.0, %v569
        %v571 = vpop.f32.mrb[0].mxu0
        %572 = vdwg.mxu0
        %v573 = vpack.c.bf16 %v570, %v567
        %v575 = vunpack.c.l.b16 %v573
        %v576 = vunpack.c.h.b16 %v573
        %v577 = vpack.c.b16 %v575, %v575
        %v578 = vpack.c.b16 %v576, %v576
        %581 = vst [vmem:[%s297] sm:$0xf] %v577
        %582 = vst [vmem:[%s297 + $0x4] sm:$0xf] %v578
        %s583 = smul.u32 2, %s20
        %p584 = scmp.lt.s32.totalorder %s583, 3
        %s585 = scalar_select %p584, %s583, 3
        %s586 = smul.addr %s585, 4
        %s587 = scalar_lea.vmem %s5, %s586
        %s588 = smul.u32 2, %s20
        %p589 = scmp.lt.s32.totalorder %s588, 3
        %s590 = scalar_select %p589, %s588, 3
        %s591 = smul.addr %s590, 4
        %s592 = scalar_lea.vmem %s6, %s591
        // Predicated region
        $region49: #{cross_transformer_encoder.6} parent=39 // pred_check
          %p593 = pneg %p148
        $region50: #{cross_transformer_encoder.6} parent=39 // pred_check_branch
          %595 = sbr.rel (%p593) target = $region52
        $region51: #{cross_transformer_encoder.6} parent=39 // pred_region
          %s596 = smul.u32 2, %s20
        $region52: #{cross_transformer_encoder.6} parent=39 // pred_fallthru
          _
        // Predicated region
        $region53: #{cross_transformer_encoder.6} parent=39 // pred_check
          %p597 = pneg %p174
        $region54: #{cross_transformer_encoder.6} parent=39 // pred_check_branch
          %599 = sbr.rel (%p597) target = $region56
        $region55: #{cross_transformer_encoder.6} parent=39 // pred_region
          %s600 = smul.u32 2, %s20
        $region56: #{cross_transformer_encoder.6} parent=39 // pred_fallthru
          _
      $region40: #{cross_transformer_encoder.6} parent=5 // pred_fallthru
        _
      %p601 = scmp.le.s32.totalorder 2, %s15
      // Predicated region
      $region57: #{cross_transformer_encoder.6} parent=5 // pred_check
        %p602 = pneg %p601
      $region58: #{cross_transformer_encoder.6} parent=5 // pred_check_branch
        %604 = sbr.rel (%p602) target = $region60
      $region59: #{cross_transformer_encoder.6} parent=5 // pred_region
        %s605 = ssub.s32 %s15, 2
        // Predicated region
        $region61: #{cross_transformer_encoder.6} parent=59 // pred_check
          %p606 = pneg %p154
        $region62: #{cross_transformer_encoder.6} parent=59 // pred_check_branch
          %608 = sbr.rel (%p606) target = $region64
        $region63: #{cross_transformer_encoder.6} parent=59 // pred_region
          %s609 = smul.u32 2, %s21
          %p610 = scmp.lt.s32.totalorder %s609, 3
          %s611 = scalar_select %p610, %s609, 3
          %s612 = smul.addr %s611, 4
          %s613 = scalar_lea.vmem %s5, %s612
        $region64: #{cross_transformer_encoder.6} parent=59 // pred_fallthru
          _
        // Predicated region
        $region65: #{cross_transformer_encoder.6} parent=59 // pred_check
          %p614 = pneg %p180
        $region66: #{cross_transformer_encoder.6} parent=59 // pred_check_branch
          %616 = sbr.rel (%p614) target = $region68
        $region67: #{cross_transformer_encoder.6} parent=59 // pred_region
          %s617 = smul.u32 2, %s21
          %p618 = scmp.lt.s32.totalorder %s617, 3
          %s619 = scalar_select %p618, %s617, 3
          %s620 = smul.addr %s619, 4
          %s621 = scalar_lea.vmem %s6, %s620
        $region68: #{cross_transformer_encoder.6} parent=59 // pred_fallthru
          _
      $region60: #{cross_transformer_encoder.6} parent=5 // pred_fallthru
        _
    $region6: #{cross_transformer_encoder.6} parent=1 // loop_footer
      %s19 = sadd.s32 1, %s15
    $region7: #{cross_transformer_encoder.6} parent=1 // loop_footer_branch
      %14 = sbr.rel target = $region3
    $region8: #{cross_transformer_encoder.6} parent=1 // loop_exit
      _
    %622 = vsyncpa [#allocation3], 1
    %s623 = scalar_lea.sflag [#allocation3], 1
    %624 = vsyncpa %s623, 1
    %625 = vsyncpa [#allocation5], 1

// kernel: cross_transformer_encoder.11
$region0: #{cross_transformer_encoder.11}
  #allocation0 [shape = 'u32[]', space=smem, size = 0x4, offset = 0x4, fixed_abs, tag = 'smem constant byte address 0x4 - core index']
  #allocation1 [shape = 'u32[144,128]{1,0:T(1,128)}', space=vmem, size = 0x12000, scoped, tag = 'internal scratch']
  %s0 = inlined_call_operand.vmem [shape: f32[16,128], index: 0, kind: input, shape index: {}]
  %s1 = inlined_call_operand.vmem [shape: f32[2,128], index: 1, kind: input, shape index: {}]
  %s2 = inlined_call_operand.vmem [shape: bf16[128,256], index: 2, kind: input, shape index: {}]
  %s3 = inlined_call_operand.vmem [shape: f32[1,256], index: 3, kind: input, shape index: {}]
  %s4 = inlined_call_operand.vmem [shape: bf16[256,128], index: 4, kind: input, shape index: {}]
  %s5 = inlined_call_operand.vmem [shape: f32[1,128], index: 5, kind: input, shape index: {}]
  %s6 = inlined_call_operand.hbm [shape: f32[16,128], index: 6, kind: output, shape index: {}]
  %s7 = sld [smem:[#allocation0]]
  $region57: #{cross_transformer_encoder.11} parent=0
    _
  %s9 = ssub.s32 1, %s7
  %s10 = scalar_select 0, %s9, %s7
  $region1: #{cross_transformer_encoder.11} parent=0
    #allocation2 [shape = 'u8[8192]{0}', space=vmem, size = 0x2000, scoped, tag = 'output window, operand 0']
    #allocation3 [shape = 's32[2]{0}', space=sflag, size = 0x8, scoped, tag = 'scoped memory for cross_transformer_encoder.11']
    %11 = vsyncpa [#allocation3], 0
    %s12 = scalar_lea.sflag [#allocation3], 1
    %13 = vsyncpa %s12, 0
    loop: start=0, step=1, limit=4
    $region2: #{cross_transformer_encoder.11} parent=1 // loop_pre_header
      _
    $region3: #{cross_transformer_encoder.11} parent=1 // loop_header
      %s15 = sphi 0, %s19
      %p16 = scmp.ge.s32.totalorder %s15, 4
      %s25 = sphi 0, %s27
      %s28 = sphi 0, %s25
      %s29 = sphi 0, %s28
      %s45 = sphi 0, %s29
      %s49 = sphi 0, %s49
      %s51 = sphi 0, %s49
      %s52 = sphi 0, %s51
      %s66 = sphi 0, %s52
      %s70 = sphi 0, %s70
      %s72 = sphi 0, %s70
      %s73 = sphi 0, %s72
      %s87 = sphi 0, %s73
      %s91 = sphi 0, %s91
      %s93 = sphi 0, %s91
      %s94 = sphi 0, %s93
      %s108 = sphi 0, %s94
      %s112 = sphi 0, %s112
      %s114 = sphi 0, %s112
      %s115 = sphi 0, %s114
      %s129 = sphi 0, %s115
      %s133 = sphi 0, %s133
      %s135 = sphi 0, %s133
      %s136 = sphi 0, %s135
      %s150 = sphi 0, %s136
      %s156 = sphi 0, %s158
      %s159 = sphi 0, %s156
      %s160 = sphi 0, %s159
      %s176 = sphi 0, %s160
    $region4: #{cross_transformer_encoder.11} parent=1 // loop_header_branch
      %18 = sbr.rel (%p16) target = $region8
    $region5: #{cross_transformer_encoder.11} parent=1 // loop_body
      %s20 = ssub.s32 %s15, 1
      %s21 = ssub.s32 %s15, 2
      %s22 = sadd.s32 %s15, 1
      %s23 = ssub.s32 %s15, %s22
      %p24 = scmp.eq.s32.totalorder %s23, 0
      %s26 = sadd.s32 %s25, 1
      %s27 = scalar_select %p24, %s25, %s26
      %p30 = pneg %p24
      %p31 = scmp.eq.s32.totalorder %s15, 1
      %p32 = por %p30, %p31
      %p33 = scmp.ne.s32.totalorder %s25, %s28
      %p34 = scmp.eq.s32.totalorder %s15, 0
      %p35 = por %p33, %p34
      %p36 = scmp.ne.s32.totalorder %s25, %s28
      %p37 = scmp.eq.s32.totalorder %s20, 1
      %p38 = por %p36, %p37
      %p39 = scmp.ne.s32.totalorder %s28, %s29
      %p40 = scmp.eq.s32.totalorder %s20, 0
      %p41 = por %p39, %p40
      %p42 = scmp.ne.s32.totalorder %s28, %s29
      %p43 = scmp.eq.s32.totalorder %s21, 1
      %p44 = por %p42, %p43
      %p46 = scmp.ne.s32.totalorder %s29, %s45
      %p47 = scmp.eq.s32.totalorder %s21, 0
      %p48 = por %p46, %p47
      %s50 = sadd.s32 %s49, 1
      %p53 = scmp.eq.s32.totalorder %s15, 1
      %p54 = scmp.ne.s32.totalorder %s49, %s51
      %p55 = scmp.eq.s32.totalorder %s15, 0
      %p56 = por %p54, %p55
      %p57 = scmp.ne.s32.totalorder %s49, %s51
      %p58 = scmp.eq.s32.totalorder %s20, 1
      %p59 = por %p57, %p58
      %p60 = scmp.ne.s32.totalorder %s51, %s52
      %p61 = scmp.eq.s32.totalorder %s20, 0
      %p62 = por %p60, %p61
      %p63 = scmp.ne.s32.totalorder %s51, %s52
      %p64 = scmp.eq.s32.totalorder %s21, 1
      %p65 = por %p63, %p64
      %p67 = scmp.ne.s32.totalorder %s52, %s66
      %p68 = scmp.eq.s32.totalorder %s21, 0
      %p69 = por %p67, %p68
      %s71 = sadd.s32 %s70, 1
      %p74 = scmp.eq.s32.totalorder %s15, 1
      %p75 = scmp.ne.s32.totalorder %s70, %s72
      %p76 = scmp.eq.s32.totalorder %s15, 0
      %p77 = por %p75, %p76
      %p78 = scmp.ne.s32.totalorder %s70, %s72
      %p79 = scmp.eq.s32.totalorder %s20, 1
      %p80 = por %p78, %p79
      %p81 = scmp.ne.s32.totalorder %s72, %s73
      %p82 = scmp.eq.s32.totalorder %s20, 0
      %p83 = por %p81, %p82
      %p84 = scmp.ne.s32.totalorder %s72, %s73
      %p85 = scmp.eq.s32.totalorder %s21, 1
      %p86 = por %p84, %p85
      %p88 = scmp.ne.s32.totalorder %s73, %s87
      %p89 = scmp.eq.s32.totalorder %s21, 0
      %p90 = por %p88, %p89
      %s92 = sadd.s32 %s91, 1
      %p95 = scmp.eq.s32.totalorder %s15, 1
      %p96 = scmp.ne.s32.totalorder %s91, %s93
      %p97 = scmp.eq.s32.totalorder %s15, 0
      %p98 = por %p96, %p97
      %p99 = scmp.ne.s32.totalorder %s91, %s93
      %p100 = scmp.eq.s32.totalorder %s20, 1
      %p101 = por %p99, %p100
      %p102 = scmp.ne.s32.totalorder %s93, %s94
      %p103 = scmp.eq.s32.totalorder %s20, 0
      %p104 = por %p102, %p103
      %p105 = scmp.ne.s32.totalorder %s93, %s94
      %p106 = scmp.eq.s32.totalorder %s21, 1
      %p107 = por %p105, %p106
      %p109 = scmp.ne.s32.totalorder %s94, %s108
      %p110 = scmp.eq.s32.totalorder %s21, 0
      %p111 = por %p109, %p110
      %s113 = sadd.s32 %s112, 1
      %p116 = scmp.eq.s32.totalorder %s15, 1
      %p117 = scmp.ne.s32.totalorder %s112, %s114
      %p118 = scmp.eq.s32.totalorder %s15, 0
      %p119 = por %p117, %p118
      %p120 = scmp.ne.s32.totalorder %s112, %s114
      %p121 = scmp.eq.s32.totalorder %s20, 1
      %p122 = por %p120, %p121
      %p123 = scmp.ne.s32.totalorder %s114, %s115
      %p124 = scmp.eq.s32.totalorder %s20, 0
      %p125 = por %p123, %p124
      %p126 = scmp.ne.s32.totalorder %s114, %s115
      %p127 = scmp.eq.s32.totalorder %s21, 1
      %p128 = por %p126, %p127
      %p130 = scmp.ne.s32.totalorder %s115, %s129
      %p131 = scmp.eq.s32.totalorder %s21, 0
      %p132 = por %p130, %p131
      %s134 = sadd.s32 %s133, 1
      %p137 = scmp.eq.s32.totalorder %s15, 1
      %p138 = scmp.ne.s32.totalorder %s133, %s135
      %p139 = scmp.eq.s32.totalorder %s15, 0
      %p140 = por %p138, %p139
      %p141 = scmp.ne.s32.totalorder %s133, %s135
      %p142 = scmp.eq.s32.totalorder %s20, 1
      %p143 = por %p141, %p142
      %p144 = scmp.ne.s32.totalorder %s135, %s136
      %p145 = scmp.eq.s32.totalorder %s20, 0
      %p146 = por %p144, %p145
      %p147 = scmp.ne.s32.totalorder %s135, %s136
      %p148 = scmp.eq.s32.totalorder %s21, 1
      %p149 = por %p147, %p148
      %p151 = scmp.ne.s32.totalorder %s136, %s150
      %p152 = scmp.eq.s32.totalorder %s21, 0
      %p153 = por %p151, %p152
      %s154 = ssub.s32 %s15, %s22
      %p155 = scmp.eq.s32.totalorder %s154, 0
      %s157 = sadd.s32 %s156, 1
      %s158 = scalar_select %p155, %s156, %s157
      %p161 = pneg %p155
      %p162 = scmp.eq.s32.totalorder %s15, 1
      %p163 = por %p161, %p162
      %p164 = scmp.ne.s32.totalorder %s156, %s159
      %p165 = scmp.eq.s32.totalorder %s15, 0
      %p166 = por %p164, %p165
      %p167 = scmp.ne.s32.totalorder %s156, %s159
      %p168 = scmp.eq.s32.totalorder %s20, 1
      %p169 = por %p167, %p168
      %p170 = scmp.ne.s32.totalorder %s159, %s160
      %p171 = scmp.eq.s32.totalorder %s20, 0
      %p172 = por %p170, %p171
      %p173 = scmp.ne.s32.totalorder %s159, %s160
      %p174 = scmp.eq.s32.totalorder %s21, 1
      %p175 = por %p173, %p174
      %p177 = scmp.ne.s32.totalorder %s160, %s176
      %p178 = scmp.eq.s32.totalorder %s21, 0
      %p179 = por %p177, %p178
      %p180 = scmp.le.s32.totalorder 1, %s15
      %p181 = scmp.lt.s32.totalorder %s15, 3
      %p182 = pnand %p180, %p181
      %p183 = pneg %p182
      // Predicated region
      $region9: #{cross_transformer_encoder.11} parent=5 // pred_check
        _
      $region10: #{cross_transformer_encoder.11} parent=5 // pred_check_branch
        %185 = sbr.rel (%p182) target = $region12
      $region11: #{cross_transformer_encoder.11} parent=5 // pred_region
        %s186 = ssub.s32 %s15, 1
        // Predicated region
        $region13: #{cross_transformer_encoder.11} parent=11 // pred_check
          %p187 = pneg %p62
        $region14: #{cross_transformer_encoder.11} parent=11 // pred_check_branch
          %189 = sbr.rel (%p187) target = $region16
        $region15: #{cross_transformer_encoder.11} parent=11 // pred_region
          _
        $region16: #{cross_transformer_encoder.11} parent=11 // pred_fallthru
          _
        // Predicated region
        $region17: #{cross_transformer_encoder.11} parent=11 // pred_check
          %p190 = pneg %p83
        $region18: #{cross_transformer_encoder.11} parent=11 // pred_check_branch
          %192 = sbr.rel (%p190) target = $region20
        $region19: #{cross_transformer_encoder.11} parent=11 // pred_region
          _
        $region20: #{cross_transformer_encoder.11} parent=11 // pred_fallthru
          _
        // Predicated region
        $region21: #{cross_transformer_encoder.11} parent=11 // pred_check
          %p193 = pneg %p104
        $region22: #{cross_transformer_encoder.11} parent=11 // pred_check_branch
          %195 = sbr.rel (%p193) target = $region24
        $region23: #{cross_transformer_encoder.11} parent=11 // pred_region
          _
        $region24: #{cross_transformer_encoder.11} parent=11 // pred_fallthru
          _
        // Predicated region
        $region25: #{cross_transformer_encoder.11} parent=11 // pred_check
          %p196 = pneg %p125
        $region26: #{cross_transformer_encoder.11} parent=11 // pred_check_branch
          %198 = sbr.rel (%p196) target = $region28
        $region27: #{cross_transformer_encoder.11} parent=11 // pred_region
          _
        $region28: #{cross_transformer_encoder.11} parent=11 // pred_fallthru
          _
        // Predicated region
        $region29: #{cross_transformer_encoder.11} parent=11 // pred_check
          %p199 = pneg %p146
        $region30: #{cross_transformer_encoder.11} parent=11 // pred_check_branch
          %201 = sbr.rel (%p199) target = $region32
        $region31: #{cross_transformer_encoder.11} parent=11 // pred_region
          _
        $region32: #{cross_transformer_encoder.11} parent=11 // pred_fallthru
          _
      $region12: #{cross_transformer_encoder.11} parent=5 // pred_fallthru
        _
      %p202 = scmp.lt.s32.totalorder %s15, 2
      // Predicated region
      $region33: #{cross_transformer_encoder.11} parent=5 // pred_check
        %p203 = pneg %p202
      $region34: #{cross_transformer_encoder.11} parent=5 // pred_check_branch
        %205 = sbr.rel (%p203) target = $region36
      $region35: #{cross_transformer_encoder.11} parent=5 // pred_region
        // Predicated region
        $region37: #{cross_transformer_encoder.11} parent=35 // pred_check
          %p206 = pneg %p35
        $region38: #{cross_transformer_encoder.11} parent=35 // pred_check_branch
          %208 = sbr.rel (%p206) target = $region40
        $region39: #{cross_transformer_encoder.11} parent=35 // pred_region
          %p209 = scmp.lt.s32.totalorder %s15, 1
          %s210 = scalar_select %p209, %s15, 1
          %s211 = smul.addr %s210, 8
          %s212 = scalar_lea.vmem %s0, %s211
        $region40: #{cross_transformer_encoder.11} parent=35 // pred_fallthru
          _
      $region36: #{cross_transformer_encoder.11} parent=5 // pred_fallthru
        _
      %p213 = scmp.le.s32.totalorder 1, %s15
      %p214 = scmp.lt.s32.totalorder %s15, 3
      %p215 = pnand %p213, %p214
      %p216 = pneg %p215
      // Predicated region
      $region41: #{cross_transformer_encoder.11} parent=5 // pred_check
        _
      $region42: #{cross_transformer_encoder.11} parent=5 // pred_check_branch
        %218 = sbr.rel (%p215) target = $region44
      $region43: #{cross_transformer_encoder.11} parent=5 // pred_region
        %s219 = ssub.s32 %s15, 1
        %p220 = scmp.lt.s32.totalorder %s20, 1
        %s221 = scalar_select %p220, %s20, 1
        %s222 = smul.addr %s221, 8
        %s223 = scalar_lea.vmem %s0, %s222
        %p224 = pneg %p41
        %p225 = pneg %p38
        %p226 = pneg %p62
        %p227 = pneg %p59
        %p228 = pneg %p83
        %p229 = pneg %p80
        %p230 = pneg %p104
        %p231 = pneg %p101
        %p232 = pneg %p125
        %p233 = pneg %p122
        %p234 = pneg %p146
        %p235 = pneg %p143
        %p236 = pneg %p172
        %p237 = pneg %p169
        %s238 = sand.u32 %s159, 1
        %s239 = scalar_lea.sflag [#allocation3], %s238
        %s240 = sand.u32 %s159, 1
        %s241 = smul.addr %s240, 8
        %s242 = scalar_lea.vmem [#allocation2], %s241
        %p243 = scmp.lt.s32.totalorder %s20, 1
        %s244 = scalar_select %p243, %s20, 1
        %s245 = smul.addr %s244, 8
        %s246 = scalar_lea.vmem %s0, %s245
        %v248 = vld [vmem:[%s246] sm:$0xff]
        %v249 = vld [vmem:[%s1] sm:$0x3]
        %250 = vadd.xlane.f32.xlu0 %v248
        %v251 = vpop.xlane.xlu0 %250
        %v252 = vrcp.pop 128.0
        %v253 = vmul.f32 %v251, %v252
        %v254 = vsub.f32 %v248, %v253
        %v255 = vmul.f32 %v254, %v254
        %256 = vadd.xlane.f32.xlu0 %v255
        %v257 = vpop.xlane.xlu0 %256
        %v258 = vmul.f32 %v257, %v252
        %v259 = vadd.f32 %v258, 1e-05
        %v260 = vrsqrt.pop %v259
        %v261 = vmul.f32 %v254, %v260
        %v262 = vlaneseq
        %v263 = vshrl.u32 %v262, 7
        %v264 = vsub.s32 0, %v263
        %v265 = vrot.slane %v249, %v264
        %v266 = vmul.f32 %v261, %v265
        %v267 = vlaneseq
        %v268 = vshrl.u32 %v267, 7
        %v269 = vsub.s32 1, %v268
        %v270 = vrot.slane %v249, %v269
        %v271 = vadd.f32 %v266, %v270
        %v272 = vld [vmem:[%s2] sm:$0xff]
        %v273 = vld [vmem:[%s2 + $0x8] sm:$0xff]
        %v274 = vld [vmem:[%s2 + $0x10] sm:$0xff]
        %v275 = vld [vmem:[%s2 + $0x18] sm:$0xff]
        %v276 = vld [vmem:[%s2 + $0x20] sm:$0xff]
        %v277 = vld [vmem:[%s2 + $0x28] sm:$0xff]
        %v278 = vld [vmem:[%s2 + $0x30] sm:$0xff]
        %v279 = vld [vmem:[%s2 + $0x38] sm:$0xff]
        %v280 = vld [vmem:[%s2 + $0x40] sm:$0xff]
        %v281 = vld [vmem:[%s2 + $0x48] sm:$0xff]
        %v282 = vld [vmem:[%s2 + $0x50] sm:$0xff]
        %v283 = vld [vmem:[%s2 + $0x58] sm:$0xff]
        %v284 = vld [vmem:[%s2 + $0x60] sm:$0xff]
        %v285 = vld [vmem:[%s2 + $0x68] sm:$0xff]
        %v286 = vld [vmem:[%s2 + $0x70] sm:$0xff]
        %v287 = vld [vmem:[%s2 + $0x78] sm:$0xff]
        %v288 = vpack.c.bf16 %v271, %v271
        %v289 = vld [vmem:[%s3] sm:$0x3]
        %v291 = vlaneseq
        %v292 = vshrl.u32 %v291, 7
        %v293 = vsub.s32 0, %v292
        %v294 = vrot.slane %v289, %v293
        %v295 = vlaneseq
        %v296 = vshrl.u32 %v295, 7
        %v297 = vsub.s32 1, %v296
        %v298 = vrot.slane %v289, %v297
        %v317 = vunpack.c.l.b16 %v272
        %v318 = vunpack.c.h.b16 %v272
        %v319 = vunpack.c.l.b16 %v273
        %v320 = vunpack.c.h.b16 %v273
        %v321 = vunpack.c.l.b16 %v274
        %v322 = vunpack.c.h.b16 %v274
        %v323 = vunpack.c.l.b16 %v275
        %v324 = vunpack.c.h.b16 %v275
        %v325 = vunpack.c.l.b16 %v276
        %v326 = vunpack.c.h.b16 %v276
        %v327 = vunpack.c.l.b16 %v277
        %v328 = vunpack.c.h.b16 %v277
        %v329 = vunpack.c.l.b16 %v278
        %v330 = vunpack.c.h.b16 %v278
        %v331 = vunpack.c.l.b16 %v279
        %v332 = vunpack.c.h.b16 %v279
        %v333 = vunpack.c.l.b16 %v280
        %v334 = vunpack.c.h.b16 %v280
        %v335 = vunpack.c.l.b16 %v281
        %v336 = vunpack.c.h.b16 %v281
        %v337 = vunpack.c.l.b16 %v282
        %v338 = vunpack.c.h.b16 %v282
        %v339 = vunpack.c.l.b16 %v283
        %v340 = vunpack.c.h.b16 %v283
        %v341 = vunpack.c.l.b16 %v284
        %v342 = vunpack.c.h.b16 %v284
        %v343 = vunpack.c.l.b16 %v285
        %v344 = vunpack.c.h.b16 %v285
        %v345 = vunpack.c.l.b16 %v286
        %v346 = vunpack.c.h.b16 %v286
        %v347 = vunpack.c.l.b16 %v287
        %v348 = vunpack.c.h.b16 %v287
        %v349 = vpack.c.b16 %v319, %v317
        %v350 = vpack.c.b16 %v320, %v318
        %v351 = vpack.c.b16 %v323, %v321
        %v352 = vpack.c.b16 %v324, %v322
        %v353 = vpack.c.b16 %v327, %v325
        %v354 = vpack.c.b16 %v328, %v326
        %v355 = vpack.c.b16 %v331, %v329
        %v356 = vpack.c.b16 %v332, %v330
        %v357 = vpack.c.b16 %v335, %v333
        %v358 = vpack.c.b16 %v336, %v334
        %v359 = vpack.c.b16 %v339, %v337
        %v360 = vpack.c.b16 %v340, %v338
        %v361 = vpack.c.b16 %v343, %v341
        %v362 = vpack.c.b16 %v344, %v342
        %v363 = vpack.c.b16 %v347, %v345
        %v364 = vpack.c.b16 %v348, %v346
        %381 = vmatprep.subr.bf16.mxu0 %v350
        %382 = vmatpush1.bf16.msra.mxu0 %v349
        %383 = vmatprep.subr.bf16.mxu0 %v352
        %384 = vmatpush1.bf16.msra.mxu0 %v351
        %385 = vmatprep.subr.bf16.mxu0 %v354
        %386 = vmatpush1.bf16.msra.mxu0 %v353
        %387 = vmatprep.subr.bf16.mxu0 %v356
        %388 = vmatpush1.bf16.msra.mxu0 %v355
        %389 = vmatprep.subr.bf16.mxu0 %v358
        %390 = vmatpush1.bf16.msra.mxu0 %v357
        %391 = vmatprep.subr.bf16.mxu0 %v360
        %392 = vmatpush1.bf16.msra.mxu0 %v359
        %393 = vmatprep.subr.bf16.mxu0 %v362
        %394 = vmatpush1.bf16.msra.mxu0 %v361
        %395 = vmatprep.subr.bf16.mxu0 %v364
        %396 = vmatpush1.bf16.msra.mxu0 %v363
        %397 = vmatprep.subr.bf16.mxu0 0
        %398 = vmatpush1.bf16.msra.mxu0 0
        %399 = vmatprep.subr.bf16.mxu0 0
        %400 = vmatpush1.bf16.msra.mxu0 0
        %401 = vmatprep.subr.bf16.mxu0 0
        %402 = vmatpush1.bf16.msra.mxu0 0
        %403 = vmatprep.subr.bf16.mxu0 0
        %404 = vmatpush1.bf16.msra.mxu0 0
        %405 = vmatprep.subr.bf16.mxu0 0
        %406 = vmatpush1.bf16.msra.mxu0 0
        %407 = vmatprep.subr.bf16.mxu0 0
        %408 = vmatpush1.bf16.msra.mxu0 0
        %409 = vmatprep.subr.bf16.mxu0 0
        %410 = vmatpush1.bf16.msra.mxu0 0
        %411 = vmatprep.subr.bf16.mxu0 0
        %412 = vmatpush1.bf16.msra.mxu0 0
        %413 = vmatprep.mubr.bf16.mxu0 0
        %414 = vmatmul.mubr.bf16.gmra.mrb[0].mxu0 %v288
        %v415 = vpop.f32.mrb[0].mxu0
        %v416 = vadd.f32 %v294, %v415
        %v417 = vpop.f32.mrb[0].mxu0
        %v418 = vadd.f32 %v298, %v417
        %v419 = vpop.f32.mrb[0].mxu0
        %v420 = vpop.f32.mrb[0].mxu0
        %421 = vdwg.mxu0
        %v422 = vmul.f32 %v416, 0.5
        %v423 = vmul.f32 %v418, 0.5
        %v424 = vmul.f32 %v416, 0.044715
        %v425 = vmul.f32 %v418, 0.044715
        %v426 = vmul.f32 %v424, %v416
        %v427 = vmul.f32 %v425, %v418
        %v428 = vmul.f32 %v426, %v416
        %v429 = vmul.f32 %v427, %v418
        %v430 = vadd.f32 %v416, %v428
        %v431 = vadd.f32 %v418, %v429
        %v432 = vmul.f32 %v430, 0.7978846
        %v433 = vmul.f32 %v431, 0.7978846
        %v434 = vtanh.pop %v432
        %v435 = vtanh.pop %v433
        %v436 = vadd.f32 %v434, 1.0
        %v437 = vadd.f32 %v435, 1.0
        %v438 = vmul.f32 %v422, %v436
        %v439 = vmul.f32 %v423, %v437
        %v440 = vld [vmem:[%s4] sm:$0xf]
        %v441 = vld [vmem:[%s4 + $0x4] sm:$0xf]
        %v442 = vld [vmem:[%s4 + $0x8] sm:$0xf]
        %v443 = vld [vmem:[%s4 + $0xc] sm:$0xf]
        %v444 = vld [vmem:[%s4 + $0x10] sm:$0xf]
        %v445 = vld [vmem:[%s4 + $0x14] sm:$0xf]
        %v446 = vld [vmem:[%s4 + $0x18] sm:$0xf]
        %v447 = vld [vmem:[%s4 + $0x1c] sm:$0xf]
        %v448 = vld [vmem:[%s4 + $0x20] sm:$0xf]
        %v449 = vld [vmem:[%s4 + $0x24] sm:$0xf]
        %v450 = vld [vmem:[%s4 + $0x28] sm:$0xf]
        %v451 = vld [vmem:[%s4 + $0x2c] sm:$0xf]
        %v452 = vld [vmem:[%s4 + $0x30] sm:$0xf]
        %v453 = vld [vmem:[%s4 + $0x34] sm:$0xf]
        %v454 = vld [vmem:[%s4 + $0x38] sm:$0xf]
        %v455 = vld [vmem:[%s4 + $0x3c] sm:$0xf]
        %v456 = vld [vmem:[%s4 + $0x40] sm:$0xf]
        %v457 = vld [vmem:[%s4 + $0x44] sm:$0xf]
        %v458 = vld [vmem:[%s4 + $0x48] sm:$0xf]
        %v459 = vld [vmem:[%s4 + $0x4c] sm:$0xf]
        %v460 = vld [vmem:[%s4 + $0x50] sm:$0xf]
        %v461 = vld [vmem:[%s4 + $0x54] sm:$0xf]
        %v462 = vld [vmem:[%s4 + $0x58] sm:$0xf]
        %v463 = vld [vmem:[%s4 + $0x5c] sm:$0xf]
        %v464 = vld [vmem:[%s4 + $0x60] sm:$0xf]
        %v465 = vld [vmem:[%s4 + $0x64] sm:$0xf]
        %v466 = vld [vmem:[%s4 + $0x68] sm:$0xf]
        %v467 = vld [vmem:[%s4 + $0x6c] sm:$0xf]
        %v468 = vld [vmem:[%s4 + $0x70] sm:$0xf]
        %v469 = vld [vmem:[%s4 + $0x74] sm:$0xf]
        %v470 = vld [vmem:[%s4 + $0x78] sm:$0xf]
        %v471 = vld [vmem:[%s4 + $0x7c] sm:$0xf]
        %v472 = vpack.c.bf16 %v438, %v438
        %v473 = vpack.c.bf16 %v439, %v439
        %v474 = vld [vmem:[%s5] sm:$0x1]
        %v476 = vlaneseq
        %v477 = vshrl.u32 %v476, 7
        %v478 = vsub.s32 0, %v477
        %v479 = vrot.slane %v474, %v478
        %v513 = vunpack.c.l.b16 %v440
        %v514 = vunpack.c.l.b16 %v441
        %v515 = vunpack.c.l.b16 %v442
        %v516 = vunpack.c.l.b16 %v443
        %v517 = vunpack.c.l.b16 %v444
        %v518 = vunpack.c.l.b16 %v445
        %v519 = vunpack.c.l.b16 %v446
        %v520 = vunpack.c.l.b16 %v447
        %v521 = vunpack.c.l.b16 %v448
        %v522 = vunpack.c.l.b16 %v449
        %v523 = vunpack.c.l.b16 %v450
        %v524 = vunpack.c.l.b16 %v451
        %v525 = vunpack.c.l.b16 %v452
        %v526 = vunpack.c.l.b16 %v453
        %v527 = vunpack.c.l.b16 %v454
        %v528 = vunpack.c.l.b16 %v455
        %v529 = vunpack.c.l.b16 %v456
        %v530 = vunpack.c.l.b16 %v457
        %v531 = vunpack.c.l.b16 %v458
        %v532 = vunpack.c.l.b16 %v459
        %v533 = vunpack.c.l.b16 %v460
        %v534 = vunpack.c.l.b16 %v461
        %v535 = vunpack.c.l.b16 %v462
        %v536 = vunpack.c.l.b16 %v463
        %v537 = vunpack.c.l.b16 %v464
        %v538 = vunpack.c.l.b16 %v465
        %v539 = vunpack.c.l.b16 %v466
        %v540 = vunpack.c.l.b16 %v467
        %v541 = vunpack.c.l.b16 %v468
        %v542 = vunpack.c.l.b16 %v469
        %v543 = vunpack.c.l.b16 %v470
        %v544 = vunpack.c.l.b16 %v471
        %v545 = vpack.c.b16 %v514, %v513
        %v546 = vpack.c.b16 %v516, %v515
        %v547 = vpack.c.b16 %v518, %v517
        %v548 = vpack.c.b16 %v520, %v519
        %v549 = vpack.c.b16 %v522, %v521
        %v550 = vpack.c.b16 %v524, %v523
        %v551 = vpack.c.b16 %v526, %v525
        %v552 = vpack.c.b16 %v528, %v527
        %v553 = vpack.c.b16 %v530, %v529
        %v554 = vpack.c.b16 %v532, %v531
        %v555 = vpack.c.b16 %v534, %v533
        %v556 = vpack.c.b16 %v536, %v535
        %v557 = vpack.c.b16 %v538, %v537
        %v558 = vpack.c.b16 %v540, %v539
        %v559 = vpack.c.b16 %v542, %v541
        %v560 = vpack.c.b16 %v544, %v543
        %577 = vmatprep.subr.bf16.mxu0 0
        %578 = vmatpush1.bf16.msra.mxu0 %v545
        %579 = vmatprep.subr.bf16.mxu0 0
        %580 = vmatpush1.bf16.msra.mxu0 %v546
        %581 = vmatprep.subr.bf16.mxu0 0
        %582 = vmatpush1.bf16.msra.mxu0 %v547
        %583 = vmatprep.subr.bf16.mxu0 0
        %584 = vmatpush1.bf16.msra.mxu0 %v548
        %585 = vmatprep.subr.bf16.mxu0 0
        %586 = vmatpush1.bf16.msra.mxu0 %v549
        %587 = vmatprep.subr.bf16.mxu0 0
        %588 = vmatpush1.bf16.msra.mxu0 %v550
        %589 = vmatprep.subr.bf16.mxu0 0
        %590 = vmatpush1.bf16.msra.mxu0 %v551
        %591 = vmatprep.subr.bf16.mxu0 0
        %592 = vmatpush1.bf16.msra.mxu0 %v552
        %593 = vmatprep.subr.bf16.mxu0 0
        %594 = vmatpush1.bf16.msra.mxu0 %v553
        %595 = vmatprep.subr.bf16.mxu0 0
        %596 = vmatpush1.bf16.msra.mxu0 %v554
        %597 = vmatprep.subr.bf16.mxu0 0
        %598 = vmatpush1.bf16.msra.mxu0 %v555
        %599 = vmatprep.subr.bf16.mxu0 0
        %600 = vmatpush1.bf16.msra.mxu0 %v556
        %601 = vmatprep.subr.bf16.mxu0 0
        %602 = vmatpush1.bf16.msra.mxu0 %v557
        %603 = vmatprep.subr.bf16.mxu0 0
        %604 = vmatpush1.bf16.msra.mxu0 %v558
        %605 = vmatprep.subr.bf16.mxu0 0
        %606 = vmatpush1.bf16.msra.mxu0 %v559
        %607 = vmatprep.subr.bf16.mxu0 0
        %608 = vmatpush1.bf16.msra.mxu0 %v560
        %609 = vmatprep.mubr.bf16.mxu0 %v473
        %610 = vmatmul.mubr.bf16.gmra.mrb[0].mxu0 %v472
        %v611 = vpop.f32.mrb[0].mxu0
        %v612 = vadd.f32 %v479, %v611
        %v613 = vpop.f32.mrb[0].mxu0
        %v614 = vpop.f32.mrb[0].mxu0
        %v615 = vpop.f32.mrb[0].mxu0
        %616 = vdwg.mxu0
        %v617 = vadd.f32 %v612, %v248
        %618 = vst [vmem:[%s242] sm:$0xff] %v617
        %s619 = sand.u32 %s159, 1
        %s620 = scalar_lea.sflag [#allocation3], %s619
        %s621 = sand.u32 %s159, 1
        %s622 = smul.addr %s621, 8
        %s623 = scalar_lea.vmem [#allocation2], %s622
        // Predicated region
        $region45: #{cross_transformer_encoder.11} parent=43 // pred_check
          %p624 = pneg %p169
        $region46: #{cross_transformer_encoder.11} parent=43 // pred_check_branch
          %626 = sbr.rel (%p624) target = $region48
        $region47: #{cross_transformer_encoder.11} parent=43 // pred_region
          %s628 = ssub.s32 128, 128
          %629 = vsyncadd %s620, %s628
          %s630 = smul.addr %s20, 128
          %s631 = scalar_lea.hbm %s6, %s630
          %s633 = sshll.u32 %s623, 4
          %s634 = int_to_ptr.vmem [resolvable:$true] %s633
          %636 = dma.vmem_to_hbm [thread:$0]  %s634, 128, %s631, %s620
        $region48: #{cross_transformer_encoder.11} parent=43 // pred_fallthru
          _
      $region44: #{cross_transformer_encoder.11} parent=5 // pred_fallthru
        _
      %p637 = scmp.le.s32.totalorder 2, %s15
      // Predicated region
      $region49: #{cross_transformer_encoder.11} parent=5 // pred_check
        %p638 = pneg %p637
      $region50: #{cross_transformer_encoder.11} parent=5 // pred_check_branch
        %640 = sbr.rel (%p638) target = $region52
      $region51: #{cross_transformer_encoder.11} parent=5 // pred_region
        %s641 = ssub.s32 %s15, 2
        // Predicated region
        $region53: #{cross_transformer_encoder.11} parent=51 // pred_check
          %p642 = pneg %p175
        $region54: #{cross_transformer_encoder.11} parent=51 // pred_check_branch
          %644 = sbr.rel (%p642) target = $region56
        $region55: #{cross_transformer_encoder.11} parent=51 // pred_region
          %s645 = sand.u32 %s160, 1
          %s646 = scalar_lea.sflag [#allocation3], %s645
          %s647 = sand.u32 %s160, 1
          %s648 = smul.addr %s647, 8
          %s649 = scalar_lea.vmem [#allocation2], %s648
          %650 = dma.done %s646, 128
        $region56: #{cross_transformer_encoder.11} parent=51 // pred_fallthru
          _
      $region52: #{cross_transformer_encoder.11} parent=5 // pred_fallthru
        _
    $region6: #{cross_transformer_encoder.11} parent=1 // loop_footer
      %s19 = sadd.s32 1, %s15
    $region7: #{cross_transformer_encoder.11} parent=1 // loop_footer_branch
      %14 = sbr.rel target = $region3
    $region8: #{cross_transformer_encoder.11} parent=1 // loop_exit
      _
    %651 = vsyncpa [#allocation3], 1
    %s652 = scalar_lea.sflag [#allocation3], 1
    %653 = vsyncpa %s652, 1

</llo_original>
